<compile_context>
chip_gen: v5e
topology: v5e:2x2
jax: 0.10.0
libtpu: 0.0.40
codegen_flags: <defaults>
</compile_context>

<pallas_src>
import functools

import jax
import jax.numpy as jnp
from jax import lax
from jax.experimental import pallas as pl
from jax.experimental.pallas import tpu as pltpu


# --------------------------------------------------------------------------
# Gate-layout helpers.  Parameters are stored in PyTorch order [i, f, g, o];
# the kernel uses [i, f, o, g] per direction so sigmoid gates are contiguous.
# --------------------------------------------------------------------------
def _ifgo_to_ifog(w):
    h = w.shape[-1] // 4
    return jnp.concatenate([w[..., :2 * h], w[..., 3 * h:], w[..., 2 * h:3 * h]],
                           axis=-1)


def _layer_input_gates(parts, layer_p, H):
    """Hoisted, time-parallel input projection for BOTH directions at once.

    Returns gf, gb of shape (T_pad, B, 4H) bf16 in gate order [i, f, o, g].
    Fusing fwd+bwd gives an N = 8H matmul (full MXU width on v6e/v7x)."""
    wih_cat = jnp.concatenate([_ifgo_to_ifog(layer_p["wih_f"]),
                               _ifgo_to_ifog(layer_p["wih_b"])], axis=1)
    b_cat = jnp.concatenate([_ifgo_to_ifog(layer_p["b_f"]),
                             _ifgo_to_ifog(layer_p["b_b"])], axis=1)
    acc = None
    off = 0
    for p in parts:                      # sum of per-part matmuls == concat @ W
        f = p.shape[-1]
        w = wih_cat[off:off + f].astype(jnp.bfloat16)
        g = jnp.einsum("tbf,fg->tbg", p.astype(jnp.bfloat16), w,
                       preferred_element_type=jnp.float32)
        acc = g if acc is None else acc + g
        off += f
    gcat = (acc + b_cat.astype(jnp.float32)).astype(jnp.bfloat16)
    return gcat[..., :4 * H], gcat[..., 4 * H:]


def _fused_recurrent_weights(layer_p, H):
    """Block-diagonal fused W_hh with interleaved gate columns.

    Columns: [i_f f_f o_f (3H) | i_b f_b o_b (3H) | g_f (H) | g_b (H)].
    Only worthwhile while 2H fits one MXU K pass (H<=64 v5e, H<=128 v6e/v7x)."""
    wf = _ifgo_to_ifog(layer_p["whh_f"])     # (H, 4H) [i f o g]
    wb = _ifgo_to_ifog(layer_p["whh_b"])
    whh = jnp.zeros((2 * H, 8 * H), jnp.float32)
    whh = whh.at[:H, 0:3 * H].set(wf[:, :3 * H])
    whh = whh.at[:H, 6 * H:7 * H].set(wf[:, 3 * H:])
    whh = whh.at[H:, 3 * H:6 * H].set(wb[:, :3 * H])
    whh = whh.at[H:, 7 * H:].set(wb[:, 3 * H:])
    return whh.astype(jnp.bfloat16)


# --------------------------------------------------------------------------
# Pallas kernel: one bidirectional LSTM layer over the whole (masked) sequence.
# Grid iterates over time *blocks*; fused h/c live in VMEM scratch.
# Forward direction walks blocks 0..NT-1 (rows 0..TC-1 inside a block);
# backward direction walks blocks NT-1..0 (rows TC-1..0 inside a block).
# --------------------------------------------------------------------------
def _bilstm_kernel(gf_ref, gb_ref, whh_ref, len_ref,
                   yf_ref, yb_ref, hfin_ref,
                   h_scr, c_scr, *, H, TC):
    t = pl.program_id(0)
    nblk = pl.num_programs(0)

    @pl.when(t == 0)
    def _():
        h_scr[...] = jnp.zeros_like(h_scr)
        c_scr[...] = jnp.zeros_like(c_scr)

    whh = whh_ref[...]                    # (2H, 8H) bf16, constant block
    len2h = len_ref[...]                  # (B, 2H) int32, constant block
    Bp = len2h.shape[0]

    # Hoisted direction mask over lanes: first H lanes = fwd, last H = bwd.
    lane = lax.broadcasted_iota(jnp.int32, (Bp, 2 * H), 1)
    is_fwd = lane < H

    base_f = t * TC                       # fwd global time of row 0
    base_b = (nblk - 1 - t) * TC          # bwd block's global time of row 0

    h = h_scr[...]                        # (B, 2H) fused [h_f | h_b], f32
    c = c_scr[...]
    yf_parts = [None] * TC
    yb_parts = [None] * TC

    # Static unroll over the time block.  For large H/TC switch to
    # lax.fori_loop with a capped unroll factor to bound vreg pressure.
    for s in range(TC):
        sr = TC - 1 - s                   # reversed row for the bwd direction

        # Single fused recurrent matmul for both directions (N = 8H).
        gh = jnp.dot(h.astype(jnp.bfloat16), whh,
                     preferred_element_type=jnp.float32)        # (B, 8H)

        gxf = gf_ref[s]                   # (B, 4H) bf16, [i f o g], fwd time
        gxb = gb_ref[sr]                  # (B, 4H) bf16, [i f o g], bwd time
        sig_in = gh[:, :6 * H] + jnp.concatenate(
            [gxf[:, :3 * H], gxb[:, :3 * H]], axis=1)
        tan_in = gh[:, 6 * H:] + jnp.concatenate(
            [gxf[:, 3 * H:], gxb[:, 3 * H:]], axis=1)

        sg = jax.nn.sigmoid(sig_in)       # 1 EUP launch, (B, 6H)
        gg = jnp.tanh(tan_in)             # 1 EUP launch, (B, 2H) = [g_f | g_b]

        i_cat = jnp.concatenate([sg[:, 0 * H:1 * H], sg[:, 3 * H:4 * H]], axis=1)
        f_cat = jnp.concatenate([sg[:, 1 * H:2 * H], sg[:, 4 * H:5 * H]], axis=1)
        o_cat = jnp.concatenate([sg[:, 2 * H:3 * H], sg[:, 5 * H:6 * H]], axis=1)

        c_new = f_cat * c + i_cat * gg
        h_new = o_cat * jnp.tanh(c_new)   # 1 EUP launch, (B, 2H)

        # Packed-sequence mask built in-kernel (no mask DMA streams):
        # fwd lanes compare against this step's fwd time, bwd lanes vs bwd time.
        t_idx = jnp.where(is_fwd, base_f + s, base_b + sr)
        m = (t_idx < len2h).astype(jnp.float32)

        h = h + m * (h_new - h)           # freeze state when padded
        c = c + m * (c_new - c)
        hm = m * h_new                    # padded steps emit 0

        yf_parts[s] = hm[:, :H]
        yb_parts[sr] = hm[:, H:]

    h_scr[...] = h
    c_scr[...] = c

    # One lane-dense (B, TC*H) store per direction per grid step.
    yf_ref[0] = jnp.concatenate(yf_parts, axis=1).astype(yf_ref.dtype)
    yb_ref[0] = jnp.concatenate(yb_parts, axis=1).astype(yb_ref.dtype)

    # Constant-index output block: written to VMEM only on the last grid step,
    # DMA'd back to HBM once when the grid finishes (valid Pallas semantics).
    @pl.when(t == nblk - 1)
    def _():
        hfin_ref[...] = h.astype(hfin_ref.dtype)


# --------------------------------------------------------------------------
# One bidirectional layer (fused fwd+bwd Pallas call).
# --------------------------------------------------------------------------
def bilstm_layer(parts, len2h, layer_p, time_chunk):
    T_pad, Bp, _ = parts[0].shape
    H = layer_p["whh_f"].shape[0]
    TC = time_chunk
    NT = T_pad // TC

    gf, gb = _layer_input_gates(parts, layer_p, H)      # (T_pad, Bp, 4H) bf16
    whh_cat = _fused_recurrent_weights(layer_p, H)      # (2H, 8H) bf16

    fwd_idx = lambda t: (t, 0, 0)
    bwd_idx = lambda t: (NT - 1 - t, 0, 0)              # bwd: reversed blocks
    const_idx = lambda t: (0, 0)

    grid_spec = pltpu.PrefetchScalarGridSpec(
        num_scalar_prefetch=0,
        grid=(NT,),
        in_specs=[
            pl.BlockSpec((TC, Bp, 4 * H), fwd_idx),     # fwd input gates
            pl.BlockSpec((TC, Bp, 4 * H), bwd_idx),     # bwd input gates
            # Constant-index blocks are fetched once.  For large H on v7x
            # (64 MiB VMEM) also single-buffer this block (pl.Buffered(1)).
            pl.BlockSpec((2 * H, 8 * H), const_idx),    # fused W_hh
            pl.BlockSpec((Bp, 2 * H), const_idx),       # broadcast lengths
        ],
        out_specs=[
            pl.BlockSpec((1, Bp, TC * H), fwd_idx),     # fwd output slabs
            pl.BlockSpec((1, Bp, TC * H), bwd_idx),     # bwd output slabs
            pl.BlockSpec((Bp, 2 * H), const_idx),       # final [h_f | h_b]
        ],
        scratch_shapes=[pltpu.VMEM((Bp, 2 * H), jnp.float32),   # fused h
                        pltpu.VMEM((Bp, 2 * H), jnp.float32)],  # fused c
    )
    yf_raw, yb_raw, h_fin = pl.pallas_call(
        functools.partial(_bilstm_kernel, H=H, TC=TC),
        grid_spec=grid_spec,
        out_shape=(jax.ShapeDtypeStruct((NT, Bp, TC * H), jnp.bfloat16),
                   jax.ShapeDtypeStruct((NT, Bp, TC * H), jnp.bfloat16),
                   jax.ShapeDtypeStruct((Bp, 2 * H), jnp.float32)),
        compiler_params=pltpu.CompilerParams(
            dimension_semantics=("arbitrary",)),        # recurrence over time
    )(gf, gb, whh_cat, len2h)

    def unslab(y):          # (NT, Bp, TC*H) -> (T_pad, Bp, H), cheap XLA reshape
        return y.reshape(NT, Bp, TC, H).transpose(0, 2, 1, 3).reshape(T_pad, Bp, H)

    return unslab(yf_raw), unslab(yb_raw), h_fin


# --------------------------------------------------------------------------
# Pure-JAX reference for the same layer (verification only; same bf16 gate
# inputs and bf16 recurrent matmul so it checks kernel structure, not rounding).
# --------------------------------------------------------------------------
def bilstm_layer_ref(parts, mask, layer_p):
    Bp = parts[0].shape[1]
    H = layer_p["whh_f"].shape[0]
    gf, gb = _layer_input_gates(parts, layer_p, H)      # bf16, [i f o g]

    def run(gx, whh, reverse):
        whh_bf = _ifgo_to_ifog(whh).astype(jnp.bfloat16)

        def step(carry, inp):
            h, c = carry
            gxt, m = inp
            g_all = gxt.astype(jnp.float32) + jnp.dot(
                h.astype(jnp.bfloat16), whh_bf, preferred_element_type=jnp.float32)
            i = jax.nn.sigmoid(g_all[:, :H])
            f = jax.nn.sigmoid(g_all[:, H:2 * H])
            o = jax.nn.sigmoid(g_all[:, 2 * H:3 * H])
            g = jnp.tanh(g_all[:, 3 * H:])
            c_new = f * c + i * g
            h_new = o * jnp.tanh(c_new)
            h2 = h + m * (h_new - h)
            c2 = c + m * (c_new - c)
            return (h2, c2), (m * h_new).astype(jnp.bfloat16)

        init = (jnp.zeros((Bp, H), jnp.float32), jnp.zeros((Bp, H), jnp.float32))
        (h_last, _), ys = lax.scan(step, init, (gx, mask), reverse=reverse)
        return ys, h_last

    y_f, h_f = run(gf, layer_p["whh_f"], reverse=False)
    y_b, h_b = run(gb, layer_p["whh_b"], reverse=True)
    return y_f, y_b, jnp.concatenate([h_f, h_b], axis=1)


# --------------------------------------------------------------------------
# Full model forward.
# --------------------------------------------------------------------------
def lstm_model_forward(params, tokens, lengths, use_kernel=True, time_chunk=8):
    B, T = tokens.shape
    H = params["lstm"][0]["whh_f"].shape[0]

    TC = max(1, min(time_chunk, T))
    T_pad = ((T + TC - 1) // TC) * TC
    Bp = ((B + 7) // 8) * 8          # pad batch to a sublane multiple (8)

    tok_p = jnp.zeros((Bp, T), tokens.dtype).at[:B].set(tokens)   # pad rows: token 0
    len_p = jnp.zeros((Bp,), jnp.int32).at[:B].set(lengths)       # pad rows: length 0

    emb = params["embedding"][tok_p]                       # (Bp, T, E); pad row 0
    x = jnp.transpose(emb, (1, 0, 2)).astype(jnp.float32)  # time-major (T, Bp, E)
    if T_pad != T:
        x = jnp.pad(x, ((0, T_pad - T), (0, 0), (0, 0)))   # extra steps masked off

    # packed-sequence info: kernel gets broadcast lengths, ref gets a 0/1 mask.
    len2h = jnp.broadcast_to(len_p[:, None], (Bp, 2 * H)).astype(jnp.int32)
    mask = (jnp.arange(T_pad)[:, None] < len_p[None, :]).astype(jnp.float32)
    mask = mask[:, :, None]                                # (T_pad, Bp, 1)

    parts = [x]
    h_fin = None
    for layer_p in params["lstm"]:
        if use_kernel:
            y_f, y_b, h_fin = bilstm_layer(parts, len2h, layer_p, TC)
        else:
            y_f, y_b, h_fin = bilstm_layer_ref(parts, mask, layer_p)
        # Next layer consumes concat([y_f, y_b], -1); keep the halves separate
        # and split its W_ih instead (no concat / no extra copies between layers).
        parts = [y_f, y_b]
        # TODO(synk): inter-layer dropout (train-mode only) is not applied; this
        # implements eval-mode semantics.

    # torch.cat((h[-1], h[-2]), dim=1) == concat(last-layer backward, forward)
    last_hidden = jnp.concatenate([h_fin[:, H:], h_fin[:, :H]], axis=1)  # (Bp, 2H)
    # Final FC left to XLA: a (B, 2H) x (2H, 4) matmul as a dedicated Pallas
    # kernel would be pure launch overhead.
    logits = last_hidden @ params["fc_w"] + params["fc_b"]
    return logits[:B]


# --------------------------------------------------------------------------
# Deterministic parameter initialization (shapes follow nn.Module.__init__).
# Weights are stored pre-transposed: W_ih (in_dim, 4H), W_hh (H, 4H), with
# PyTorch gate column order [i, f, g, o] (permuted to kernel order offline).
# --------------------------------------------------------------------------
def init_params(key, input_dim, emb_dim, hid_dim, output_dim, num_layers, pad_ix):
    keys = jax.random.split(key, 3 + num_layers)
    emb = jax.random.normal(keys[0], (input_dim, emb_dim), jnp.float32)
    emb = emb.at[pad_ix].set(0.0)                  # padding_idx row is zero

    k = 1.0 / jnp.sqrt(hid_dim)
    layers = []
    for l in range(num_layers):
        in_dim = emb_dim if l == 0 else 2 * hid_dim
        lk = jax.random.split(keys[1 + l], 8)

        def u(kk, shape):
            return jax.random.uniform(kk, shape, jnp.float32, -k, k)

        layers.append(dict(
            wih_f=u(lk[0], (in_dim, 4 * hid_dim)),
            whh_f=u(lk[1], (hid_dim, 4 * hid_dim)),
            b_f=(u(lk[2], (1, 4 * hid_dim)) + u(lk[3], (1, 4 * hid_dim))),
            wih_b=u(lk[4], (in_dim, 4 * hid_dim)),
            whh_b=u(lk[5], (hid_dim, 4 * hid_dim)),
            b_b=(u(lk[6], (1, 4 * hid_dim)) + u(lk[7], (1, 4 * hid_dim))),
        ))

    kf = 1.0 / jnp.sqrt(2 * hid_dim)
    fc_w = jax.random.uniform(keys[-2], (2 * hid_dim, output_dim),
                              jnp.float32, -kf, kf)
    fc_b = jax.random.uniform(keys[-1], (output_dim,), jnp.float32, -kf, kf)
    return dict(embedding=emb, lstm=layers, fc_w=fc_w, fc_b=fc_b)


if __name__ == "__main__":
    INPUT_DIM, EMB_DIM, HID_DIM, OUT_DIM = 50, 16, 32, 4
    NUM_LAYERS, PAD_IX = 2, 0
    B, T = 2, 8

    root = jax.random.PRNGKey(0)
    pkey, tkey = jax.random.split(root)
    params = init_params(pkey, INPUT_DIM, EMB_DIM, HID_DIM,
                         OUT_DIM, NUM_LAYERS, PAD_IX)

    lengths = jnp.array([8, 5], dtype=jnp.int32)
    tokens = jax.random.randint(tkey, (B, T), 1, INPUT_DIM, dtype=jnp.int32)
    pos = jnp.arange(T)[None, :]
    tokens = jnp.where(pos < lengths[:, None], tokens, PAD_IX)

    fwd = jax.jit(functools.partial(lstm_model_forward,
                                    use_kernel=True, time_chunk=8))
    out = fwd(params, tokens, lengths)
    out = jax.block_until_ready(out)

    ref = lstm_model_forward(params, tokens, lengths, use_kernel=False)
    assert out.shape == (B, OUT_DIM)
    assert jnp.allclose(out, ref, atol=5e-3, rtol=5e-3), "mismatch vs JAX reference"

    print("KERNEL_OK")
</pallas_src>

<mosaic_0001>
module attributes {stable_mosaic.version = 11 : i64} {
  func.func @_bilstm_kernel(%arg0: i32, %arg1: memref<8x8x128xbf16, #tpu.memory_space<vmem>>, %arg2: memref<8x8x128xbf16, #tpu.memory_space<vmem>>, %arg3: memref<64x256xbf16, #tpu.memory_space<vmem>>, %arg4: memref<8x64xi32, #tpu.memory_space<vmem>>, %arg5: memref<1x8x256xbf16, #tpu.memory_space<vmem>>, %arg6: memref<1x8x256xbf16, #tpu.memory_space<vmem>>, %arg7: memref<8x64xf32, #tpu.memory_space<vmem>>, %arg8: memref<8x64xf32, #tpu.memory_space<vmem>>, %arg9: memref<8x64xf32, #tpu.memory_space<vmem>>) attributes {dimension_semantics = [#tpu.dimension_semantics<arbitrary>], iteration_bounds = array<i64: 1>, scalar_prefetch = 0 : i64, scratch_operands = 2 : i64, tpu.core_type = #tpu.core_type<tc>, window_params = [{transform_indices = @transform_0, window_bounds = array<i64: 8, 8, 128>}, {transform_indices = @transform_1, window_bounds = array<i64: 8, 8, 128>}, {pipeline_mode = #tpu.pipeline_mode<synchronous>, transform_indices = @transform_2, window_bounds = array<i64: 64, 256>}, {pipeline_mode = #tpu.pipeline_mode<synchronous>, transform_indices = @transform_3, window_bounds = array<i64: 8, 64>}, {transform_indices = @transform_4, window_bounds = array<i64: 1, 8, 256>}, {transform_indices = @transform_5, window_bounds = array<i64: 1, 8, 256>}, {pipeline_mode = #tpu.pipeline_mode<synchronous>, transform_indices = @transform_6, window_bounds = array<i64: 8, 64>}]} {
    %c0_i32 = arith.constant 0 : i32
    %0 = arith.cmpi eq, %arg0, %c0_i32 : i32
    %1 = arith.extui %0 : i1 to i32
    %c0_i32_0 = arith.constant 0 : i32
    %2 = arith.cmpi ne, %1, %c0_i32_0 : i32
    scf.if %2 {
      %cst_87 = arith.constant 0.000000e+00 : f32
      %468 = vector.broadcast %cst_87 : f32 to vector<8x64xf32>
      %c0_88 = arith.constant 0 : index
      %c0_89 = arith.constant 0 : index
      %469 = vector.load %arg8[%c0_88, %c0_89] : memref<8x64xf32, #tpu.memory_space<vmem>>, vector<8x64xf32>
      tpu.vector_store %arg8[%c0_88, %c0_89], %468 {strides = array<i32>} : memref<8x64xf32, #tpu.memory_space<vmem>>, vector<8x64xf32>,
      %cst_90 = arith.constant 0.000000e+00 : f32
      %470 = vector.broadcast %cst_90 : f32 to vector<8x64xf32>
      %c0_91 = arith.constant 0 : index
      %c0_92 = arith.constant 0 : index
      %471 = vector.load %arg9[%c0_91, %c0_92] : memref<8x64xf32, #tpu.memory_space<vmem>>, vector<8x64xf32>
      tpu.vector_store %arg9[%c0_91, %c0_92], %470 {strides = array<i32>} : memref<8x64xf32, #tpu.memory_space<vmem>>, vector<8x64xf32>,
    } else {
    }
    %c0 = arith.constant 0 : index
    %c0_1 = arith.constant 0 : index
    %3 = vector.load %arg3[%c0, %c0_1] : memref<64x256xbf16, #tpu.memory_space<vmem>>, vector<64x256xbf16>
    %c0_2 = arith.constant 0 : index
    %c0_3 = arith.constant 0 : index
    %4 = vector.load %arg4[%c0_2, %c0_3] : memref<8x64xi32, #tpu.memory_space<vmem>>, vector<8x64xi32>
    %5 = tpu.iota {dimensions = array<i32: 1>} : vector<8x64xi32>
    %c32_i32 = arith.constant 32 : i32
    %6 = vector.broadcast %c32_i32 : i32 to vector<8x64xi32>
    %7 = arith.cmpi slt, %5, %6 : vector<8x64xi32>
    %c8_i32 = arith.constant 8 : i32
    %8 = arith.muli %arg0, %c8_i32 : i32
    %c0_i32_4 = arith.constant 0 : i32
    %9 = arith.subi %c0_i32_4, %arg0 : i32
    %c8_i32_5 = arith.constant 8 : i32
    %10 = arith.muli %9, %c8_i32_5 : i32
    %c0_6 = arith.constant 0 : index
    %c0_7 = arith.constant 0 : index
    %11 = vector.load %arg8[%c0_6, %c0_7] : memref<8x64xf32, #tpu.memory_space<vmem>>, vector<8x64xf32>
    %c0_8 = arith.constant 0 : index
    %c0_9 = arith.constant 0 : index
    %12 = vector.load %arg9[%c0_8, %c0_9] : memref<8x64xf32, #tpu.memory_space<vmem>>, vector<8x64xf32>
    %13 = arith.truncf %11 : vector<8x64xf32> to vector<8x64xbf16>
    %cst = arith.constant dense<0.000000e+00> : vector<8x256xf32>
    %14 = tpu.matmul %13, %3, %cst {dimension_numbers = #tpu.dot_dimension_numbers<[1], [0], [0], [1], [0, 0, 1, 1], [], []>} : vector<8x64xbf16>, vector<64x256xbf16>, vector<8x256xf32> -> vector<8x256xf32>
    %c0_10 = arith.constant 0 : index
    %c0_11 = arith.constant 0 : index
    %c0_12 = arith.constant 0 : index
    %15 = vector.load %arg1[%c0_10, %c0_11, %c0_12] : memref<8x8x128xbf16, #tpu.memory_space<vmem>>, vector<1x8x128xbf16>
    %16 = vector.shape_cast %15 : vector<1x8x128xbf16> to vector<8x128xbf16>
    %c7 = arith.constant 7 : index
    %c0_13 = arith.constant 0 : index
    %c0_14 = arith.constant 0 : index
    %17 = vector.load %arg2[%c7, %c0_13, %c0_14] : memref<8x8x128xbf16, #tpu.memory_space<vmem>>, vector<1x8x128xbf16>
    %18 = vector.shape_cast %17 : vector<1x8x128xbf16> to vector<8x128xbf16>
    %19 = vector.extract_strided_slice %14 {offsets = [0, 0], sizes = [8, 192], strides = [1, 1]} : vector<8x256xf32> to vector<8x192xf32>
    %20 = vector.extract_strided_slice %16 {offsets = [0, 0], sizes = [8, 96], strides = [1, 1]} : vector<8x128xbf16> to vector<8x96xbf16>
    %21 = vector.extract_strided_slice %18 {offsets = [0, 0], sizes = [8, 96], strides = [1, 1]} : vector<8x128xbf16> to vector<8x96xbf16>
    %22 = tpu.concatenate %20, %21 in 1 : vector<8x96xbf16>, vector<8x96xbf16> -> vector<8x192xbf16>
    %23 = arith.extf %22 : vector<8x192xbf16> to vector<8x192xf32>
    %24 = arith.addf %19, %23 : vector<8x192xf32>
    %25 = vector.extract_strided_slice %14 {offsets = [0, 192], sizes = [8, 64], strides = [1, 1]} : vector<8x256xf32> to vector<8x64xf32>
    %26 = vector.extract_strided_slice %16 {offsets = [0, 96], sizes = [8, 32], strides = [1, 1]} : vector<8x128xbf16> to vector<8x32xbf16>
    %27 = vector.extract_strided_slice %18 {offsets = [0, 96], sizes = [8, 32], strides = [1, 1]} : vector<8x128xbf16> to vector<8x32xbf16>
    %28 = tpu.concatenate %26, %27 in 1 : vector<8x32xbf16>, vector<8x32xbf16> -> vector<8x64xbf16>
    %29 = arith.extf %28 : vector<8x64xbf16> to vector<8x64xf32>
    %30 = arith.addf %25, %29 : vector<8x64xf32>
    %31 = arith.negf %24 : vector<8x192xf32>
    %32 = math.exp %31 : vector<8x192xf32>
    %cst_15 = arith.constant 1.000000e+00 : f32
    %33 = vector.broadcast %cst_15 : f32 to vector<8x192xf32>
    %34 = arith.addf %33, %32 : vector<8x192xf32>
    %35 = arith.divf %33, %34 : vector<8x192xf32>
    %36 = math.tanh %30 : vector<8x64xf32>
    %37 = vector.extract_strided_slice %35 {offsets = [0, 0], sizes = [8, 32], strides = [1, 1]} : vector<8x192xf32> to vector<8x32xf32>
    %38 = vector.extract_strided_slice %35 {offsets = [0, 96], sizes = [8, 32], strides = [1, 1]} : vector<8x192xf32> to vector<8x32xf32>
    %39 = tpu.concatenate %37, %38 in 1 : vector<8x32xf32>, vector<8x32xf32> -> vector<8x64xf32>
    %40 = vector.extract_strided_slice %35 {offsets = [0, 32], sizes = [8, 32], strides = [1, 1]} : vector<8x192xf32> to vector<8x32xf32>
    %41 = vector.extract_strided_slice %35 {offsets = [0, 128], sizes = [8, 32], strides = [1, 1]} : vector<8x192xf32> to vector<8x32xf32>
    %42 = tpu.concatenate %40, %41 in 1 : vector<8x32xf32>, vector<8x32xf32> -> vector<8x64xf32>
    %43 = vector.extract_strided_slice %35 {offsets = [0, 64], sizes = [8, 32], strides = [1, 1]} : vector<8x192xf32> to vector<8x32xf32>
    %44 = vector.extract_strided_slice %35 {offsets = [0, 160], sizes = [8, 32], strides = [1, 1]} : vector<8x192xf32> to vector<8x32xf32>
    %45 = tpu.concatenate %43, %44 in 1 : vector<8x32xf32>, vector<8x32xf32> -> vector<8x64xf32>
    %46 = arith.mulf %42, %12 : vector<8x64xf32>
    %47 = arith.mulf %39, %36 : vector<8x64xf32>
    %48 = arith.addf %46, %47 : vector<8x64xf32>
    %49 = math.tanh %48 : vector<8x64xf32>
    %50 = arith.mulf %45, %49 : vector<8x64xf32>
    %c0_i32_16 = arith.constant 0 : i32
    %51 = arith.addi %8, %c0_i32_16 : i32
    %c7_i32 = arith.constant 7 : i32
    %52 = arith.addi %10, %c7_i32 : i32
    %53 = vector.broadcast %51 : i32 to vector<8x64xi32>
    %54 = vector.broadcast %52 : i32 to vector<8x64xi32>
    %55 = arith.select %7, %53, %54 : vector<8x64xi1>, vector<8x64xi32>
    %56 = arith.cmpi slt, %55, %4 : vector<8x64xi32>
    %57 = arith.extui %56 : vector<8x64xi1> to vector<8x64xi32>
    %58 = arith.sitofp %57 : vector<8x64xi32> to vector<8x64xf32>
    %59 = arith.subf %50, %11 : vector<8x64xf32>
    %60 = arith.mulf %58, %59 : vector<8x64xf32>
    %61 = arith.addf %11, %60 : vector<8x64xf32>
    %62 = arith.subf %48, %12 : vector<8x64xf32>
    %63 = arith.mulf %58, %62 : vector<8x64xf32>
    %64 = arith.addf %12, %63 : vector<8x64xf32>
    %65 = arith.mulf %58, %50 : vector<8x64xf32>
    %66 = vector.extract_strided_slice %65 {offsets = [0, 0], sizes = [8, 32], strides = [1, 1]} : vector<8x64xf32> to vector<8x32xf32>
    %67 = vector.extract_strided_slice %65 {offsets = [0, 32], sizes = [8, 32], strides = [1, 1]} : vector<8x64xf32> to vector<8x32xf32>
    %68 = arith.truncf %61 : vector<8x64xf32> to vector<8x64xbf16>
    %cst_17 = arith.constant dense<0.000000e+00> : vector<8x256xf32>
    %69 = tpu.matmul %68, %3, %cst_17 {dimension_numbers = #tpu.dot_dimension_numbers<[1], [0], [0], [1], [0, 0, 1, 1], [], []>} : vector<8x64xbf16>, vector<64x256xbf16>, vector<8x256xf32> -> vector<8x256xf32>
    %c1 = arith.constant 1 : index
    %c0_18 = arith.constant 0 : index
    %c0_19 = arith.constant 0 : index
    %70 = vector.load %arg1[%c1, %c0_18, %c0_19] : memref<8x8x128xbf16, #tpu.memory_space<vmem>>, vector<1x8x128xbf16>
    %71 = vector.shape_cast %70 : vector<1x8x128xbf16> to vector<8x128xbf16>
    %c6 = arith.constant 6 : index
    %c0_20 = arith.constant 0 : index
    %c0_21 = arith.constant 0 : index
    %72 = vector.load %arg2[%c6, %c0_20, %c0_21] : memref<8x8x128xbf16, #tpu.memory_space<vmem>>, vector<1x8x128xbf16>
    %73 = vector.shape_cast %72 : vector<1x8x128xbf16> to vector<8x128xbf16>
    %74 = vector.extract_strided_slice %69 {offsets = [0, 0], sizes = [8, 192], strides = [1, 1]} : vector<8x256xf32> to vector<8x192xf32>
    %75 = vector.extract_strided_slice %71 {offsets = [0, 0], sizes = [8, 96], strides = [1, 1]} : vector<8x128xbf16> to vector<8x96xbf16>
    %76 = vector.extract_strided_slice %73 {offsets = [0, 0], sizes = [8, 96], strides = [1, 1]} : vector<8x128xbf16> to vector<8x96xbf16>
    %77 = tpu.concatenate %75, %76 in 1 : vector<8x96xbf16>, vector<8x96xbf16> -> vector<8x192xbf16>
    %78 = arith.extf %77 : vector<8x192xbf16> to vector<8x192xf32>
    %79 = arith.addf %74, %78 : vector<8x192xf32>
    %80 = vector.extract_strided_slice %69 {offsets = [0, 192], sizes = [8, 64], strides = [1, 1]} : vector<8x256xf32> to vector<8x64xf32>
    %81 = vector.extract_strided_slice %71 {offsets = [0, 96], sizes = [8, 32], strides = [1, 1]} : vector<8x128xbf16> to vector<8x32xbf16>
    %82 = vector.extract_strided_slice %73 {offsets = [0, 96], sizes = [8, 32], strides = [1, 1]} : vector<8x128xbf16> to vector<8x32xbf16>
    %83 = tpu.concatenate %81, %82 in 1 : vector<8x32xbf16>, vector<8x32xbf16> -> vector<8x64xbf16>
    %84 = arith.extf %83 : vector<8x64xbf16> to vector<8x64xf32>
    %85 = arith.addf %80, %84 : vector<8x64xf32>
    %86 = arith.negf %79 : vector<8x192xf32>
    %87 = math.exp %86 : vector<8x192xf32>
    %cst_22 = arith.constant 1.000000e+00 : f32
    %88 = vector.broadcast %cst_22 : f32 to vector<8x192xf32>
    %89 = arith.addf %88, %87 : vector<8x192xf32>
    %90 = arith.divf %88, %89 : vector<8x192xf32>
    %91 = math.tanh %85 : vector<8x64xf32>
    %92 = vector.extract_strided_slice %90 {offsets = [0, 0], sizes = [8, 32], strides = [1, 1]} : vector<8x192xf32> to vector<8x32xf32>
    %93 = vector.extract_strided_slice %90 {offsets = [0, 96], sizes = [8, 32], strides = [1, 1]} : vector<8x192xf32> to vector<8x32xf32>
    %94 = tpu.concatenate %92, %93 in 1 : vector<8x32xf32>, vector<8x32xf32> -> vector<8x64xf32>
    %95 = vector.extract_strided_slice %90 {offsets = [0, 32], sizes = [8, 32], strides = [1, 1]} : vector<8x192xf32> to vector<8x32xf32>
    %96 = vector.extract_strided_slice %90 {offsets = [0, 128], sizes = [8, 32], strides = [1, 1]} : vector<8x192xf32> to vector<8x32xf32>
    %97 = tpu.concatenate %95, %96 in 1 : vector<8x32xf32>, vector<8x32xf32> -> vector<8x64xf32>
    %98 = vector.extract_strided_slice %90 {offsets = [0, 64], sizes = [8, 32], strides = [1, 1]} : vector<8x192xf32> to vector<8x32xf32>
    %99 = vector.extract_strided_slice %90 {offsets = [0, 160], sizes = [8, 32], strides = [1, 1]} : vector<8x192xf32> to vector<8x32xf32>
    %100 = tpu.concatenate %98, %99 in 1 : vector<8x32xf32>, vector<8x32xf32> -> vector<8x64xf32>
    %101 = arith.mulf %97, %64 : vector<8x64xf32>
    %102 = arith.mulf %94, %91 : vector<8x64xf32>
    %103 = arith.addf %101, %102 : vector<8x64xf32>
    %104 = math.tanh %103 : vector<8x64xf32>
    %105 = arith.mulf %100, %104 : vector<8x64xf32>
    %c1_i32 = arith.constant 1 : i32
    %106 = arith.addi %8, %c1_i32 : i32
    %c6_i32 = arith.constant 6 : i32
    %107 = arith.addi %10, %c6_i32 : i32
    %108 = vector.broadcast %106 : i32 to vector<8x64xi32>
    %109 = vector.broadcast %107 : i32 to vector<8x64xi32>
    %110 = arith.select %7, %108, %109 : vector<8x64xi1>, vector<8x64xi32>
    %111 = arith.cmpi slt, %110, %4 : vector<8x64xi32>
    %112 = arith.extui %111 : vector<8x64xi1> to vector<8x64xi32>
    %113 = arith.sitofp %112 : vector<8x64xi32> to vector<8x64xf32>
    %114 = arith.subf %105, %61 : vector<8x64xf32>
    %115 = arith.mulf %113, %114 : vector<8x64xf32>
    %116 = arith.addf %61, %115 : vector<8x64xf32>
    %117 = arith.subf %103, %64 : vector<8x64xf32>
    %118 = arith.mulf %113, %117 : vector<8x64xf32>
    %119 = arith.addf %64, %118 : vector<8x64xf32>
    %120 = arith.mulf %113, %105 : vector<8x64xf32>
    %121 = vector.extract_strided_slice %120 {offsets = [0, 0], sizes = [8, 32], strides = [1, 1]} : vector<8x64xf32> to vector<8x32xf32>
    %122 = vector.extract_strided_slice %120 {offsets = [0, 32], sizes = [8, 32], strides = [1, 1]} : vector<8x64xf32> to vector<8x32xf32>
    %123 = arith.truncf %116 : vector<8x64xf32> to vector<8x64xbf16>
    %cst_23 = arith.constant dense<0.000000e+00> : vector<8x256xf32>
    %124 = tpu.matmul %123, %3, %cst_23 {dimension_numbers = #tpu.dot_dimension_numbers<[1], [0], [0], [1], [0, 0, 1, 1], [], []>} : vector<8x64xbf16>, vector<64x256xbf16>, vector<8x256xf32> -> vector<8x256xf32>
    %c2 = arith.constant 2 : index
    %c0_24 = arith.constant 0 : index
    %c0_25 = arith.constant 0 : index
    %125 = vector.load %arg1[%c2, %c0_24, %c0_25] : memref<8x8x128xbf16, #tpu.memory_space<vmem>>, vector<1x8x128xbf16>
    %126 = vector.shape_cast %125 : vector<1x8x128xbf16> to vector<8x128xbf16>
    %c5 = arith.constant 5 : index
    %c0_26 = arith.constant 0 : index
    %c0_27 = arith.constant 0 : index
    %127 = vector.load %arg2[%c5, %c0_26, %c0_27] : memref<8x8x128xbf16, #tpu.memory_space<vmem>>, vector<1x8x128xbf16>
    %128 = vector.shape_cast %127 : vector<1x8x128xbf16> to vector<8x128xbf16>
    %129 = vector.extract_strided_slice %124 {offsets = [0, 0], sizes = [8, 192], strides = [1, 1]} : vector<8x256xf32> to vector<8x192xf32>
    %130 = vector.extract_strided_slice %126 {offsets = [0, 0], sizes = [8, 96], strides = [1, 1]} : vector<8x128xbf16> to vector<8x96xbf16>
    %131 = vector.extract_strided_slice %128 {offsets = [0, 0], sizes = [8, 96], strides = [1, 1]} : vector<8x128xbf16> to vector<8x96xbf16>
    %132 = tpu.concatenate %130, %131 in 1 : vector<8x96xbf16>, vector<8x96xbf16> -> vector<8x192xbf16>
    %133 = arith.extf %132 : vector<8x192xbf16> to vector<8x192xf32>
    %134 = arith.addf %129, %133 : vector<8x192xf32>
    %135 = vector.extract_strided_slice %124 {offsets = [0, 192], sizes = [8, 64], strides = [1, 1]} : vector<8x256xf32> to vector<8x64xf32>
    %136 = vector.extract_strided_slice %126 {offsets = [0, 96], sizes = [8, 32], strides = [1, 1]} : vector<8x128xbf16> to vector<8x32xbf16>
    %137 = vector.extract_strided_slice %128 {offsets = [0, 96], sizes = [8, 32], strides = [1, 1]} : vector<8x128xbf16> to vector<8x32xbf16>
    %138 = tpu.concatenate %136, %137 in 1 : vector<8x32xbf16>, vector<8x32xbf16> -> vector<8x64xbf16>
    %139 = arith.extf %138 : vector<8x64xbf16> to vector<8x64xf32>
    %140 = arith.addf %135, %139 : vector<8x64xf32>
    %141 = arith.negf %134 : vector<8x192xf32>
    %142 = math.exp %141 : vector<8x192xf32>
    %cst_28 = arith.constant 1.000000e+00 : f32
    %143 = vector.broadcast %cst_28 : f32 to vector<8x192xf32>
    %144 = arith.addf %143, %142 : vector<8x192xf32>
    %145 = arith.divf %143, %144 : vector<8x192xf32>
    %146 = math.tanh %140 : vector<8x64xf32>
    %147 = vector.extract_strided_slice %145 {offsets = [0, 0], sizes = [8, 32], strides = [1, 1]} : vector<8x192xf32> to vector<8x32xf32>
    %148 = vector.extract_strided_slice %145 {offsets = [0, 96], sizes = [8, 32], strides = [1, 1]} : vector<8x192xf32> to vector<8x32xf32>
    %149 = tpu.concatenate %147, %148 in 1 : vector<8x32xf32>, vector<8x32xf32> -> vector<8x64xf32>
    %150 = vector.extract_strided_slice %145 {offsets = [0, 32], sizes = [8, 32], strides = [1, 1]} : vector<8x192xf32> to vector<8x32xf32>
    %151 = vector.extract_strided_slice %145 {offsets = [0, 128], sizes = [8, 32], strides = [1, 1]} : vector<8x192xf32> to vector<8x32xf32>
    %152 = tpu.concatenate %150, %151 in 1 : vector<8x32xf32>, vector<8x32xf32> -> vector<8x64xf32>
    %153 = vector.extract_strided_slice %145 {offsets = [0, 64], sizes = [8, 32], strides = [1, 1]} : vector<8x192xf32> to vector<8x32xf32>
    %154 = vector.extract_strided_slice %145 {offsets = [0, 160], sizes = [8, 32], strides = [1, 1]} : vector<8x192xf32> to vector<8x32xf32>
    %155 = tpu.concatenate %153, %154 in 1 : vector<8x32xf32>, vector<8x32xf32> -> vector<8x64xf32>
    %156 = arith.mulf %152, %119 : vector<8x64xf32>
    %157 = arith.mulf %149, %146 : vector<8x64xf32>
    %158 = arith.addf %156, %157 : vector<8x64xf32>
    %159 = math.tanh %158 : vector<8x64xf32>
    %160 = arith.mulf %155, %159 : vector<8x64xf32>
    %c2_i32 = arith.constant 2 : i32
    %161 = arith.addi %8, %c2_i32 : i32
    %c5_i32 = arith.constant 5 : i32
    %162 = arith.addi %10, %c5_i32 : i32
    %163 = vector.broadcast %161 : i32 to vector<8x64xi32>
    %164 = vector.broadcast %162 : i32 to vector<8x64xi32>
    %165 = arith.select %7, %163, %164 : vector<8x64xi1>, vector<8x64xi32>
    %166 = arith.cmpi slt, %165, %4 : vector<8x64xi32>
    %167 = arith.extui %166 : vector<8x64xi1> to vector<8x64xi32>
    %168 = arith.sitofp %167 : vector<8x64xi32> to vector<8x64xf32>
    %169 = arith.subf %160, %116 : vector<8x64xf32>
    %170 = arith.mulf %168, %169 : vector<8x64xf32>
    %171 = arith.addf %116, %170 : vector<8x64xf32>
    %172 = arith.subf %158, %119 : vector<8x64xf32>
    %173 = arith.mulf %168, %172 : vector<8x64xf32>
    %174 = arith.addf %119, %173 : vector<8x64xf32>
    %175 = arith.mulf %168, %160 : vector<8x64xf32>
    %176 = vector.extract_strided_slice %175 {offsets = [0, 0], sizes = [8, 32], strides = [1, 1]} : vector<8x64xf32> to vector<8x32xf32>
    %177 = vector.extract_strided_slice %175 {offsets = [0, 32], sizes = [8, 32], strides = [1, 1]} : vector<8x64xf32> to vector<8x32xf32>
    %178 = arith.truncf %171 : vector<8x64xf32> to vector<8x64xbf16>
    %cst_29 = arith.constant dense<0.000000e+00> : vector<8x256xf32>
    %179 = tpu.matmul %178, %3, %cst_29 {dimension_numbers = #tpu.dot_dimension_numbers<[1], [0], [0], [1], [0, 0, 1, 1], [], []>} : vector<8x64xbf16>, vector<64x256xbf16>, vector<8x256xf32> -> vector<8x256xf32>
    %c3 = arith.constant 3 : index
    %c0_30 = arith.constant 0 : index
    %c0_31 = arith.constant 0 : index
    %180 = vector.load %arg1[%c3, %c0_30, %c0_31] : memref<8x8x128xbf16, #tpu.memory_space<vmem>>, vector<1x8x128xbf16>
    %181 = vector.shape_cast %180 : vector<1x8x128xbf16> to vector<8x128xbf16>
    %c4 = arith.constant 4 : index
    %c0_32 = arith.constant 0 : index
    %c0_33 = arith.constant 0 : index
    %182 = vector.load %arg2[%c4, %c0_32, %c0_33] : memref<8x8x128xbf16, #tpu.memory_space<vmem>>, vector<1x8x128xbf16>
    %183 = vector.shape_cast %182 : vector<1x8x128xbf16> to vector<8x128xbf16>
    %184 = vector.extract_strided_slice %179 {offsets = [0, 0], sizes = [8, 192], strides = [1, 1]} : vector<8x256xf32> to vector<8x192xf32>
    %185 = vector.extract_strided_slice %181 {offsets = [0, 0], sizes = [8, 96], strides = [1, 1]} : vector<8x128xbf16> to vector<8x96xbf16>
    %186 = vector.extract_strided_slice %183 {offsets = [0, 0], sizes = [8, 96], strides = [1, 1]} : vector<8x128xbf16> to vector<8x96xbf16>
    %187 = tpu.concatenate %185, %186 in 1 : vector<8x96xbf16>, vector<8x96xbf16> -> vector<8x192xbf16>
    %188 = arith.extf %187 : vector<8x192xbf16> to vector<8x192xf32>
    %189 = arith.addf %184, %188 : vector<8x192xf32>
    %190 = vector.extract_strided_slice %179 {offsets = [0, 192], sizes = [8, 64], strides = [1, 1]} : vector<8x256xf32> to vector<8x64xf32>
    %191 = vector.extract_strided_slice %181 {offsets = [0, 96], sizes = [8, 32], strides = [1, 1]} : vector<8x128xbf16> to vector<8x32xbf16>
    %192 = vector.extract_strided_slice %183 {offsets = [0, 96], sizes = [8, 32], strides = [1, 1]} : vector<8x128xbf16> to vector<8x32xbf16>
    %193 = tpu.concatenate %191, %192 in 1 : vector<8x32xbf16>, vector<8x32xbf16> -> vector<8x64xbf16>
    %194 = arith.extf %193 : vector<8x64xbf16> to vector<8x64xf32>
    %195 = arith.addf %190, %194 : vector<8x64xf32>
    %196 = arith.negf %189 : vector<8x192xf32>
    %197 = math.exp %196 : vector<8x192xf32>
    %cst_34 = arith.constant 1.000000e+00 : f32
    %198 = vector.broadcast %cst_34 : f32 to vector<8x192xf32>
    %199 = arith.addf %198, %197 : vector<8x192xf32>
    %200 = arith.divf %198, %199 : vector<8x192xf32>
    %201 = math.tanh %195 : vector<8x64xf32>
    %202 = vector.extract_strided_slice %200 {offsets = [0, 0], sizes = [8, 32], strides = [1, 1]} : vector<8x192xf32> to vector<8x32xf32>
    %203 = vector.extract_strided_slice %200 {offsets = [0, 96], sizes = [8, 32], strides = [1, 1]} : vector<8x192xf32> to vector<8x32xf32>
    %204 = tpu.concatenate %202, %203 in 1 : vector<8x32xf32>, vector<8x32xf32> -> vector<8x64xf32>
    %205 = vector.extract_strided_slice %200 {offsets = [0, 32], sizes = [8, 32], strides = [1, 1]} : vector<8x192xf32> to vector<8x32xf32>
    %206 = vector.extract_strided_slice %200 {offsets = [0, 128], sizes = [8, 32], strides = [1, 1]} : vector<8x192xf32> to vector<8x32xf32>
    %207 = tpu.concatenate %205, %206 in 1 : vector<8x32xf32>, vector<8x32xf32> -> vector<8x64xf32>
    %208 = vector.extract_strided_slice %200 {offsets = [0, 64], sizes = [8, 32], strides = [1, 1]} : vector<8x192xf32> to vector<8x32xf32>
    %209 = vector.extract_strided_slice %200 {offsets = [0, 160], sizes = [8, 32], strides = [1, 1]} : vector<8x192xf32> to vector<8x32xf32>
    %210 = tpu.concatenate %208, %209 in 1 : vector<8x32xf32>, vector<8x32xf32> -> vector<8x64xf32>
    %211 = arith.mulf %207, %174 : vector<8x64xf32>
    %212 = arith.mulf %204, %201 : vector<8x64xf32>
    %213 = arith.addf %211, %212 : vector<8x64xf32>
    %214 = math.tanh %213 : vector<8x64xf32>
    %215 = arith.mulf %210, %214 : vector<8x64xf32>
    %c3_i32 = arith.constant 3 : i32
    %216 = arith.addi %8, %c3_i32 : i32
    %c4_i32 = arith.constant 4 : i32
    %217 = arith.addi %10, %c4_i32 : i32
    %218 = vector.broadcast %216 : i32 to vector<8x64xi32>
    %219 = vector.broadcast %217 : i32 to vector<8x64xi32>
    %220 = arith.select %7, %218, %219 : vector<8x64xi1>, vector<8x64xi32>
    %221 = arith.cmpi slt, %220, %4 : vector<8x64xi32>
    %222 = arith.extui %221 : vector<8x64xi1> to vector<8x64xi32>
    %223 = arith.sitofp %222 : vector<8x64xi32> to vector<8x64xf32>
    %224 = arith.subf %215, %171 : vector<8x64xf32>
    %225 = arith.mulf %223, %224 : vector<8x64xf32>
    %226 = arith.addf %171, %225 : vector<8x64xf32>
    %227 = arith.subf %213, %174 : vector<8x64xf32>
    %228 = arith.mulf %223, %227 : vector<8x64xf32>
    %229 = arith.addf %174, %228 : vector<8x64xf32>
    %230 = arith.mulf %223, %215 : vector<8x64xf32>
    %231 = vector.extract_strided_slice %230 {offsets = [0, 0], sizes = [8, 32], strides = [1, 1]} : vector<8x64xf32> to vector<8x32xf32>
    %232 = vector.extract_strided_slice %230 {offsets = [0, 32], sizes = [8, 32], strides = [1, 1]} : vector<8x64xf32> to vector<8x32xf32>
    %233 = arith.truncf %226 : vector<8x64xf32> to vector<8x64xbf16>
    %cst_35 = arith.constant dense<0.000000e+00> : vector<8x256xf32>
    %234 = tpu.matmul %233, %3, %cst_35 {dimension_numbers = #tpu.dot_dimension_numbers<[1], [0], [0], [1], [0, 0, 1, 1], [], []>} : vector<8x64xbf16>, vector<64x256xbf16>, vector<8x256xf32> -> vector<8x256xf32>
    %c4_36 = arith.constant 4 : index
    %c0_37 = arith.constant 0 : index
    %c0_38 = arith.constant 0 : index
    %235 = vector.load %arg1[%c4_36, %c0_37, %c0_38] : memref<8x8x128xbf16, #tpu.memory_space<vmem>>, vector<1x8x128xbf16>
    %236 = vector.shape_cast %235 : vector<1x8x128xbf16> to vector<8x128xbf16>
    %c3_39 = arith.constant 3 : index
    %c0_40 = arith.constant 0 : index
    %c0_41 = arith.constant 0 : index
    %237 = vector.load %arg2[%c3_39, %c0_40, %c0_41] : memref<8x8x128xbf16, #tpu.memory_space<vmem>>, vector<1x8x128xbf16>
    %238 = vector.shape_cast %237 : vector<1x8x128xbf16> to vector<8x128xbf16>
    %239 = vector.extract_strided_slice %234 {offsets = [0, 0], sizes = [8, 192], strides = [1, 1]} : vector<8x256xf32> to vector<8x192xf32>
    %240 = vector.extract_strided_slice %236 {offsets = [0, 0], sizes = [8, 96], strides = [1, 1]} : vector<8x128xbf16> to vector<8x96xbf16>
    %241 = vector.extract_strided_slice %238 {offsets = [0, 0], sizes = [8, 96], strides = [1, 1]} : vector<8x128xbf16> to vector<8x96xbf16>
    %242 = tpu.concatenate %240, %241 in 1 : vector<8x96xbf16>, vector<8x96xbf16> -> vector<8x192xbf16>
    %243 = arith.extf %242 : vector<8x192xbf16> to vector<8x192xf32>
    %244 = arith.addf %239, %243 : vector<8x192xf32>
    %245 = vector.extract_strided_slice %234 {offsets = [0, 192], sizes = [8, 64], strides = [1, 1]} : vector<8x256xf32> to vector<8x64xf32>
    %246 = vector.extract_strided_slice %236 {offsets = [0, 96], sizes = [8, 32], strides = [1, 1]} : vector<8x128xbf16> to vector<8x32xbf16>
    %247 = vector.extract_strided_slice %238 {offsets = [0, 96], sizes = [8, 32], strides = [1, 1]} : vector<8x128xbf16> to vector<8x32xbf16>
    %248 = tpu.concatenate %246, %247 in 1 : vector<8x32xbf16>, vector<8x32xbf16> -> vector<8x64xbf16>
    %249 = arith.extf %248 : vector<8x64xbf16> to vector<8x64xf32>
    %250 = arith.addf %245, %249 : vector<8x64xf32>
    %251 = arith.negf %244 : vector<8x192xf32>
    %252 = math.exp %251 : vector<8x192xf32>
    %cst_42 = arith.constant 1.000000e+00 : f32
    %253 = vector.broadcast %cst_42 : f32 to vector<8x192xf32>
    %254 = arith.addf %253, %252 : vector<8x192xf32>
    %255 = arith.divf %253, %254 : vector<8x192xf32>
    %256 = math.tanh %250 : vector<8x64xf32>
    %257 = vector.extract_strided_slice %255 {offsets = [0, 0], sizes = [8, 32], strides = [1, 1]} : vector<8x192xf32> to vector<8x32xf32>
    %258 = vector.extract_strided_slice %255 {offsets = [0, 96], sizes = [8, 32], strides = [1, 1]} : vector<8x192xf32> to vector<8x32xf32>
    %259 = tpu.concatenate %257, %258 in 1 : vector<8x32xf32>, vector<8x32xf32> -> vector<8x64xf32>
    %260 = vector.extract_strided_slice %255 {offsets = [0, 32], sizes = [8, 32], strides = [1, 1]} : vector<8x192xf32> to vector<8x32xf32>
    %261 = vector.extract_strided_slice %255 {offsets = [0, 128], sizes = [8, 32], strides = [1, 1]} : vector<8x192xf32> to vector<8x32xf32>
    %262 = tpu.concatenate %260, %261 in 1 : vector<8x32xf32>, vector<8x32xf32> -> vector<8x64xf32>
    %263 = vector.extract_strided_slice %255 {offsets = [0, 64], sizes = [8, 32], strides = [1, 1]} : vector<8x192xf32> to vector<8x32xf32>
    %264 = vector.extract_strided_slice %255 {offsets = [0, 160], sizes = [8, 32], strides = [1, 1]} : vector<8x192xf32> to vector<8x32xf32>
    %265 = tpu.concatenate %263, %264 in 1 : vector<8x32xf32>, vector<8x32xf32> -> vector<8x64xf32>
    %266 = arith.mulf %262, %229 : vector<8x64xf32>
    %267 = arith.mulf %259, %256 : vector<8x64xf32>
    %268 = arith.addf %266, %267 : vector<8x64xf32>
    %269 = math.tanh %268 : vector<8x64xf32>
    %270 = arith.mulf %265, %269 : vector<8x64xf32>
    %c4_i32_43 = arith.constant 4 : i32
    %271 = arith.addi %8, %c4_i32_43 : i32
    %c3_i32_44 = arith.constant 3 : i32
    %272 = arith.addi %10, %c3_i32_44 : i32
    %273 = vector.broadcast %271 : i32 to vector<8x64xi32>
    %274 = vector.broadcast %272 : i32 to vector<8x64xi32>
    %275 = arith.select %7, %273, %274 : vector<8x64xi1>, vector<8x64xi32>
    %276 = arith.cmpi slt, %275, %4 : vector<8x64xi32>
    %277 = arith.extui %276 : vector<8x64xi1> to vector<8x64xi32>
    %278 = arith.sitofp %277 : vector<8x64xi32> to vector<8x64xf32>
    %279 = arith.subf %270, %226 : vector<8x64xf32>
    %280 = arith.mulf %278, %279 : vector<8x64xf32>
    %281 = arith.addf %226, %280 : vector<8x64xf32>
    %282 = arith.subf %268, %229 : vector<8x64xf32>
    %283 = arith.mulf %278, %282 : vector<8x64xf32>
    %284 = arith.addf %229, %283 : vector<8x64xf32>
    %285 = arith.mulf %278, %270 : vector<8x64xf32>
    %286 = vector.extract_strided_slice %285 {offsets = [0, 0], sizes = [8, 32], strides = [1, 1]} : vector<8x64xf32> to vector<8x32xf32>
    %287 = vector.extract_strided_slice %285 {offsets = [0, 32], sizes = [8, 32], strides = [1, 1]} : vector<8x64xf32> to vector<8x32xf32>
    %288 = arith.truncf %281 : vector<8x64xf32> to vector<8x64xbf16>
    %cst_45 = arith.constant dense<0.000000e+00> : vector<8x256xf32>
    %289 = tpu.matmul %288, %3, %cst_45 {dimension_numbers = #tpu.dot_dimension_numbers<[1], [0], [0], [1], [0, 0, 1, 1], [], []>} : vector<8x64xbf16>, vector<64x256xbf16>, vector<8x256xf32> -> vector<8x256xf32>
    %c5_46 = arith.constant 5 : index
    %c0_47 = arith.constant 0 : index
    %c0_48 = arith.constant 0 : index
    %290 = vector.load %arg1[%c5_46, %c0_47, %c0_48] : memref<8x8x128xbf16, #tpu.memory_space<vmem>>, vector<1x8x128xbf16>
    %291 = vector.shape_cast %290 : vector<1x8x128xbf16> to vector<8x128xbf16>
    %c2_49 = arith.constant 2 : index
    %c0_50 = arith.constant 0 : index
    %c0_51 = arith.constant 0 : index
    %292 = vector.load %arg2[%c2_49, %c0_50, %c0_51] : memref<8x8x128xbf16, #tpu.memory_space<vmem>>, vector<1x8x128xbf16>
    %293 = vector.shape_cast %292 : vector<1x8x128xbf16> to vector<8x128xbf16>
    %294 = vector.extract_strided_slice %289 {offsets = [0, 0], sizes = [8, 192], strides = [1, 1]} : vector<8x256xf32> to vector<8x192xf32>
    %295 = vector.extract_strided_slice %291 {offsets = [0, 0], sizes = [8, 96], strides = [1, 1]} : vector<8x128xbf16> to vector<8x96xbf16>
    %296 = vector.extract_strided_slice %293 {offsets = [0, 0], sizes = [8, 96], strides = [1, 1]} : vector<8x128xbf16> to vector<8x96xbf16>
    %297 = tpu.concatenate %295, %296 in 1 : vector<8x96xbf16>, vector<8x96xbf16> -> vector<8x192xbf16>
    %298 = arith.extf %297 : vector<8x192xbf16> to vector<8x192xf32>
    %299 = arith.addf %294, %298 : vector<8x192xf32>
    %300 = vector.extract_strided_slice %289 {offsets = [0, 192], sizes = [8, 64], strides = [1, 1]} : vector<8x256xf32> to vector<8x64xf32>
    %301 = vector.extract_strided_slice %291 {offsets = [0, 96], sizes = [8, 32], strides = [1, 1]} : vector<8x128xbf16> to vector<8x32xbf16>
    %302 = vector.extract_strided_slice %293 {offsets = [0, 96], sizes = [8, 32], strides = [1, 1]} : vector<8x128xbf16> to vector<8x32xbf16>
    %303 = tpu.concatenate %301, %302 in 1 : vector<8x32xbf16>, vector<8x32xbf16> -> vector<8x64xbf16>
    %304 = arith.extf %303 : vector<8x64xbf16> to vector<8x64xf32>
    %305 = arith.addf %300, %304 : vector<8x64xf32>
    %306 = arith.negf %299 : vector<8x192xf32>
    %307 = math.exp %306 : vector<8x192xf32>
    %cst_52 = arith.constant 1.000000e+00 : f32
    %308 = vector.broadcast %cst_52 : f32 to vector<8x192xf32>
    %309 = arith.addf %308, %307 : vector<8x192xf32>
    %310 = arith.divf %308, %309 : vector<8x192xf32>
    %311 = math.tanh %305 : vector<8x64xf32>
    %312 = vector.extract_strided_slice %310 {offsets = [0, 0], sizes = [8, 32], strides = [1, 1]} : vector<8x192xf32> to vector<8x32xf32>
    %313 = vector.extract_strided_slice %310 {offsets = [0, 96], sizes = [8, 32], strides = [1, 1]} : vector<8x192xf32> to vector<8x32xf32>
    %314 = tpu.concatenate %312, %313 in 1 : vector<8x32xf32>, vector<8x32xf32> -> vector<8x64xf32>
    %315 = vector.extract_strided_slice %310 {offsets = [0, 32], sizes = [8, 32], strides = [1, 1]} : vector<8x192xf32> to vector<8x32xf32>
    %316 = vector.extract_strided_slice %310 {offsets = [0, 128], sizes = [8, 32], strides = [1, 1]} : vector<8x192xf32> to vector<8x32xf32>
    %317 = tpu.concatenate %315, %316 in 1 : vector<8x32xf32>, vector<8x32xf32> -> vector<8x64xf32>
    %318 = vector.extract_strided_slice %310 {offsets = [0, 64], sizes = [8, 32], strides = [1, 1]} : vector<8x192xf32> to vector<8x32xf32>
    %319 = vector.extract_strided_slice %310 {offsets = [0, 160], sizes = [8, 32], strides = [1, 1]} : vector<8x192xf32> to vector<8x32xf32>
    %320 = tpu.concatenate %318, %319 in 1 : vector<8x32xf32>, vector<8x32xf32> -> vector<8x64xf32>
    %321 = arith.mulf %317, %284 : vector<8x64xf32>
    %322 = arith.mulf %314, %311 : vector<8x64xf32>
    %323 = arith.addf %321, %322 : vector<8x64xf32>
    %324 = math.tanh %323 : vector<8x64xf32>
    %325 = arith.mulf %320, %324 : vector<8x64xf32>
    %c5_i32_53 = arith.constant 5 : i32
    %326 = arith.addi %8, %c5_i32_53 : i32
    %c2_i32_54 = arith.constant 2 : i32
    %327 = arith.addi %10, %c2_i32_54 : i32
    %328 = vector.broadcast %326 : i32 to vector<8x64xi32>
    %329 = vector.broadcast %327 : i32 to vector<8x64xi32>
    %330 = arith.select %7, %328, %329 : vector<8x64xi1>, vector<8x64xi32>
    %331 = arith.cmpi slt, %330, %4 : vector<8x64xi32>
    %332 = arith.extui %331 : vector<8x64xi1> to vector<8x64xi32>
    %333 = arith.sitofp %332 : vector<8x64xi32> to vector<8x64xf32>
    %334 = arith.subf %325, %281 : vector<8x64xf32>
    %335 = arith.mulf %333, %334 : vector<8x64xf32>
    %336 = arith.addf %281, %335 : vector<8x64xf32>
    %337 = arith.subf %323, %284 : vector<8x64xf32>
    %338 = arith.mulf %333, %337 : vector<8x64xf32>
    %339 = arith.addf %284, %338 : vector<8x64xf32>
    %340 = arith.mulf %333, %325 : vector<8x64xf32>
    %341 = vector.extract_strided_slice %340 {offsets = [0, 0], sizes = [8, 32], strides = [1, 1]} : vector<8x64xf32> to vector<8x32xf32>
    %342 = vector.extract_strided_slice %340 {offsets = [0, 32], sizes = [8, 32], strides = [1, 1]} : vector<8x64xf32> to vector<8x32xf32>
    %343 = arith.truncf %336 : vector<8x64xf32> to vector<8x64xbf16>
    %cst_55 = arith.constant dense<0.000000e+00> : vector<8x256xf32>
    %344 = tpu.matmul %343, %3, %cst_55 {dimension_numbers = #tpu.dot_dimension_numbers<[1], [0], [0], [1], [0, 0, 1, 1], [], []>} : vector<8x64xbf16>, vector<64x256xbf16>, vector<8x256xf32> -> vector<8x256xf32>
    %c6_56 = arith.constant 6 : index
    %c0_57 = arith.constant 0 : index
    %c0_58 = arith.constant 0 : index
    %345 = vector.load %arg1[%c6_56, %c0_57, %c0_58] : memref<8x8x128xbf16, #tpu.memory_space<vmem>>, vector<1x8x128xbf16>
    %346 = vector.shape_cast %345 : vector<1x8x128xbf16> to vector<8x128xbf16>
    %c1_59 = arith.constant 1 : index
    %c0_60 = arith.constant 0 : index
    %c0_61 = arith.constant 0 : index
    %347 = vector.load %arg2[%c1_59, %c0_60, %c0_61] : memref<8x8x128xbf16, #tpu.memory_space<vmem>>, vector<1x8x128xbf16>
    %348 = vector.shape_cast %347 : vector<1x8x128xbf16> to vector<8x128xbf16>
    %349 = vector.extract_strided_slice %344 {offsets = [0, 0], sizes = [8, 192], strides = [1, 1]} : vector<8x256xf32> to vector<8x192xf32>
    %350 = vector.extract_strided_slice %346 {offsets = [0, 0], sizes = [8, 96], strides = [1, 1]} : vector<8x128xbf16> to vector<8x96xbf16>
    %351 = vector.extract_strided_slice %348 {offsets = [0, 0], sizes = [8, 96], strides = [1, 1]} : vector<8x128xbf16> to vector<8x96xbf16>
    %352 = tpu.concatenate %350, %351 in 1 : vector<8x96xbf16>, vector<8x96xbf16> -> vector<8x192xbf16>
    %353 = arith.extf %352 : vector<8x192xbf16> to vector<8x192xf32>
    %354 = arith.addf %349, %353 : vector<8x192xf32>
    %355 = vector.extract_strided_slice %344 {offsets = [0, 192], sizes = [8, 64], strides = [1, 1]} : vector<8x256xf32> to vector<8x64xf32>
    %356 = vector.extract_strided_slice %346 {offsets = [0, 96], sizes = [8, 32], strides = [1, 1]} : vector<8x128xbf16> to vector<8x32xbf16>
    %357 = vector.extract_strided_slice %348 {offsets = [0, 96], sizes = [8, 32], strides = [1, 1]} : vector<8x128xbf16> to vector<8x32xbf16>
    %358 = tpu.concatenate %356, %357 in 1 : vector<8x32xbf16>, vector<8x32xbf16> -> vector<8x64xbf16>
    %359 = arith.extf %358 : vector<8x64xbf16> to vector<8x64xf32>
    %360 = arith.addf %355, %359 : vector<8x64xf32>
    %361 = arith.negf %354 : vector<8x192xf32>
    %362 = math.exp %361 : vector<8x192xf32>
    %cst_62 = arith.constant 1.000000e+00 : f32
    %363 = vector.broadcast %cst_62 : f32 to vector<8x192xf32>
    %364 = arith.addf %363, %362 : vector<8x192xf32>
    %365 = arith.divf %363, %364 : vector<8x192xf32>
    %366 = math.tanh %360 : vector<8x64xf32>
    %367 = vector.extract_strided_slice %365 {offsets = [0, 0], sizes = [8, 32], strides = [1, 1]} : vector<8x192xf32> to vector<8x32xf32>
    %368 = vector.extract_strided_slice %365 {offsets = [0, 96], sizes = [8, 32], strides = [1, 1]} : vector<8x192xf32> to vector<8x32xf32>
    %369 = tpu.concatenate %367, %368 in 1 : vector<8x32xf32>, vector<8x32xf32> -> vector<8x64xf32>
    %370 = vector.extract_strided_slice %365 {offsets = [0, 32], sizes = [8, 32], strides = [1, 1]} : vector<8x192xf32> to vector<8x32xf32>
    %371 = vector.extract_strided_slice %365 {offsets = [0, 128], sizes = [8, 32], strides = [1, 1]} : vector<8x192xf32> to vector<8x32xf32>
    %372 = tpu.concatenate %370, %371 in 1 : vector<8x32xf32>, vector<8x32xf32> -> vector<8x64xf32>
    %373 = vector.extract_strided_slice %365 {offsets = [0, 64], sizes = [8, 32], strides = [1, 1]} : vector<8x192xf32> to vector<8x32xf32>
    %374 = vector.extract_strided_slice %365 {offsets = [0, 160], sizes = [8, 32], strides = [1, 1]} : vector<8x192xf32> to vector<8x32xf32>
    %375 = tpu.concatenate %373, %374 in 1 : vector<8x32xf32>, vector<8x32xf32> -> vector<8x64xf32>
    %376 = arith.mulf %372, %339 : vector<8x64xf32>
    %377 = arith.mulf %369, %366 : vector<8x64xf32>
    %378 = arith.addf %376, %377 : vector<8x64xf32>
    %379 = math.tanh %378 : vector<8x64xf32>
    %380 = arith.mulf %375, %379 : vector<8x64xf32>
    %c6_i32_63 = arith.constant 6 : i32
    %381 = arith.addi %8, %c6_i32_63 : i32
    %c1_i32_64 = arith.constant 1 : i32
    %382 = arith.addi %10, %c1_i32_64 : i32
    %383 = vector.broadcast %381 : i32 to vector<8x64xi32>
    %384 = vector.broadcast %382 : i32 to vector<8x64xi32>
    %385 = arith.select %7, %383, %384 : vector<8x64xi1>, vector<8x64xi32>
    %386 = arith.cmpi slt, %385, %4 : vector<8x64xi32>
    %387 = arith.extui %386 : vector<8x64xi1> to vector<8x64xi32>
    %388 = arith.sitofp %387 : vector<8x64xi32> to vector<8x64xf32>
    %389 = arith.subf %380, %336 : vector<8x64xf32>
    %390 = arith.mulf %388, %389 : vector<8x64xf32>
    %391 = arith.addf %336, %390 : vector<8x64xf32>
    %392 = arith.subf %378, %339 : vector<8x64xf32>
    %393 = arith.mulf %388, %392 : vector<8x64xf32>
    %394 = arith.addf %339, %393 : vector<8x64xf32>
    %395 = arith.mulf %388, %380 : vector<8x64xf32>
    %396 = vector.extract_strided_slice %395 {offsets = [0, 0], sizes = [8, 32], strides = [1, 1]} : vector<8x64xf32> to vector<8x32xf32>
    %397 = vector.extract_strided_slice %395 {offsets = [0, 32], sizes = [8, 32], strides = [1, 1]} : vector<8x64xf32> to vector<8x32xf32>
    %398 = arith.truncf %391 : vector<8x64xf32> to vector<8x64xbf16>
    %cst_65 = arith.constant dense<0.000000e+00> : vector<8x256xf32>
    %399 = tpu.matmul %398, %3, %cst_65 {dimension_numbers = #tpu.dot_dimension_numbers<[1], [0], [0], [1], [0, 0, 1, 1], [], []>} : vector<8x64xbf16>, vector<64x256xbf16>, vector<8x256xf32> -> vector<8x256xf32>
    %c7_66 = arith.constant 7 : index
    %c0_67 = arith.constant 0 : index
    %c0_68 = arith.constant 0 : index
    %400 = vector.load %arg1[%c7_66, %c0_67, %c0_68] : memref<8x8x128xbf16, #tpu.memory_space<vmem>>, vector<1x8x128xbf16>
    %401 = vector.shape_cast %400 : vector<1x8x128xbf16> to vector<8x128xbf16>
    %c0_69 = arith.constant 0 : index
    %c0_70 = arith.constant 0 : index
    %c0_71 = arith.constant 0 : index
    %402 = vector.load %arg2[%c0_69, %c0_70, %c0_71] : memref<8x8x128xbf16, #tpu.memory_space<vmem>>, vector<1x8x128xbf16>
    %403 = vector.shape_cast %402 : vector<1x8x128xbf16> to vector<8x128xbf16>
    %404 = vector.extract_strided_slice %399 {offsets = [0, 0], sizes = [8, 192], strides = [1, 1]} : vector<8x256xf32> to vector<8x192xf32>
    %405 = vector.extract_strided_slice %401 {offsets = [0, 0], sizes = [8, 96], strides = [1, 1]} : vector<8x128xbf16> to vector<8x96xbf16>
    %406 = vector.extract_strided_slice %403 {offsets = [0, 0], sizes = [8, 96], strides = [1, 1]} : vector<8x128xbf16> to vector<8x96xbf16>
    %407 = tpu.concatenate %405, %406 in 1 : vector<8x96xbf16>, vector<8x96xbf16> -> vector<8x192xbf16>
    %408 = arith.extf %407 : vector<8x192xbf16> to vector<8x192xf32>
    %409 = arith.addf %404, %408 : vector<8x192xf32>
    %410 = vector.extract_strided_slice %399 {offsets = [0, 192], sizes = [8, 64], strides = [1, 1]} : vector<8x256xf32> to vector<8x64xf32>
    %411 = vector.extract_strided_slice %401 {offsets = [0, 96], sizes = [8, 32], strides = [1, 1]} : vector<8x128xbf16> to vector<8x32xbf16>
    %412 = vector.extract_strided_slice %403 {offsets = [0, 96], sizes = [8, 32], strides = [1, 1]} : vector<8x128xbf16> to vector<8x32xbf16>
    %413 = tpu.concatenate %411, %412 in 1 : vector<8x32xbf16>, vector<8x32xbf16> -> vector<8x64xbf16>
    %414 = arith.extf %413 : vector<8x64xbf16> to vector<8x64xf32>
    %415 = arith.addf %410, %414 : vector<8x64xf32>
    %416 = arith.negf %409 : vector<8x192xf32>
    %417 = math.exp %416 : vector<8x192xf32>
    %cst_72 = arith.constant 1.000000e+00 : f32
    %418 = vector.broadcast %cst_72 : f32 to vector<8x192xf32>
    %419 = arith.addf %418, %417 : vector<8x192xf32>
    %420 = arith.divf %418, %419 : vector<8x192xf32>
    %421 = math.tanh %415 : vector<8x64xf32>
    %422 = vector.extract_strided_slice %420 {offsets = [0, 0], sizes = [8, 32], strides = [1, 1]} : vector<8x192xf32> to vector<8x32xf32>
    %423 = vector.extract_strided_slice %420 {offsets = [0, 96], sizes = [8, 32], strides = [1, 1]} : vector<8x192xf32> to vector<8x32xf32>
    %424 = tpu.concatenate %422, %423 in 1 : vector<8x32xf32>, vector<8x32xf32> -> vector<8x64xf32>
    %425 = vector.extract_strided_slice %420 {offsets = [0, 32], sizes = [8, 32], strides = [1, 1]} : vector<8x192xf32> to vector<8x32xf32>
    %426 = vector.extract_strided_slice %420 {offsets = [0, 128], sizes = [8, 32], strides = [1, 1]} : vector<8x192xf32> to vector<8x32xf32>
    %427 = tpu.concatenate %425, %426 in 1 : vector<8x32xf32>, vector<8x32xf32> -> vector<8x64xf32>
    %428 = vector.extract_strided_slice %420 {offsets = [0, 64], sizes = [8, 32], strides = [1, 1]} : vector<8x192xf32> to vector<8x32xf32>
    %429 = vector.extract_strided_slice %420 {offsets = [0, 160], sizes = [8, 32], strides = [1, 1]} : vector<8x192xf32> to vector<8x32xf32>
    %430 = tpu.concatenate %428, %429 in 1 : vector<8x32xf32>, vector<8x32xf32> -> vector<8x64xf32>
    %431 = arith.mulf %427, %394 : vector<8x64xf32>
    %432 = arith.mulf %424, %421 : vector<8x64xf32>
    %433 = arith.addf %431, %432 : vector<8x64xf32>
    %434 = math.tanh %433 : vector<8x64xf32>
    %435 = arith.mulf %430, %434 : vector<8x64xf32>
    %c7_i32_73 = arith.constant 7 : i32
    %436 = arith.addi %8, %c7_i32_73 : i32
    %c0_i32_74 = arith.constant 0 : i32
    %437 = arith.addi %10, %c0_i32_74 : i32
    %438 = vector.broadcast %436 : i32 to vector<8x64xi32>
    %439 = vector.broadcast %437 : i32 to vector<8x64xi32>
    %440 = arith.select %7, %438, %439 : vector<8x64xi1>, vector<8x64xi32>
    %441 = arith.cmpi slt, %440, %4 : vector<8x64xi32>
    %442 = arith.extui %441 : vector<8x64xi1> to vector<8x64xi32>
    %443 = arith.sitofp %442 : vector<8x64xi32> to vector<8x64xf32>
    %444 = arith.subf %435, %391 : vector<8x64xf32>
    %445 = arith.mulf %443, %444 : vector<8x64xf32>
    %446 = arith.addf %391, %445 : vector<8x64xf32>
    %447 = arith.subf %433, %394 : vector<8x64xf32>
    %448 = arith.mulf %443, %447 : vector<8x64xf32>
    %449 = arith.addf %394, %448 : vector<8x64xf32>
    %450 = arith.mulf %443, %435 : vector<8x64xf32>
    %451 = vector.extract_strided_slice %450 {offsets = [0, 0], sizes = [8, 32], strides = [1, 1]} : vector<8x64xf32> to vector<8x32xf32>
    %452 = vector.extract_strided_slice %450 {offsets = [0, 32], sizes = [8, 32], strides = [1, 1]} : vector<8x64xf32> to vector<8x32xf32>
    %c0_75 = arith.constant 0 : index
    %c0_76 = arith.constant 0 : index
    %453 = vector.load %arg8[%c0_75, %c0_76] : memref<8x64xf32, #tpu.memory_space<vmem>>, vector<8x64xf32>
    tpu.vector_store %arg8[%c0_75, %c0_76], %446 {strides = array<i32>} : memref<8x64xf32, #tpu.memory_space<vmem>>, vector<8x64xf32>,
    %c0_77 = arith.constant 0 : index
    %c0_78 = arith.constant 0 : index
    %454 = vector.load %arg9[%c0_77, %c0_78] : memref<8x64xf32, #tpu.memory_space<vmem>>, vector<8x64xf32>
    tpu.vector_store %arg9[%c0_77, %c0_78], %449 {strides = array<i32>} : memref<8x64xf32, #tpu.memory_space<vmem>>, vector<8x64xf32>,
    %455 = tpu.concatenate %66, %121, %176, %231, %286, %341, %396, %451 in 1 : vector<8x32xf32>, vector<8x32xf32>, vector<8x32xf32>, vector<8x32xf32>, vector<8x32xf32>, vector<8x32xf32>, vector<8x32xf32>, vector<8x32xf32> -> vector<8x256xf32>
    %456 = arith.truncf %455 : vector<8x256xf32> to vector<8x256xbf16>
    %c0_79 = arith.constant 0 : index
    %c0_80 = arith.constant 0 : index
    %c0_81 = arith.constant 0 : index
    %457 = vector.load %arg5[%c0_79, %c0_80, %c0_81] : memref<1x8x256xbf16, #tpu.memory_space<vmem>>, vector<1x8x256xbf16>
    %458 = vector.shape_cast %457 : vector<1x8x256xbf16> to vector<8x256xbf16>
    %459 = vector.shape_cast %456 : vector<8x256xbf16> to vector<1x8x256xbf16>
    tpu.vector_store %arg5[%c0_79, %c0_80, %c0_81], %459 {strides = array<i32>} : memref<1x8x256xbf16, #tpu.memory_space<vmem>>, vector<1x8x256xbf16>,
    %460 = tpu.concatenate %452, %397, %342, %287, %232, %177, %122, %67 in 1 : vector<8x32xf32>, vector<8x32xf32>, vector<8x32xf32>, vector<8x32xf32>, vector<8x32xf32>, vector<8x32xf32>, vector<8x32xf32>, vector<8x32xf32> -> vector<8x256xf32>
    %461 = arith.truncf %460 : vector<8x256xf32> to vector<8x256xbf16>
    %c0_82 = arith.constant 0 : index
    %c0_83 = arith.constant 0 : index
    %c0_84 = arith.constant 0 : index
    %462 = vector.load %arg6[%c0_82, %c0_83, %c0_84] : memref<1x8x256xbf16, #tpu.memory_space<vmem>>, vector<1x8x256xbf16>
    %463 = vector.shape_cast %462 : vector<1x8x256xbf16> to vector<8x256xbf16>
    %464 = vector.shape_cast %461 : vector<8x256xbf16> to vector<1x8x256xbf16>
    tpu.vector_store %arg6[%c0_82, %c0_83, %c0_84], %464 {strides = array<i32>} : memref<1x8x256xbf16, #tpu.memory_space<vmem>>, vector<1x8x256xbf16>,
    %c0_i32_85 = arith.constant 0 : i32
    %465 = arith.cmpi eq, %arg0, %c0_i32_85 : i32
    %466 = arith.extui %465 : i1 to i32
    %c0_i32_86 = arith.constant 0 : i32
    %467 = arith.cmpi ne, %466, %c0_i32_86 : i32
    scf.if %467 {
      %c0_87 = arith.constant 0 : index
      %c0_88 = arith.constant 0 : index
      %468 = vector.load %arg7[%c0_87, %c0_88] : memref<8x64xf32, #tpu.memory_space<vmem>>, vector<8x64xf32>
      tpu.vector_store %arg7[%c0_87, %c0_88], %446 {strides = array<i32>} : memref<8x64xf32, #tpu.memory_space<vmem>>, vector<8x64xf32>,
    } else {
    }
    return
  }
  func.func @transform_0(%arg0: i32) -> (i32, i32, i32) {
    %c0_i32 = arith.constant 0 : i32
    %c0_i32_0 = arith.constant 0 : i32
    %c0_i32_1 = arith.constant 0 : i32
    return %arg0, %c0_i32, %c0_i32_0 : i32, i32, i32
  }
  func.func @transform_1(%arg0: i32) -> (i32, i32, i32) {
    %c0_i32 = arith.constant 0 : i32
    %0 = arith.subi %c0_i32, %arg0 : i32
    %c0_i32_0 = arith.constant 0 : i32
    %c0_i32_1 = arith.constant 0 : i32
    %c0_i32_2 = arith.constant 0 : i32
    return %0, %c0_i32_0, %c0_i32_1 : i32, i32, i32
  }
  func.func @transform_2(%arg0: i32) -> (i32, i32) {
    %c0_i32 = arith.constant 0 : i32
    %c0_i32_0 = arith.constant 0 : i32
    %c0_i32_1 = arith.constant 0 : i32
    return %c0_i32, %c0_i32_0 : i32, i32
  }
  func.func @transform_3(%arg0: i32) -> (i32, i32) {
    %c0_i32 = arith.constant 0 : i32
    %c0_i32_0 = arith.constant 0 : i32
    %c0_i32_1 = arith.constant 0 : i32
    return %c0_i32, %c0_i32_0 : i32, i32
  }
  func.func @transform_4(%arg0: i32) -> (i32, i32, i32) {
    %c0_i32 = arith.constant 0 : i32
    %c0_i32_0 = arith.constant 0 : i32
    %c0_i32_1 = arith.constant 0 : i32
    return %arg0, %c0_i32, %c0_i32_0 : i32, i32, i32
  }
  func.func @transform_5(%arg0: i32) -> (i32, i32, i32) {
    %c0_i32 = arith.constant 0 : i32
    %0 = arith.subi %c0_i32, %arg0 : i32
    %c0_i32_0 = arith.constant 0 : i32
    %c0_i32_1 = arith.constant 0 : i32
    %c0_i32_2 = arith.constant 0 : i32
    return %0, %c0_i32_0, %c0_i32_1 : i32, i32, i32
  }
  func.func @transform_6(%arg0: i32) -> (i32, i32) {
    %c0_i32 = arith.constant 0 : i32
    %c0_i32_0 = arith.constant 0 : i32
    %c0_i32_1 = arith.constant 0 : i32
    return %c0_i32, %c0_i32_0 : i32, i32
  }
}

module attributes {stable_mosaic.version = 11 : i64} {
  func.func @_bilstm_kernel(%arg0: i32, %arg1: memref<8x8x128xbf16, #tpu.memory_space<vmem>>, %arg2: memref<8x8x128xbf16, #tpu.memory_space<vmem>>, %arg3: memref<64x256xbf16, #tpu.memory_space<vmem>>, %arg4: memref<8x64xi32, #tpu.memory_space<vmem>>, %arg5: memref<1x8x256xbf16, #tpu.memory_space<vmem>>, %arg6: memref<1x8x256xbf16, #tpu.memory_space<vmem>>, %arg7: memref<8x64xf32, #tpu.memory_space<vmem>>, %arg8: memref<8x64xf32, #tpu.memory_space<vmem>>, %arg9: memref<8x64xf32, #tpu.memory_space<vmem>>) attributes {dimension_semantics = [#tpu.dimension_semantics<arbitrary>], iteration_bounds = array<i64: 1>, scalar_prefetch = 0 : i64, scratch_operands = 2 : i64, tpu.core_type = #tpu.core_type<tc>, window_params = [{transform_indices = @transform_0, window_bounds = array<i64: 8, 8, 128>}, {transform_indices = @transform_1, window_bounds = array<i64: 8, 8, 128>}, {pipeline_mode = #tpu.pipeline_mode<synchronous>, transform_indices = @transform_2, window_bounds = array<i64: 64, 256>}, {pipeline_mode = #tpu.pipeline_mode<synchronous>, transform_indices = @transform_3, window_bounds = array<i64: 8, 64>}, {transform_indices = @transform_4, window_bounds = array<i64: 1, 8, 256>}, {transform_indices = @transform_5, window_bounds = array<i64: 1, 8, 256>}, {pipeline_mode = #tpu.pipeline_mode<synchronous>, transform_indices = @transform_6, window_bounds = array<i64: 8, 64>}]} {
    %c0_i32 = arith.constant 0 : i32
    %0 = arith.cmpi eq, %arg0, %c0_i32 : i32
    %1 = arith.extui %0 : i1 to i32
    %c0_i32_0 = arith.constant 0 : i32
    %2 = arith.cmpi ne, %1, %c0_i32_0 : i32
    scf.if %2 {
      %cst_87 = arith.constant 0.000000e+00 : f32
      %468 = vector.broadcast %cst_87 : f32 to vector<8x64xf32>
      %c0_88 = arith.constant 0 : index
      %c0_89 = arith.constant 0 : index
      %469 = vector.load %arg8[%c0_88, %c0_89] : memref<8x64xf32, #tpu.memory_space<vmem>>, vector<8x64xf32>
      tpu.vector_store %arg8[%c0_88, %c0_89], %468 {strides = array<i32>} : memref<8x64xf32, #tpu.memory_space<vmem>>, vector<8x64xf32>,
      %cst_90 = arith.constant 0.000000e+00 : f32
      %470 = vector.broadcast %cst_90 : f32 to vector<8x64xf32>
      %c0_91 = arith.constant 0 : index
      %c0_92 = arith.constant 0 : index
      %471 = vector.load %arg9[%c0_91, %c0_92] : memref<8x64xf32, #tpu.memory_space<vmem>>, vector<8x64xf32>
      tpu.vector_store %arg9[%c0_91, %c0_92], %470 {strides = array<i32>} : memref<8x64xf32, #tpu.memory_space<vmem>>, vector<8x64xf32>,
    } else {
    }
    %c0 = arith.constant 0 : index
    %c0_1 = arith.constant 0 : index
    %3 = vector.load %arg3[%c0, %c0_1] : memref<64x256xbf16, #tpu.memory_space<vmem>>, vector<64x256xbf16>
    %c0_2 = arith.constant 0 : index
    %c0_3 = arith.constant 0 : index
    %4 = vector.load %arg4[%c0_2, %c0_3] : memref<8x64xi32, #tpu.memory_space<vmem>>, vector<8x64xi32>
    %5 = tpu.iota {dimensions = array<i32: 1>} : vector<8x64xi32>
    %c32_i32 = arith.constant 32 : i32
    %6 = vector.broadcast %c32_i32 : i32 to vector<8x64xi32>
    %7 = arith.cmpi slt, %5, %6 : vector<8x64xi32>
    %c8_i32 = arith.constant 8 : i32
    %8 = arith.muli %arg0, %c8_i32 : i32
    %c0_i32_4 = arith.constant 0 : i32
    %9 = arith.subi %c0_i32_4, %arg0 : i32
    %c8_i32_5 = arith.constant 8 : i32
    %10 = arith.muli %9, %c8_i32_5 : i32
    %c0_6 = arith.constant 0 : index
    %c0_7 = arith.constant 0 : index
    %11 = vector.load %arg8[%c0_6, %c0_7] : memref<8x64xf32, #tpu.memory_space<vmem>>, vector<8x64xf32>
    %c0_8 = arith.constant 0 : index
    %c0_9 = arith.constant 0 : index
    %12 = vector.load %arg9[%c0_8, %c0_9] : memref<8x64xf32, #tpu.memory_space<vmem>>, vector<8x64xf32>
    %13 = arith.truncf %11 : vector<8x64xf32> to vector<8x64xbf16>
    %cst = arith.constant dense<0.000000e+00> : vector<8x256xf32>
    %14 = tpu.matmul %13, %3, %cst {dimension_numbers = #tpu.dot_dimension_numbers<[1], [0], [0], [1], [0, 0, 1, 1], [], []>} : vector<8x64xbf16>, vector<64x256xbf16>, vector<8x256xf32> -> vector<8x256xf32>
    %c0_10 = arith.constant 0 : index
    %c0_11 = arith.constant 0 : index
    %c0_12 = arith.constant 0 : index
    %15 = vector.load %arg1[%c0_10, %c0_11, %c0_12] : memref<8x8x128xbf16, #tpu.memory_space<vmem>>, vector<1x8x128xbf16>
    %16 = vector.shape_cast %15 : vector<1x8x128xbf16> to vector<8x128xbf16>
    %c7 = arith.constant 7 : index
    %c0_13 = arith.constant 0 : index
    %c0_14 = arith.constant 0 : index
    %17 = vector.load %arg2[%c7, %c0_13, %c0_14] : memref<8x8x128xbf16, #tpu.memory_space<vmem>>, vector<1x8x128xbf16>
    %18 = vector.shape_cast %17 : vector<1x8x128xbf16> to vector<8x128xbf16>
    %19 = vector.extract_strided_slice %14 {offsets = [0, 0], sizes = [8, 192], strides = [1, 1]} : vector<8x256xf32> to vector<8x192xf32>
    %20 = vector.extract_strided_slice %16 {offsets = [0, 0], sizes = [8, 96], strides = [1, 1]} : vector<8x128xbf16> to vector<8x96xbf16>
    %21 = vector.extract_strided_slice %18 {offsets = [0, 0], sizes = [8, 96], strides = [1, 1]} : vector<8x128xbf16> to vector<8x96xbf16>
    %22 = tpu.concatenate %20, %21 in 1 : vector<8x96xbf16>, vector<8x96xbf16> -> vector<8x192xbf16>
    %23 = arith.extf %22 : vector<8x192xbf16> to vector<8x192xf32>
    %24 = arith.addf %19, %23 : vector<8x192xf32>
    %25 = vector.extract_strided_slice %14 {offsets = [0, 192], sizes = [8, 64], strides = [1, 1]} : vector<8x256xf32> to vector<8x64xf32>
    %26 = vector.extract_strided_slice %16 {offsets = [0, 96], sizes = [8, 32], strides = [1, 1]} : vector<8x128xbf16> to vector<8x32xbf16>
    %27 = vector.extract_strided_slice %18 {offsets = [0, 96], sizes = [8, 32], strides = [1, 1]} : vector<8x128xbf16> to vector<8x32xbf16>
    %28 = tpu.concatenate %26, %27 in 1 : vector<8x32xbf16>, vector<8x32xbf16> -> vector<8x64xbf16>
    %29 = arith.extf %28 : vector<8x64xbf16> to vector<8x64xf32>
    %30 = arith.addf %25, %29 : vector<8x64xf32>
    %31 = arith.negf %24 : vector<8x192xf32>
    %32 = math.exp %31 : vector<8x192xf32>
    %cst_15 = arith.constant 1.000000e+00 : f32
    %33 = vector.broadcast %cst_15 : f32 to vector<8x192xf32>
    %34 = arith.addf %33, %32 : vector<8x192xf32>
    %35 = arith.divf %33, %34 : vector<8x192xf32>
    %36 = math.tanh %30 : vector<8x64xf32>
    %37 = vector.extract_strided_slice %35 {offsets = [0, 0], sizes = [8, 32], strides = [1, 1]} : vector<8x192xf32> to vector<8x32xf32>
    %38 = vector.extract_strided_slice %35 {offsets = [0, 96], sizes = [8, 32], strides = [1, 1]} : vector<8x192xf32> to vector<8x32xf32>
    %39 = tpu.concatenate %37, %38 in 1 : vector<8x32xf32>, vector<8x32xf32> -> vector<8x64xf32>
    %40 = vector.extract_strided_slice %35 {offsets = [0, 32], sizes = [8, 32], strides = [1, 1]} : vector<8x192xf32> to vector<8x32xf32>
    %41 = vector.extract_strided_slice %35 {offsets = [0, 128], sizes = [8, 32], strides = [1, 1]} : vector<8x192xf32> to vector<8x32xf32>
    %42 = tpu.concatenate %40, %41 in 1 : vector<8x32xf32>, vector<8x32xf32> -> vector<8x64xf32>
    %43 = vector.extract_strided_slice %35 {offsets = [0, 64], sizes = [8, 32], strides = [1, 1]} : vector<8x192xf32> to vector<8x32xf32>
    %44 = vector.extract_strided_slice %35 {offsets = [0, 160], sizes = [8, 32], strides = [1, 1]} : vector<8x192xf32> to vector<8x32xf32>
    %45 = tpu.concatenate %43, %44 in 1 : vector<8x32xf32>, vector<8x32xf32> -> vector<8x64xf32>
    %46 = arith.mulf %42, %12 : vector<8x64xf32>
    %47 = arith.mulf %39, %36 : vector<8x64xf32>
    %48 = arith.addf %46, %47 : vector<8x64xf32>
    %49 = math.tanh %48 : vector<8x64xf32>
    %50 = arith.mulf %45, %49 : vector<8x64xf32>
    %c0_i32_16 = arith.constant 0 : i32
    %51 = arith.addi %8, %c0_i32_16 : i32
    %c7_i32 = arith.constant 7 : i32
    %52 = arith.addi %10, %c7_i32 : i32
    %53 = vector.broadcast %51 : i32 to vector<8x64xi32>
    %54 = vector.broadcast %52 : i32 to vector<8x64xi32>
    %55 = arith.select %7, %53, %54 : vector<8x64xi1>, vector<8x64xi32>
    %56 = arith.cmpi slt, %55, %4 : vector<8x64xi32>
    %57 = arith.extui %56 : vector<8x64xi1> to vector<8x64xi32>
    %58 = arith.sitofp %57 : vector<8x64xi32> to vector<8x64xf32>
    %59 = arith.subf %50, %11 : vector<8x64xf32>
    %60 = arith.mulf %58, %59 : vector<8x64xf32>
    %61 = arith.addf %11, %60 : vector<8x64xf32>
    %62 = arith.subf %48, %12 : vector<8x64xf32>
    %63 = arith.mulf %58, %62 : vector<8x64xf32>
    %64 = arith.addf %12, %63 : vector<8x64xf32>
    %65 = arith.mulf %58, %50 : vector<8x64xf32>
    %66 = vector.extract_strided_slice %65 {offsets = [0, 0], sizes = [8, 32], strides = [1, 1]} : vector<8x64xf32> to vector<8x32xf32>
    %67 = vector.extract_strided_slice %65 {offsets = [0, 32], sizes = [8, 32], strides = [1, 1]} : vector<8x64xf32> to vector<8x32xf32>
    %68 = arith.truncf %61 : vector<8x64xf32> to vector<8x64xbf16>
    %cst_17 = arith.constant dense<0.000000e+00> : vector<8x256xf32>
    %69 = tpu.matmul %68, %3, %cst_17 {dimension_numbers = #tpu.dot_dimension_numbers<[1], [0], [0], [1], [0, 0, 1, 1], [], []>} : vector<8x64xbf16>, vector<64x256xbf16>, vector<8x256xf32> -> vector<8x256xf32>
    %c1 = arith.constant 1 : index
    %c0_18 = arith.constant 0 : index
    %c0_19 = arith.constant 0 : index
    %70 = vector.load %arg1[%c1, %c0_18, %c0_19] : memref<8x8x128xbf16, #tpu.memory_space<vmem>>, vector<1x8x128xbf16>
    %71 = vector.shape_cast %70 : vector<1x8x128xbf16> to vector<8x128xbf16>
    %c6 = arith.constant 6 : index
    %c0_20 = arith.constant 0 : index
    %c0_21 = arith.constant 0 : index
    %72 = vector.load %arg2[%c6, %c0_20, %c0_21] : memref<8x8x128xbf16, #tpu.memory_space<vmem>>, vector<1x8x128xbf16>
    %73 = vector.shape_cast %72 : vector<1x8x128xbf16> to vector<8x128xbf16>
    %74 = vector.extract_strided_slice %69 {offsets = [0, 0], sizes = [8, 192], strides = [1, 1]} : vector<8x256xf32> to vector<8x192xf32>
    %75 = vector.extract_strided_slice %71 {offsets = [0, 0], sizes = [8, 96], strides = [1, 1]} : vector<8x128xbf16> to vector<8x96xbf16>
    %76 = vector.extract_strided_slice %73 {offsets = [0, 0], sizes = [8, 96], strides = [1, 1]} : vector<8x128xbf16> to vector<8x96xbf16>
    %77 = tpu.concatenate %75, %76 in 1 : vector<8x96xbf16>, vector<8x96xbf16> -> vector<8x192xbf16>
    %78 = arith.extf %77 : vector<8x192xbf16> to vector<8x192xf32>
    %79 = arith.addf %74, %78 : vector<8x192xf32>
    %80 = vector.extract_strided_slice %69 {offsets = [0, 192], sizes = [8, 64], strides = [1, 1]} : vector<8x256xf32> to vector<8x64xf32>
    %81 = vector.extract_strided_slice %71 {offsets = [0, 96], sizes = [8, 32], strides = [1, 1]} : vector<8x128xbf16> to vector<8x32xbf16>
    %82 = vector.extract_strided_slice %73 {offsets = [0, 96], sizes = [8, 32], strides = [1, 1]} : vector<8x128xbf16> to vector<8x32xbf16>
    %83 = tpu.concatenate %81, %82 in 1 : vector<8x32xbf16>, vector<8x32xbf16> -> vector<8x64xbf16>
    %84 = arith.extf %83 : vector<8x64xbf16> to vector<8x64xf32>
    %85 = arith.addf %80, %84 : vector<8x64xf32>
    %86 = arith.negf %79 : vector<8x192xf32>
    %87 = math.exp %86 : vector<8x192xf32>
    %cst_22 = arith.constant 1.000000e+00 : f32
    %88 = vector.broadcast %cst_22 : f32 to vector<8x192xf32>
    %89 = arith.addf %88, %87 : vector<8x192xf32>
    %90 = arith.divf %88, %89 : vector<8x192xf32>
    %91 = math.tanh %85 : vector<8x64xf32>
    %92 = vector.extract_strided_slice %90 {offsets = [0, 0], sizes = [8, 32], strides = [1, 1]} : vector<8x192xf32> to vector<8x32xf32>
    %93 = vector.extract_strided_slice %90 {offsets = [0, 96], sizes = [8, 32], strides = [1, 1]} : vector<8x192xf32> to vector<8x32xf32>
    %94 = tpu.concatenate %92, %93 in 1 : vector<8x32xf32>, vector<8x32xf32> -> vector<8x64xf32>
    %95 = vector.extract_strided_slice %90 {offsets = [0, 32], sizes = [8, 32], strides = [1, 1]} : vector<8x192xf32> to vector<8x32xf32>
    %96 = vector.extract_strided_slice %90 {offsets = [0, 128], sizes = [8, 32], strides = [1, 1]} : vector<8x192xf32> to vector<8x32xf32>
    %97 = tpu.concatenate %95, %96 in 1 : vector<8x32xf32>, vector<8x32xf32> -> vector<8x64xf32>
    %98 = vector.extract_strided_slice %90 {offsets = [0, 64], sizes = [8, 32], strides = [1, 1]} : vector<8x192xf32> to vector<8x32xf32>
    %99 = vector.extract_strided_slice %90 {offsets = [0, 160], sizes = [8, 32], strides = [1, 1]} : vector<8x192xf32> to vector<8x32xf32>
    %100 = tpu.concatenate %98, %99 in 1 : vector<8x32xf32>, vector<8x32xf32> -> vector<8x64xf32>
    %101 = arith.mulf %97, %64 : vector<8x64xf32>
    %102 = arith.mulf %94, %91 : vector<8x64xf32>
    %103 = arith.addf %101, %102 : vector<8x64xf32>
    %104 = math.tanh %103 : vector<8x64xf32>
    %105 = arith.mulf %100, %104 : vector<8x64xf32>
    %c1_i32 = arith.constant 1 : i32
    %106 = arith.addi %8, %c1_i32 : i32
    %c6_i32 = arith.constant 6 : i32
    %107 = arith.addi %10, %c6_i32 : i32
    %108 = vector.broadcast %106 : i32 to vector<8x64xi32>
    %109 = vector.broadcast %107 : i32 to vector<8x64xi32>
    %110 = arith.select %7, %108, %109 : vector<8x64xi1>, vector<8x64xi32>
    %111 = arith.cmpi slt, %110, %4 : vector<8x64xi32>
    %112 = arith.extui %111 : vector<8x64xi1> to vector<8x64xi32>
    %113 = arith.sitofp %112 : vector<8x64xi32> to vector<8x64xf32>
    %114 = arith.subf %105, %61 : vector<8x64xf32>
    %115 = arith.mulf %113, %114 : vector<8x64xf32>
    %116 = arith.addf %61, %115 : vector<8x64xf32>
    %117 = arith.subf %103, %64 : vector<8x64xf32>
    %118 = arith.mulf %113, %117 : vector<8x64xf32>
    %119 = arith.addf %64, %118 : vector<8x64xf32>
    %120 = arith.mulf %113, %105 : vector<8x64xf32>
    %121 = vector.extract_strided_slice %120 {offsets = [0, 0], sizes = [8, 32], strides = [1, 1]} : vector<8x64xf32> to vector<8x32xf32>
    %122 = vector.extract_strided_slice %120 {offsets = [0, 32], sizes = [8, 32], strides = [1, 1]} : vector<8x64xf32> to vector<8x32xf32>
    %123 = arith.truncf %116 : vector<8x64xf32> to vector<8x64xbf16>
    %cst_23 = arith.constant dense<0.000000e+00> : vector<8x256xf32>
    %124 = tpu.matmul %123, %3, %cst_23 {dimension_numbers = #tpu.dot_dimension_numbers<[1], [0], [0], [1], [0, 0, 1, 1], [], []>} : vector<8x64xbf16>, vector<64x256xbf16>, vector<8x256xf32> -> vector<8x256xf32>
    %c2 = arith.constant 2 : index
    %c0_24 = arith.constant 0 : index
    %c0_25 = arith.constant 0 : index
    %125 = vector.load %arg1[%c2, %c0_24, %c0_25] : memref<8x8x128xbf16, #tpu.memory_space<vmem>>, vector<1x8x128xbf16>
    %126 = vector.shape_cast %125 : vector<1x8x128xbf16> to vector<8x128xbf16>
    %c5 = arith.constant 5 : index
    %c0_26 = arith.constant 0 : index
    %c0_27 = arith.constant 0 : index
    %127 = vector.load %arg2[%c5, %c0_26, %c0_27] : memref<8x8x128xbf16, #tpu.memory_space<vmem>>, vector<1x8x128xbf16>
    %128 = vector.shape_cast %127 : vector<1x8x128xbf16> to vector<8x128xbf16>
    %129 = vector.extract_strided_slice %124 {offsets = [0, 0], sizes = [8, 192], strides = [1, 1]} : vector<8x256xf32> to vector<8x192xf32>
    %130 = vector.extract_strided_slice %126 {offsets = [0, 0], sizes = [8, 96], strides = [1, 1]} : vector<8x128xbf16> to vector<8x96xbf16>
    %131 = vector.extract_strided_slice %128 {offsets = [0, 0], sizes = [8, 96], strides = [1, 1]} : vector<8x128xbf16> to vector<8x96xbf16>
    %132 = tpu.concatenate %130, %131 in 1 : vector<8x96xbf16>, vector<8x96xbf16> -> vector<8x192xbf16>
    %133 = arith.extf %132 : vector<8x192xbf16> to vector<8x192xf32>
    %134 = arith.addf %129, %133 : vector<8x192xf32>
    %135 = vector.extract_strided_slice %124 {offsets = [0, 192], sizes = [8, 64], strides = [1, 1]} : vector<8x256xf32> to vector<8x64xf32>
    %136 = vector.extract_strided_slice %126 {offsets = [0, 96], sizes = [8, 32], strides = [1, 1]} : vector<8x128xbf16> to vector<8x32xbf16>
    %137 = vector.extract_strided_slice %128 {offsets = [0, 96], sizes = [8, 32], strides = [1, 1]} : vector<8x128xbf16> to vector<8x32xbf16>
    %138 = tpu.concatenate %136, %137 in 1 : vector<8x32xbf16>, vector<8x32xbf16> -> vector<8x64xbf16>
    %139 = arith.extf %138 : vector<8x64xbf16> to vector<8x64xf32>
    %140 = arith.addf %135, %139 : vector<8x64xf32>
    %141 = arith.negf %134 : vector<8x192xf32>
    %142 = math.exp %141 : vector<8x192xf32>
    %cst_28 = arith.constant 1.000000e+00 : f32
    %143 = vector.broadcast %cst_28 : f32 to vector<8x192xf32>
    %144 = arith.addf %143, %142 : vector<8x192xf32>
    %145 = arith.divf %143, %144 : vector<8x192xf32>
    %146 = math.tanh %140 : vector<8x64xf32>
    %147 = vector.extract_strided_slice %145 {offsets = [0, 0], sizes = [8, 32], strides = [1, 1]} : vector<8x192xf32> to vector<8x32xf32>
    %148 = vector.extract_strided_slice %145 {offsets = [0, 96], sizes = [8, 32], strides = [1, 1]} : vector<8x192xf32> to vector<8x32xf32>
    %149 = tpu.concatenate %147, %148 in 1 : vector<8x32xf32>, vector<8x32xf32> -> vector<8x64xf32>
    %150 = vector.extract_strided_slice %145 {offsets = [0, 32], sizes = [8, 32], strides = [1, 1]} : vector<8x192xf32> to vector<8x32xf32>
    %151 = vector.extract_strided_slice %145 {offsets = [0, 128], sizes = [8, 32], strides = [1, 1]} : vector<8x192xf32> to vector<8x32xf32>
    %152 = tpu.concatenate %150, %151 in 1 : vector<8x32xf32>, vector<8x32xf32> -> vector<8x64xf32>
    %153 = vector.extract_strided_slice %145 {offsets = [0, 64], sizes = [8, 32], strides = [1, 1]} : vector<8x192xf32> to vector<8x32xf32>
    %154 = vector.extract_strided_slice %145 {offsets = [0, 160], sizes = [8, 32], strides = [1, 1]} : vector<8x192xf32> to vector<8x32xf32>
    %155 = tpu.concatenate %153, %154 in 1 : vector<8x32xf32>, vector<8x32xf32> -> vector<8x64xf32>
    %156 = arith.mulf %152, %119 : vector<8x64xf32>
    %157 = arith.mulf %149, %146 : vector<8x64xf32>
    %158 = arith.addf %156, %157 : vector<8x64xf32>
    %159 = math.tanh %158 : vector<8x64xf32>
    %160 = arith.mulf %155, %159 : vector<8x64xf32>
    %c2_i32 = arith.constant 2 : i32
    %161 = arith.addi %8, %c2_i32 : i32
    %c5_i32 = arith.constant 5 : i32
    %162 = arith.addi %10, %c5_i32 : i32
    %163 = vector.broadcast %161 : i32 to vector<8x64xi32>
    %164 = vector.broadcast %162 : i32 to vector<8x64xi32>
    %165 = arith.select %7, %163, %164 : vector<8x64xi1>, vector<8x64xi32>
    %166 = arith.cmpi slt, %165, %4 : vector<8x64xi32>
    %167 = arith.extui %166 : vector<8x64xi1> to vector<8x64xi32>
    %168 = arith.sitofp %167 : vector<8x64xi32> to vector<8x64xf32>
    %169 = arith.subf %160, %116 : vector<8x64xf32>
    %170 = arith.mulf %168, %169 : vector<8x64xf32>
    %171 = arith.addf %116, %170 : vector<8x64xf32>
    %172 = arith.subf %158, %119 : vector<8x64xf32>
    %173 = arith.mulf %168, %172 : vector<8x64xf32>
    %174 = arith.addf %119, %173 : vector<8x64xf32>
    %175 = arith.mulf %168, %160 : vector<8x64xf32>
    %176 = vector.extract_strided_slice %175 {offsets = [0, 0], sizes = [8, 32], strides = [1, 1]} : vector<8x64xf32> to vector<8x32xf32>
    %177 = vector.extract_strided_slice %175 {offsets = [0, 32], sizes = [8, 32], strides = [1, 1]} : vector<8x64xf32> to vector<8x32xf32>
    %178 = arith.truncf %171 : vector<8x64xf32> to vector<8x64xbf16>
    %cst_29 = arith.constant dense<0.000000e+00> : vector<8x256xf32>
    %179 = tpu.matmul %178, %3, %cst_29 {dimension_numbers = #tpu.dot_dimension_numbers<[1], [0], [0], [1], [0, 0, 1, 1], [], []>} : vector<8x64xbf16>, vector<64x256xbf16>, vector<8x256xf32> -> vector<8x256xf32>
    %c3 = arith.constant 3 : index
    %c0_30 = arith.constant 0 : index
    %c0_31 = arith.constant 0 : index
    %180 = vector.load %arg1[%c3, %c0_30, %c0_31] : memref<8x8x128xbf16, #tpu.memory_space<vmem>>, vector<1x8x128xbf16>
    %181 = vector.shape_cast %180 : vector<1x8x128xbf16> to vector<8x128xbf16>
    %c4 = arith.constant 4 : index
    %c0_32 = arith.constant 0 : index
    %c0_33 = arith.constant 0 : index
    %182 = vector.load %arg2[%c4, %c0_32, %c0_33] : memref<8x8x128xbf16, #tpu.memory_space<vmem>>, vector<1x8x128xbf16>
    %183 = vector.shape_cast %182 : vector<1x8x128xbf16> to vector<8x128xbf16>
    %184 = vector.extract_strided_slice %179 {offsets = [0, 0], sizes = [8, 192], strides = [1, 1]} : vector<8x256xf32> to vector<8x192xf32>
    %185 = vector.extract_strided_slice %181 {offsets = [0, 0], sizes = [8, 96], strides = [1, 1]} : vector<8x128xbf16> to vector<8x96xbf16>
    %186 = vector.extract_strided_slice %183 {offsets = [0, 0], sizes = [8, 96], strides = [1, 1]} : vector<8x128xbf16> to vector<8x96xbf16>
    %187 = tpu.concatenate %185, %186 in 1 : vector<8x96xbf16>, vector<8x96xbf16> -> vector<8x192xbf16>
    %188 = arith.extf %187 : vector<8x192xbf16> to vector<8x192xf32>
    %189 = arith.addf %184, %188 : vector<8x192xf32>
    %190 = vector.extract_strided_slice %179 {offsets = [0, 192], sizes = [8, 64], strides = [1, 1]} : vector<8x256xf32> to vector<8x64xf32>
    %191 = vector.extract_strided_slice %181 {offsets = [0, 96], sizes = [8, 32], strides = [1, 1]} : vector<8x128xbf16> to vector<8x32xbf16>
    %192 = vector.extract_strided_slice %183 {offsets = [0, 96], sizes = [8, 32], strides = [1, 1]} : vector<8x128xbf16> to vector<8x32xbf16>
    %193 = tpu.concatenate %191, %192 in 1 : vector<8x32xbf16>, vector<8x32xbf16> -> vector<8x64xbf16>
    %194 = arith.extf %193 : vector<8x64xbf16> to vector<8x64xf32>
    %195 = arith.addf %190, %194 : vector<8x64xf32>
    %196 = arith.negf %189 : vector<8x192xf32>
    %197 = math.exp %196 : vector<8x192xf32>
    %cst_34 = arith.constant 1.000000e+00 : f32
    %198 = vector.broadcast %cst_34 : f32 to vector<8x192xf32>
    %199 = arith.addf %198, %197 : vector<8x192xf32>
    %200 = arith.divf %198, %199 : vector<8x192xf32>
    %201 = math.tanh %195 : vector<8x64xf32>
    %202 = vector.extract_strided_slice %200 {offsets = [0, 0], sizes = [8, 32], strides = [1, 1]} : vector<8x192xf32> to vector<8x32xf32>
    %203 = vector.extract_strided_slice %200 {offsets = [0, 96], sizes = [8, 32], strides = [1, 1]} : vector<8x192xf32> to vector<8x32xf32>
    %204 = tpu.concatenate %202, %203 in 1 : vector<8x32xf32>, vector<8x32xf32> -> vector<8x64xf32>
    %205 = vector.extract_strided_slice %200 {offsets = [0, 32], sizes = [8, 32], strides = [1, 1]} : vector<8x192xf32> to vector<8x32xf32>
    %206 = vector.extract_strided_slice %200 {offsets = [0, 128], sizes = [8, 32], strides = [1, 1]} : vector<8x192xf32> to vector<8x32xf32>
    %207 = tpu.concatenate %205, %206 in 1 : vector<8x32xf32>, vector<8x32xf32> -> vector<8x64xf32>
    %208 = vector.extract_strided_slice %200 {offsets = [0, 64], sizes = [8, 32], strides = [1, 1]} : vector<8x192xf32> to vector<8x32xf32>
    %209 = vector.extract_strided_slice %200 {offsets = [0, 160], sizes = [8, 32], strides = [1, 1]} : vector<8x192xf32> to vector<8x32xf32>
    %210 = tpu.concatenate %208, %209 in 1 : vector<8x32xf32>, vector<8x32xf32> -> vector<8x64xf32>
    %211 = arith.mulf %207, %174 : vector<8x64xf32>
    %212 = arith.mulf %204, %201 : vector<8x64xf32>
    %213 = arith.addf %211, %212 : vector<8x64xf32>
    %214 = math.tanh %213 : vector<8x64xf32>
    %215 = arith.mulf %210, %214 : vector<8x64xf32>
    %c3_i32 = arith.constant 3 : i32
    %216 = arith.addi %8, %c3_i32 : i32
    %c4_i32 = arith.constant 4 : i32
    %217 = arith.addi %10, %c4_i32 : i32
    %218 = vector.broadcast %216 : i32 to vector<8x64xi32>
    %219 = vector.broadcast %217 : i32 to vector<8x64xi32>
    %220 = arith.select %7, %218, %219 : vector<8x64xi1>, vector<8x64xi32>
    %221 = arith.cmpi slt, %220, %4 : vector<8x64xi32>
    %222 = arith.extui %221 : vector<8x64xi1> to vector<8x64xi32>
    %223 = arith.sitofp %222 : vector<8x64xi32> to vector<8x64xf32>
    %224 = arith.subf %215, %171 : vector<8x64xf32>
    %225 = arith.mulf %223, %224 : vector<8x64xf32>
    %226 = arith.addf %171, %225 : vector<8x64xf32>
    %227 = arith.subf %213, %174 : vector<8x64xf32>
    %228 = arith.mulf %223, %227 : vector<8x64xf32>
    %229 = arith.addf %174, %228 : vector<8x64xf32>
    %230 = arith.mulf %223, %215 : vector<8x64xf32>
    %231 = vector.extract_strided_slice %230 {offsets = [0, 0], sizes = [8, 32], strides = [1, 1]} : vector<8x64xf32> to vector<8x32xf32>
    %232 = vector.extract_strided_slice %230 {offsets = [0, 32], sizes = [8, 32], strides = [1, 1]} : vector<8x64xf32> to vector<8x32xf32>
    %233 = arith.truncf %226 : vector<8x64xf32> to vector<8x64xbf16>
    %cst_35 = arith.constant dense<0.000000e+00> : vector<8x256xf32>
    %234 = tpu.matmul %233, %3, %cst_35 {dimension_numbers = #tpu.dot_dimension_numbers<[1], [0], [0], [1], [0, 0, 1, 1], [], []>} : vector<8x64xbf16>, vector<64x256xbf16>, vector<8x256xf32> -> vector<8x256xf32>
    %c4_36 = arith.constant 4 : index
    %c0_37 = arith.constant 0 : index
    %c0_38 = arith.constant 0 : index
    %235 = vector.load %arg1[%c4_36, %c0_37, %c0_38] : memref<8x8x128xbf16, #tpu.memory_space<vmem>>, vector<1x8x128xbf16>
    %236 = vector.shape_cast %235 : vector<1x8x128xbf16> to vector<8x128xbf16>
    %c3_39 = arith.constant 3 : index
    %c0_40 = arith.constant 0 : index
    %c0_41 = arith.constant 0 : index
    %237 = vector.load %arg2[%c3_39, %c0_40, %c0_41] : memref<8x8x128xbf16, #tpu.memory_space<vmem>>, vector<1x8x128xbf16>
    %238 = vector.shape_cast %237 : vector<1x8x128xbf16> to vector<8x128xbf16>
    %239 = vector.extract_strided_slice %234 {offsets = [0, 0], sizes = [8, 192], strides = [1, 1]} : vector<8x256xf32> to vector<8x192xf32>
    %240 = vector.extract_strided_slice %236 {offsets = [0, 0], sizes = [8, 96], strides = [1, 1]} : vector<8x128xbf16> to vector<8x96xbf16>
    %241 = vector.extract_strided_slice %238 {offsets = [0, 0], sizes = [8, 96], strides = [1, 1]} : vector<8x128xbf16> to vector<8x96xbf16>
    %242 = tpu.concatenate %240, %241 in 1 : vector<8x96xbf16>, vector<8x96xbf16> -> vector<8x192xbf16>
    %243 = arith.extf %242 : vector<8x192xbf16> to vector<8x192xf32>
    %244 = arith.addf %239, %243 : vector<8x192xf32>
    %245 = vector.extract_strided_slice %234 {offsets = [0, 192], sizes = [8, 64], strides = [1, 1]} : vector<8x256xf32> to vector<8x64xf32>
    %246 = vector.extract_strided_slice %236 {offsets = [0, 96], sizes = [8, 32], strides = [1, 1]} : vector<8x128xbf16> to vector<8x32xbf16>
    %247 = vector.extract_strided_slice %238 {offsets = [0, 96], sizes = [8, 32], strides = [1, 1]} : vector<8x128xbf16> to vector<8x32xbf16>
    %248 = tpu.concatenate %246, %247 in 1 : vector<8x32xbf16>, vector<8x32xbf16> -> vector<8x64xbf16>
    %249 = arith.extf %248 : vector<8x64xbf16> to vector<8x64xf32>
    %250 = arith.addf %245, %249 : vector<8x64xf32>
    %251 = arith.negf %244 : vector<8x192xf32>
    %252 = math.exp %251 : vector<8x192xf32>
    %cst_42 = arith.constant 1.000000e+00 : f32
    %253 = vector.broadcast %cst_42 : f32 to vector<8x192xf32>
    %254 = arith.addf %253, %252 : vector<8x192xf32>
    %255 = arith.divf %253, %254 : vector<8x192xf32>
    %256 = math.tanh %250 : vector<8x64xf32>
    %257 = vector.extract_strided_slice %255 {offsets = [0, 0], sizes = [8, 32], strides = [1, 1]} : vector<8x192xf32> to vector<8x32xf32>
    %258 = vector.extract_strided_slice %255 {offsets = [0, 96], sizes = [8, 32], strides = [1, 1]} : vector<8x192xf32> to vector<8x32xf32>
    %259 = tpu.concatenate %257, %258 in 1 : vector<8x32xf32>, vector<8x32xf32> -> vector<8x64xf32>
    %260 = vector.extract_strided_slice %255 {offsets = [0, 32], sizes = [8, 32], strides = [1, 1]} : vector<8x192xf32> to vector<8x32xf32>
    %261 = vector.extract_strided_slice %255 {offsets = [0, 128], sizes = [8, 32], strides = [1, 1]} : vector<8x192xf32> to vector<8x32xf32>
    %262 = tpu.concatenate %260, %261 in 1 : vector<8x32xf32>, vector<8x32xf32> -> vector<8x64xf32>
    %263 = vector.extract_strided_slice %255 {offsets = [0, 64], sizes = [8, 32], strides = [1, 1]} : vector<8x192xf32> to vector<8x32xf32>
    %264 = vector.extract_strided_slice %255 {offsets = [0, 160], sizes = [8, 32], strides = [1, 1]} : vector<8x192xf32> to vector<8x32xf32>
    %265 = tpu.concatenate %263, %264 in 1 : vector<8x32xf32>, vector<8x32xf32> -> vector<8x64xf32>
    %266 = arith.mulf %262, %229 : vector<8x64xf32>
    %267 = arith.mulf %259, %256 : vector<8x64xf32>
    %268 = arith.addf %266, %267 : vector<8x64xf32>
    %269 = math.tanh %268 : vector<8x64xf32>
    %270 = arith.mulf %265, %269 : vector<8x64xf32>
    %c4_i32_43 = arith.constant 4 : i32
    %271 = arith.addi %8, %c4_i32_43 : i32
    %c3_i32_44 = arith.constant 3 : i32
    %272 = arith.addi %10, %c3_i32_44 : i32
    %273 = vector.broadcast %271 : i32 to vector<8x64xi32>
    %274 = vector.broadcast %272 : i32 to vector<8x64xi32>
    %275 = arith.select %7, %273, %274 : vector<8x64xi1>, vector<8x64xi32>
    %276 = arith.cmpi slt, %275, %4 : vector<8x64xi32>
    %277 = arith.extui %276 : vector<8x64xi1> to vector<8x64xi32>
    %278 = arith.sitofp %277 : vector<8x64xi32> to vector<8x64xf32>
    %279 = arith.subf %270, %226 : vector<8x64xf32>
    %280 = arith.mulf %278, %279 : vector<8x64xf32>
    %281 = arith.addf %226, %280 : vector<8x64xf32>
    %282 = arith.subf %268, %229 : vector<8x64xf32>
    %283 = arith.mulf %278, %282 : vector<8x64xf32>
    %284 = arith.addf %229, %283 : vector<8x64xf32>
    %285 = arith.mulf %278, %270 : vector<8x64xf32>
    %286 = vector.extract_strided_slice %285 {offsets = [0, 0], sizes = [8, 32], strides = [1, 1]} : vector<8x64xf32> to vector<8x32xf32>
    %287 = vector.extract_strided_slice %285 {offsets = [0, 32], sizes = [8, 32], strides = [1, 1]} : vector<8x64xf32> to vector<8x32xf32>
    %288 = arith.truncf %281 : vector<8x64xf32> to vector<8x64xbf16>
    %cst_45 = arith.constant dense<0.000000e+00> : vector<8x256xf32>
    %289 = tpu.matmul %288, %3, %cst_45 {dimension_numbers = #tpu.dot_dimension_numbers<[1], [0], [0], [1], [0, 0, 1, 1], [], []>} : vector<8x64xbf16>, vector<64x256xbf16>, vector<8x256xf32> -> vector<8x256xf32>
    %c5_46 = arith.constant 5 : index
    %c0_47 = arith.constant 0 : index
    %c0_48 = arith.constant 0 : index
    %290 = vector.load %arg1[%c5_46, %c0_47, %c0_48] : memref<8x8x128xbf16, #tpu.memory_space<vmem>>, vector<1x8x128xbf16>
    %291 = vector.shape_cast %290 : vector<1x8x128xbf16> to vector<8x128xbf16>
    %c2_49 = arith.constant 2 : index
    %c0_50 = arith.constant 0 : index
    %c0_51 = arith.constant 0 : index
    %292 = vector.load %arg2[%c2_49, %c0_50, %c0_51] : memref<8x8x128xbf16, #tpu.memory_space<vmem>>, vector<1x8x128xbf16>
    %293 = vector.shape_cast %292 : vector<1x8x128xbf16> to vector<8x128xbf16>
    %294 = vector.extract_strided_slice %289 {offsets = [0, 0], sizes = [8, 192], strides = [1, 1]} : vector<8x256xf32> to vector<8x192xf32>
    %295 = vector.extract_strided_slice %291 {offsets = [0, 0], sizes = [8, 96], strides = [1, 1]} : vector<8x128xbf16> to vector<8x96xbf16>
    %296 = vector.extract_strided_slice %293 {offsets = [0, 0], sizes = [8, 96], strides = [1, 1]} : vector<8x128xbf16> to vector<8x96xbf16>
    %297 = tpu.concatenate %295, %296 in 1 : vector<8x96xbf16>, vector<8x96xbf16> -> vector<8x192xbf16>
    %298 = arith.extf %297 : vector<8x192xbf16> to vector<8x192xf32>
    %299 = arith.addf %294, %298 : vector<8x192xf32>
    %300 = vector.extract_strided_slice %289 {offsets = [0, 192], sizes = [8, 64], strides = [1, 1]} : vector<8x256xf32> to vector<8x64xf32>
    %301 = vector.extract_strided_slice %291 {offsets = [0, 96], sizes = [8, 32], strides = [1, 1]} : vector<8x128xbf16> to vector<8x32xbf16>
    %302 = vector.extract_strided_slice %293 {offsets = [0, 96], sizes = [8, 32], strides = [1, 1]} : vector<8x128xbf16> to vector<8x32xbf16>
    %303 = tpu.concatenate %301, %302 in 1 : vector<8x32xbf16>, vector<8x32xbf16> -> vector<8x64xbf16>
    %304 = arith.extf %303 : vector<8x64xbf16> to vector<8x64xf32>
    %305 = arith.addf %300, %304 : vector<8x64xf32>
    %306 = arith.negf %299 : vector<8x192xf32>
    %307 = math.exp %306 : vector<8x192xf32>
    %cst_52 = arith.constant 1.000000e+00 : f32
    %308 = vector.broadcast %cst_52 : f32 to vector<8x192xf32>
    %309 = arith.addf %308, %307 : vector<8x192xf32>
    %310 = arith.divf %308, %309 : vector<8x192xf32>
    %311 = math.tanh %305 : vector<8x64xf32>
    %312 = vector.extract_strided_slice %310 {offsets = [0, 0], sizes = [8, 32], strides = [1, 1]} : vector<8x192xf32> to vector<8x32xf32>
    %313 = vector.extract_strided_slice %310 {offsets = [0, 96], sizes = [8, 32], strides = [1, 1]} : vector<8x192xf32> to vector<8x32xf32>
    %314 = tpu.concatenate %312, %313 in 1 : vector<8x32xf32>, vector<8x32xf32> -> vector<8x64xf32>
    %315 = vector.extract_strided_slice %310 {offsets = [0, 32], sizes = [8, 32], strides = [1, 1]} : vector<8x192xf32> to vector<8x32xf32>
    %316 = vector.extract_strided_slice %310 {offsets = [0, 128], sizes = [8, 32], strides = [1, 1]} : vector<8x192xf32> to vector<8x32xf32>
    %317 = tpu.concatenate %315, %316 in 1 : vector<8x32xf32>, vector<8x32xf32> -> vector<8x64xf32>
    %318 = vector.extract_strided_slice %310 {offsets = [0, 64], sizes = [8, 32], strides = [1, 1]} : vector<8x192xf32> to vector<8x32xf32>
    %319 = vector.extract_strided_slice %310 {offsets = [0, 160], sizes = [8, 32], strides = [1, 1]} : vector<8x192xf32> to vector<8x32xf32>
    %320 = tpu.concatenate %318, %319 in 1 : vector<8x32xf32>, vector<8x32xf32> -> vector<8x64xf32>
    %321 = arith.mulf %317, %284 : vector<8x64xf32>
    %322 = arith.mulf %314, %311 : vector<8x64xf32>
    %323 = arith.addf %321, %322 : vector<8x64xf32>
    %324 = math.tanh %323 : vector<8x64xf32>
    %325 = arith.mulf %320, %324 : vector<8x64xf32>
    %c5_i32_53 = arith.constant 5 : i32
    %326 = arith.addi %8, %c5_i32_53 : i32
    %c2_i32_54 = arith.constant 2 : i32
    %327 = arith.addi %10, %c2_i32_54 : i32
    %328 = vector.broadcast %326 : i32 to vector<8x64xi32>
    %329 = vector.broadcast %327 : i32 to vector<8x64xi32>
    %330 = arith.select %7, %328, %329 : vector<8x64xi1>, vector<8x64xi32>
    %331 = arith.cmpi slt, %330, %4 : vector<8x64xi32>
    %332 = arith.extui %331 : vector<8x64xi1> to vector<8x64xi32>
    %333 = arith.sitofp %332 : vector<8x64xi32> to vector<8x64xf32>
    %334 = arith.subf %325, %281 : vector<8x64xf32>
    %335 = arith.mulf %333, %334 : vector<8x64xf32>
    %336 = arith.addf %281, %335 : vector<8x64xf32>
    %337 = arith.subf %323, %284 : vector<8x64xf32>
    %338 = arith.mulf %333, %337 : vector<8x64xf32>
    %339 = arith.addf %284, %338 : vector<8x64xf32>
    %340 = arith.mulf %333, %325 : vector<8x64xf32>
    %341 = vector.extract_strided_slice %340 {offsets = [0, 0], sizes = [8, 32], strides = [1, 1]} : vector<8x64xf32> to vector<8x32xf32>
    %342 = vector.extract_strided_slice %340 {offsets = [0, 32], sizes = [8, 32], strides = [1, 1]} : vector<8x64xf32> to vector<8x32xf32>
    %343 = arith.truncf %336 : vector<8x64xf32> to vector<8x64xbf16>
    %cst_55 = arith.constant dense<0.000000e+00> : vector<8x256xf32>
    %344 = tpu.matmul %343, %3, %cst_55 {dimension_numbers = #tpu.dot_dimension_numbers<[1], [0], [0], [1], [0, 0, 1, 1], [], []>} : vector<8x64xbf16>, vector<64x256xbf16>, vector<8x256xf32> -> vector<8x256xf32>
    %c6_56 = arith.constant 6 : index
    %c0_57 = arith.constant 0 : index
    %c0_58 = arith.constant 0 : index
    %345 = vector.load %arg1[%c6_56, %c0_57, %c0_58] : memref<8x8x128xbf16, #tpu.memory_space<vmem>>, vector<1x8x128xbf16>
    %346 = vector.shape_cast %345 : vector<1x8x128xbf16> to vector<8x128xbf16>
    %c1_59 = arith.constant 1 : index
    %c0_60 = arith.constant 0 : index
    %c0_61 = arith.constant 0 : index
    %347 = vector.load %arg2[%c1_59, %c0_60, %c0_61] : memref<8x8x128xbf16, #tpu.memory_space<vmem>>, vector<1x8x128xbf16>
    %348 = vector.shape_cast %347 : vector<1x8x128xbf16> to vector<8x128xbf16>
    %349 = vector.extract_strided_slice %344 {offsets = [0, 0], sizes = [8, 192], strides = [1, 1]} : vector<8x256xf32> to vector<8x192xf32>
    %350 = vector.extract_strided_slice %346 {offsets = [0, 0], sizes = [8, 96], strides = [1, 1]} : vector<8x128xbf16> to vector<8x96xbf16>
    %351 = vector.extract_strided_slice %348 {offsets = [0, 0], sizes = [8, 96], strides = [1, 1]} : vector<8x128xbf16> to vector<8x96xbf16>
    %352 = tpu.concatenate %350, %351 in 1 : vector<8x96xbf16>, vector<8x96xbf16> -> vector<8x192xbf16>
    %353 = arith.extf %352 : vector<8x192xbf16> to vector<8x192xf32>
    %354 = arith.addf %349, %353 : vector<8x192xf32>
    %355 = vector.extract_strided_slice %344 {offsets = [0, 192], sizes = [8, 64], strides = [1, 1]} : vector<8x256xf32> to vector<8x64xf32>
    %356 = vector.extract_strided_slice %346 {offsets = [0, 96], sizes = [8, 32], strides = [1, 1]} : vector<8x128xbf16> to vector<8x32xbf16>
    %357 = vector.extract_strided_slice %348 {offsets = [0, 96], sizes = [8, 32], strides = [1, 1]} : vector<8x128xbf16> to vector<8x32xbf16>
    %358 = tpu.concatenate %356, %357 in 1 : vector<8x32xbf16>, vector<8x32xbf16> -> vector<8x64xbf16>
    %359 = arith.extf %358 : vector<8x64xbf16> to vector<8x64xf32>
    %360 = arith.addf %355, %359 : vector<8x64xf32>
    %361 = arith.negf %354 : vector<8x192xf32>
    %362 = math.exp %361 : vector<8x192xf32>
    %cst_62 = arith.constant 1.000000e+00 : f32
    %363 = vector.broadcast %cst_62 : f32 to vector<8x192xf32>
    %364 = arith.addf %363, %362 : vector<8x192xf32>
    %365 = arith.divf %363, %364 : vector<8x192xf32>
    %366 = math.tanh %360 : vector<8x64xf32>
    %367 = vector.extract_strided_slice %365 {offsets = [0, 0], sizes = [8, 32], strides = [1, 1]} : vector<8x192xf32> to vector<8x32xf32>
    %368 = vector.extract_strided_slice %365 {offsets = [0, 96], sizes = [8, 32], strides = [1, 1]} : vector<8x192xf32> to vector<8x32xf32>
    %369 = tpu.concatenate %367, %368 in 1 : vector<8x32xf32>, vector<8x32xf32> -> vector<8x64xf32>
    %370 = vector.extract_strided_slice %365 {offsets = [0, 32], sizes = [8, 32], strides = [1, 1]} : vector<8x192xf32> to vector<8x32xf32>
    %371 = vector.extract_strided_slice %365 {offsets = [0, 128], sizes = [8, 32], strides = [1, 1]} : vector<8x192xf32> to vector<8x32xf32>
    %372 = tpu.concatenate %370, %371 in 1 : vector<8x32xf32>, vector<8x32xf32> -> vector<8x64xf32>
    %373 = vector.extract_strided_slice %365 {offsets = [0, 64], sizes = [8, 32], strides = [1, 1]} : vector<8x192xf32> to vector<8x32xf32>
    %374 = vector.extract_strided_slice %365 {offsets = [0, 160], sizes = [8, 32], strides = [1, 1]} : vector<8x192xf32> to vector<8x32xf32>
    %375 = tpu.concatenate %373, %374 in 1 : vector<8x32xf32>, vector<8x32xf32> -> vector<8x64xf32>
    %376 = arith.mulf %372, %339 : vector<8x64xf32>
    %377 = arith.mulf %369, %366 : vector<8x64xf32>
    %378 = arith.addf %376, %377 : vector<8x64xf32>
    %379 = math.tanh %378 : vector<8x64xf32>
    %380 = arith.mulf %375, %379 : vector<8x64xf32>
    %c6_i32_63 = arith.constant 6 : i32
    %381 = arith.addi %8, %c6_i32_63 : i32
    %c1_i32_64 = arith.constant 1 : i32
    %382 = arith.addi %10, %c1_i32_64 : i32
    %383 = vector.broadcast %381 : i32 to vector<8x64xi32>
    %384 = vector.broadcast %382 : i32 to vector<8x64xi32>
    %385 = arith.select %7, %383, %384 : vector<8x64xi1>, vector<8x64xi32>
    %386 = arith.cmpi slt, %385, %4 : vector<8x64xi32>
    %387 = arith.extui %386 : vector<8x64xi1> to vector<8x64xi32>
    %388 = arith.sitofp %387 : vector<8x64xi32> to vector<8x64xf32>
    %389 = arith.subf %380, %336 : vector<8x64xf32>
    %390 = arith.mulf %388, %389 : vector<8x64xf32>
    %391 = arith.addf %336, %390 : vector<8x64xf32>
    %392 = arith.subf %378, %339 : vector<8x64xf32>
    %393 = arith.mulf %388, %392 : vector<8x64xf32>
    %394 = arith.addf %339, %393 : vector<8x64xf32>
    %395 = arith.mulf %388, %380 : vector<8x64xf32>
    %396 = vector.extract_strided_slice %395 {offsets = [0, 0], sizes = [8, 32], strides = [1, 1]} : vector<8x64xf32> to vector<8x32xf32>
    %397 = vector.extract_strided_slice %395 {offsets = [0, 32], sizes = [8, 32], strides = [1, 1]} : vector<8x64xf32> to vector<8x32xf32>
    %398 = arith.truncf %391 : vector<8x64xf32> to vector<8x64xbf16>
    %cst_65 = arith.constant dense<0.000000e+00> : vector<8x256xf32>
    %399 = tpu.matmul %398, %3, %cst_65 {dimension_numbers = #tpu.dot_dimension_numbers<[1], [0], [0], [1], [0, 0, 1, 1], [], []>} : vector<8x64xbf16>, vector<64x256xbf16>, vector<8x256xf32> -> vector<8x256xf32>
    %c7_66 = arith.constant 7 : index
    %c0_67 = arith.constant 0 : index
    %c0_68 = arith.constant 0 : index
    %400 = vector.load %arg1[%c7_66, %c0_67, %c0_68] : memref<8x8x128xbf16, #tpu.memory_space<vmem>>, vector<1x8x128xbf16>
    %401 = vector.shape_cast %400 : vector<1x8x128xbf16> to vector<8x128xbf16>
    %c0_69 = arith.constant 0 : index
    %c0_70 = arith.constant 0 : index
    %c0_71 = arith.constant 0 : index
    %402 = vector.load %arg2[%c0_69, %c0_70, %c0_71] : memref<8x8x128xbf16, #tpu.memory_space<vmem>>, vector<1x8x128xbf16>
    %403 = vector.shape_cast %402 : vector<1x8x128xbf16> to vector<8x128xbf16>
    %404 = vector.extract_strided_slice %399 {offsets = [0, 0], sizes = [8, 192], strides = [1, 1]} : vector<8x256xf32> to vector<8x192xf32>
    %405 = vector.extract_strided_slice %401 {offsets = [0, 0], sizes = [8, 96], strides = [1, 1]} : vector<8x128xbf16> to vector<8x96xbf16>
    %406 = vector.extract_strided_slice %403 {offsets = [0, 0], sizes = [8, 96], strides = [1, 1]} : vector<8x128xbf16> to vector<8x96xbf16>
    %407 = tpu.concatenate %405, %406 in 1 : vector<8x96xbf16>, vector<8x96xbf16> -> vector<8x192xbf16>
    %408 = arith.extf %407 : vector<8x192xbf16> to vector<8x192xf32>
    %409 = arith.addf %404, %408 : vector<8x192xf32>
    %410 = vector.extract_strided_slice %399 {offsets = [0, 192], sizes = [8, 64], strides = [1, 1]} : vector<8x256xf32> to vector<8x64xf32>
    %411 = vector.extract_strided_slice %401 {offsets = [0, 96], sizes = [8, 32], strides = [1, 1]} : vector<8x128xbf16> to vector<8x32xbf16>
    %412 = vector.extract_strided_slice %403 {offsets = [0, 96], sizes = [8, 32], strides = [1, 1]} : vector<8x128xbf16> to vector<8x32xbf16>
    %413 = tpu.concatenate %411, %412 in 1 : vector<8x32xbf16>, vector<8x32xbf16> -> vector<8x64xbf16>
    %414 = arith.extf %413 : vector<8x64xbf16> to vector<8x64xf32>
    %415 = arith.addf %410, %414 : vector<8x64xf32>
    %416 = arith.negf %409 : vector<8x192xf32>
    %417 = math.exp %416 : vector<8x192xf32>
    %cst_72 = arith.constant 1.000000e+00 : f32
    %418 = vector.broadcast %cst_72 : f32 to vector<8x192xf32>
    %419 = arith.addf %418, %417 : vector<8x192xf32>
    %420 = arith.divf %418, %419 : vector<8x192xf32>
    %421 = math.tanh %415 : vector<8x64xf32>
    %422 = vector.extract_strided_slice %420 {offsets = [0, 0], sizes = [8, 32], strides = [1, 1]} : vector<8x192xf32> to vector<8x32xf32>
    %423 = vector.extract_strided_slice %420 {offsets = [0, 96], sizes = [8, 32], strides = [1, 1]} : vector<8x192xf32> to vector<8x32xf32>
    %424 = tpu.concatenate %422, %423 in 1 : vector<8x32xf32>, vector<8x32xf32> -> vector<8x64xf32>
    %425 = vector.extract_strided_slice %420 {offsets = [0, 32], sizes = [8, 32], strides = [1, 1]} : vector<8x192xf32> to vector<8x32xf32>
    %426 = vector.extract_strided_slice %420 {offsets = [0, 128], sizes = [8, 32], strides = [1, 1]} : vector<8x192xf32> to vector<8x32xf32>
    %427 = tpu.concatenate %425, %426 in 1 : vector<8x32xf32>, vector<8x32xf32> -> vector<8x64xf32>
    %428 = vector.extract_strided_slice %420 {offsets = [0, 64], sizes = [8, 32], strides = [1, 1]} : vector<8x192xf32> to vector<8x32xf32>
    %429 = vector.extract_strided_slice %420 {offsets = [0, 160], sizes = [8, 32], strides = [1, 1]} : vector<8x192xf32> to vector<8x32xf32>
    %430 = tpu.concatenate %428, %429 in 1 : vector<8x32xf32>, vector<8x32xf32> -> vector<8x64xf32>
    %431 = arith.mulf %427, %394 : vector<8x64xf32>
    %432 = arith.mulf %424, %421 : vector<8x64xf32>
    %433 = arith.addf %431, %432 : vector<8x64xf32>
    %434 = math.tanh %433 : vector<8x64xf32>
    %435 = arith.mulf %430, %434 : vector<8x64xf32>
    %c7_i32_73 = arith.constant 7 : i32
    %436 = arith.addi %8, %c7_i32_73 : i32
    %c0_i32_74 = arith.constant 0 : i32
    %437 = arith.addi %10, %c0_i32_74 : i32
    %438 = vector.broadcast %436 : i32 to vector<8x64xi32>
    %439 = vector.broadcast %437 : i32 to vector<8x64xi32>
    %440 = arith.select %7, %438, %439 : vector<8x64xi1>, vector<8x64xi32>
    %441 = arith.cmpi slt, %440, %4 : vector<8x64xi32>
    %442 = arith.extui %441 : vector<8x64xi1> to vector<8x64xi32>
    %443 = arith.sitofp %442 : vector<8x64xi32> to vector<8x64xf32>
    %444 = arith.subf %435, %391 : vector<8x64xf32>
    %445 = arith.mulf %443, %444 : vector<8x64xf32>
    %446 = arith.addf %391, %445 : vector<8x64xf32>
    %447 = arith.subf %433, %394 : vector<8x64xf32>
    %448 = arith.mulf %443, %447 : vector<8x64xf32>
    %449 = arith.addf %394, %448 : vector<8x64xf32>
    %450 = arith.mulf %443, %435 : vector<8x64xf32>
    %451 = vector.extract_strided_slice %450 {offsets = [0, 0], sizes = [8, 32], strides = [1, 1]} : vector<8x64xf32> to vector<8x32xf32>
    %452 = vector.extract_strided_slice %450 {offsets = [0, 32], sizes = [8, 32], strides = [1, 1]} : vector<8x64xf32> to vector<8x32xf32>
    %c0_75 = arith.constant 0 : index
    %c0_76 = arith.constant 0 : index
    %453 = vector.load %arg8[%c0_75, %c0_76] : memref<8x64xf32, #tpu.memory_space<vmem>>, vector<8x64xf32>
    tpu.vector_store %arg8[%c0_75, %c0_76], %446 {strides = array<i32>} : memref<8x64xf32, #tpu.memory_space<vmem>>, vector<8x64xf32>,
    %c0_77 = arith.constant 0 : index
    %c0_78 = arith.constant 0 : index
    %454 = vector.load %arg9[%c0_77, %c0_78] : memref<8x64xf32, #tpu.memory_space<vmem>>, vector<8x64xf32>
    tpu.vector_store %arg9[%c0_77, %c0_78], %449 {strides = array<i32>} : memref<8x64xf32, #tpu.memory_space<vmem>>, vector<8x64xf32>,
    %455 = tpu.concatenate %66, %121, %176, %231, %286, %341, %396, %451 in 1 : vector<8x32xf32>, vector<8x32xf32>, vector<8x32xf32>, vector<8x32xf32>, vector<8x32xf32>, vector<8x32xf32>, vector<8x32xf32>, vector<8x32xf32> -> vector<8x256xf32>
    %456 = arith.truncf %455 : vector<8x256xf32> to vector<8x256xbf16>
    %c0_79 = arith.constant 0 : index
    %c0_80 = arith.constant 0 : index
    %c0_81 = arith.constant 0 : index
    %457 = vector.load %arg5[%c0_79, %c0_80, %c0_81] : memref<1x8x256xbf16, #tpu.memory_space<vmem>>, vector<1x8x256xbf16>
    %458 = vector.shape_cast %457 : vector<1x8x256xbf16> to vector<8x256xbf16>
    %459 = vector.shape_cast %456 : vector<8x256xbf16> to vector<1x8x256xbf16>
    tpu.vector_store %arg5[%c0_79, %c0_80, %c0_81], %459 {strides = array<i32>} : memref<1x8x256xbf16, #tpu.memory_space<vmem>>, vector<1x8x256xbf16>,
    %460 = tpu.concatenate %452, %397, %342, %287, %232, %177, %122, %67 in 1 : vector<8x32xf32>, vector<8x32xf32>, vector<8x32xf32>, vector<8x32xf32>, vector<8x32xf32>, vector<8x32xf32>, vector<8x32xf32>, vector<8x32xf32> -> vector<8x256xf32>
    %461 = arith.truncf %460 : vector<8x256xf32> to vector<8x256xbf16>
    %c0_82 = arith.constant 0 : index
    %c0_83 = arith.constant 0 : index
    %c0_84 = arith.constant 0 : index
    %462 = vector.load %arg6[%c0_82, %c0_83, %c0_84] : memref<1x8x256xbf16, #tpu.memory_space<vmem>>, vector<1x8x256xbf16>
    %463 = vector.shape_cast %462 : vector<1x8x256xbf16> to vector<8x256xbf16>
    %464 = vector.shape_cast %461 : vector<8x256xbf16> to vector<1x8x256xbf16>
    tpu.vector_store %arg6[%c0_82, %c0_83, %c0_84], %464 {strides = array<i32>} : memref<1x8x256xbf16, #tpu.memory_space<vmem>>, vector<1x8x256xbf16>,
    %c0_i32_85 = arith.constant 0 : i32
    %465 = arith.cmpi eq, %arg0, %c0_i32_85 : i32
    %466 = arith.extui %465 : i1 to i32
    %c0_i32_86 = arith.constant 0 : i32
    %467 = arith.cmpi ne, %466, %c0_i32_86 : i32
    scf.if %467 {
      %c0_87 = arith.constant 0 : index
      %c0_88 = arith.constant 0 : index
      %468 = vector.load %arg7[%c0_87, %c0_88] : memref<8x64xf32, #tpu.memory_space<vmem>>, vector<8x64xf32>
      tpu.vector_store %arg7[%c0_87, %c0_88], %446 {strides = array<i32>} : memref<8x64xf32, #tpu.memory_space<vmem>>, vector<8x64xf32>,
    } else {
    }
    return
  }
  func.func @transform_0(%arg0: i32) -> (i32, i32, i32) {
    %c0_i32 = arith.constant 0 : i32
    %c0_i32_0 = arith.constant 0 : i32
    %c0_i32_1 = arith.constant 0 : i32
    return %arg0, %c0_i32, %c0_i32_0 : i32, i32, i32
  }
  func.func @transform_1(%arg0: i32) -> (i32, i32, i32) {
    %c0_i32 = arith.constant 0 : i32
    %0 = arith.subi %c0_i32, %arg0 : i32
    %c0_i32_0 = arith.constant 0 : i32
    %c0_i32_1 = arith.constant 0 : i32
    %c0_i32_2 = arith.constant 0 : i32
    return %0, %c0_i32_0, %c0_i32_1 : i32, i32, i32
  }
  func.func @transform_2(%arg0: i32) -> (i32, i32) {
    %c0_i32 = arith.constant 0 : i32
    %c0_i32_0 = arith.constant 0 : i32
    %c0_i32_1 = arith.constant 0 : i32
    return %c0_i32, %c0_i32_0 : i32, i32
  }
  func.func @transform_3(%arg0: i32) -> (i32, i32) {
    %c0_i32 = arith.constant 0 : i32
    %c0_i32_0 = arith.constant 0 : i32
    %c0_i32_1 = arith.constant 0 : i32
    return %c0_i32, %c0_i32_0 : i32, i32
  }
  func.func @transform_4(%arg0: i32) -> (i32, i32, i32) {
    %c0_i32 = arith.constant 0 : i32
    %c0_i32_0 = arith.constant 0 : i32
    %c0_i32_1 = arith.constant 0 : i32
    return %arg0, %c0_i32, %c0_i32_0 : i32, i32, i32
  }
  func.func @transform_5(%arg0: i32) -> (i32, i32, i32) {
    %c0_i32 = arith.constant 0 : i32
    %0 = arith.subi %c0_i32, %arg0 : i32
    %c0_i32_0 = arith.constant 0 : i32
    %c0_i32_1 = arith.constant 0 : i32
    %c0_i32_2 = arith.constant 0 : i32
    return %0, %c0_i32_0, %c0_i32_1 : i32, i32, i32
  }
  func.func @transform_6(%arg0: i32) -> (i32, i32) {
    %c0_i32 = arith.constant 0 : i32
    %c0_i32_0 = arith.constant 0 : i32
    %c0_i32_1 = arith.constant 0 : i32
    return %c0_i32, %c0_i32_0 : i32, i32
  }
}

</mosaic_0001>

<llo_original>
// kernel: lstm_model_forward.2
$region0: #{lstm_model_forward.2}
  #allocation0 [shape = 'u32[]', space=smem, size = 0x4, offset = 0x4, fixed_abs, tag = 'smem constant byte address 0x4 - core index']
  #allocation1 [shape = 'u32[72,128]{1,0:T(1,128)}', space=vmem, size = 0x9000, scoped, tag = 'internal scratch']
  #allocation2 [shape = 'f32[8,64]{1,0:T(8,128)}', space=vmem, size = 0x1000, scoped, tag = 'scratch operand']
  #allocation3 [shape = 'f32[8,64]{1,0:T(8,128)}', space=vmem, size = 0x1000, scoped, tag = 'scratch operand']
  %s0 = inlined_call_operand.vmem [shape: bf16[8,8,128], index: 0, kind: input, shape index: {}]
  %s1 = inlined_call_operand.vmem [shape: bf16[8,8,128], index: 1, kind: input, shape index: {}]
  %s2 = inlined_call_operand.vmem [shape: bf16[64,256], index: 2, kind: input, shape index: {}]
  %s3 = inlined_call_operand.vmem [shape: s32[8,64], index: 3, kind: input, shape index: {}]
  %s4 = inlined_call_operand.vmem [shape: bf16[1,8,256], index: 4, kind: output, shape index: {0}]
  %s5 = inlined_call_operand.vmem [shape: bf16[1,8,256], index: 5, kind: output, shape index: {1}]
  %s6 = inlined_call_operand.hbm [shape: f32[8,64], index: 6, kind: output, shape index: {2}]
  %7 = xla_tuple %s4, %s5, %s6
  %s8 = sld [smem:[#allocation0]]
  $region50: #{lstm_model_forward.2} parent=0
    _
  %s10 = ssub.s32 1, %s8
  %s11 = scalar_select 0, %s10, %s8
  $region1: #{lstm_model_forward.2} parent=0
    #allocation4 [shape = 'u8[4096]{0}', space=vmem, size = 0x1000, scoped, tag = 'output window, operand 2, single buffered']
    #allocation5 [shape = 's32[1]{0}', space=sflag, size = 0x4, scoped, tag = 'scoped memory for lstm_model_forward.2']
    %12 = vsyncpa [#allocation5], 0
    // Predicated region
    $region2: #{lstm_model_forward.2} parent=1 // pred_check
      _
    $region3: #{lstm_model_forward.2} parent=1 // pred_check_branch
      %14 = sbr.rel (0) target = $region5
    $region4: #{lstm_model_forward.2} parent=1 // pred_region
      _
    $region5: #{lstm_model_forward.2} parent=1 // pred_fallthru
      _
    // Predicated region
    $region6: #{lstm_model_forward.2} parent=1 // pred_check
      _
    $region7: #{lstm_model_forward.2} parent=1 // pred_check_branch
      %16 = sbr.rel (0) target = $region9
    $region8: #{lstm_model_forward.2} parent=1 // pred_region
      %s17 = ssub.s32 0, 0
      %s18 = smul.u32 8, %s17
      %p19 = scmp.lt.s32.totalorder %s18, 7
      %s20 = scalar_select %p19, %s18, 7
      %s21 = smul.addr %s20, 4
      %s22 = scalar_lea.vmem %s1, %s21
      %s23 = ssub.s32 0, 0
      %s24 = smul.u32 8, %s23
    $region9: #{lstm_model_forward.2} parent=1 // pred_fallthru
      _
    // Predicated region
    $region10: #{lstm_model_forward.2} parent=1 // pred_check
      _
    $region11: #{lstm_model_forward.2} parent=1 // pred_check_branch
      %26 = sbr.rel (0) target = $region13
    $region12: #{lstm_model_forward.2} parent=1 // pred_region
      _
    $region13: #{lstm_model_forward.2} parent=1 // pred_fallthru
      _
    // Predicated region
    $region14: #{lstm_model_forward.2} parent=1 // pred_check
      _
    $region15: #{lstm_model_forward.2} parent=1 // pred_check_branch
      %28 = sbr.rel (0) target = $region17
    $region16: #{lstm_model_forward.2} parent=1 // pred_region
      _
    $region17: #{lstm_model_forward.2} parent=1 // pred_fallthru
      _
    %s29 = ssub.s32 0, 0
    %s30 = smul.u32 8, %s29
    %p31 = scmp.lt.s32.totalorder %s30, 7
    %s32 = scalar_select %p31, %s30, 7
    %s33 = smul.addr %s32, 4
    %s34 = scalar_lea.vmem %s1, %s33
    %s35 = ssub.s32 0, 0
    %p36 = scmp.lt.s32.totalorder %s35, 0
    %s37 = scalar_select %p36, %s35, 0
    %s38 = smul.addr %s37, 2
    %s39 = smul.addr %s38, 4
    %s40 = scalar_lea.vmem %s5, %s39
    %s41 = ssub.s32 0, 0
    %s42 = smul.u32 8, %s41
    %p43 = scmp.lt.s32.totalorder %s42, 7
    %s44 = scalar_select %p43, %s42, 7
    %s45 = smul.addr %s44, 4
    %s46 = scalar_lea.vmem %s1, %s45
    %s47 = ssub.s32 0, 0
    %s48 = smul.u32 8, %s47
    %s49 = ssub.s32 0, 0
    %p50 = scmp.lt.s32.totalorder %s49, 0
    %s51 = scalar_select %p50, %s49, 0
    %s52 = smul.addr %s51, 2
    %s53 = smul.addr %s52, 4
    %s54 = scalar_lea.vmem %s5, %s53
    %s55 = ssub.s32 0, 0
    %p57 = scmp.eq.s32.totalorder 0, 0
    // Predicated region
    $region18: #{lstm_model_forward.2} parent=1 // pred_check
      %p58 = pneg %p57
    $region19: #{lstm_model_forward.2} parent=1 // pred_check_branch
      %60 = sbr.rel (%p58) target = $region21
    $region20: #{lstm_model_forward.2} parent=1 // pred_region
      %vm61 = vcmask 523264
      %62 = vst.msk [vmem:[#allocation2] sm:$0xff] %vm61, 0.0
      %63 = vst.msk [vmem:[#allocation3] sm:$0xff] %vm61, 0.0
    $region21: #{lstm_model_forward.2} parent=1 // pred_fallthru
      _
    %v64 = vld [vmem:[%s2] sm:$0xff]
    %v65 = vld [vmem:[%s2 + $0x8] sm:$0xff]
    %v66 = vld [vmem:[%s2 + $0x10] sm:$0xff]
    %v67 = vld [vmem:[%s2 + $0x18] sm:$0xff]
    %v68 = vld [vmem:[%s2 + $0x20] sm:$0xff]
    %v69 = vld [vmem:[%s2 + $0x28] sm:$0xff]
    %v70 = vld [vmem:[%s2 + $0x30] sm:$0xff]
    %v71 = vld [vmem:[%s2 + $0x38] sm:$0xff]
    %v72 = vld [vmem:[%s3] sm:$0xff]
    %v73 = vlaneseq
    %v74 = vand.u32 %v73, 127
    %vm75 = vcmp.lt.s32.totalorder %v74, 32
    %s76 = smul.u32 0, 8
    %s77 = ssub.s32 0, 0
    %s78 = smul.u32 %s77, 8
    %v79 = vld [vmem:[#allocation2] sm:$0xff]
    %v80 = vld [vmem:[#allocation3] sm:$0xff]
    %v81 = vpack.c.bf16 %v79, %v79
    %v90 = vunpack.c.l.b16 %v64
    %v91 = vunpack.c.h.b16 %v64
    %v92 = vunpack.c.l.b16 %v65
    %v93 = vunpack.c.h.b16 %v65
    %v94 = vunpack.c.l.b16 %v66
    %v95 = vunpack.c.h.b16 %v66
    %v96 = vunpack.c.l.b16 %v67
    %v97 = vunpack.c.h.b16 %v67
    %v98 = vunpack.c.l.b16 %v68
    %v99 = vunpack.c.h.b16 %v68
    %v100 = vunpack.c.l.b16 %v69
    %v101 = vunpack.c.h.b16 %v69
    %v102 = vunpack.c.l.b16 %v70
    %v103 = vunpack.c.h.b16 %v70
    %v104 = vunpack.c.l.b16 %v71
    %v105 = vunpack.c.h.b16 %v71
    %v106 = vpack.c.b16 %v92, %v90
    %v107 = vpack.c.b16 %v93, %v91
    %v108 = vpack.c.b16 %v96, %v94
    %v109 = vpack.c.b16 %v97, %v95
    %v110 = vpack.c.b16 %v100, %v98
    %v111 = vpack.c.b16 %v101, %v99
    %v112 = vpack.c.b16 %v104, %v102
    %v113 = vpack.c.b16 %v105, %v103
    %vm122 = vcmask 523264
    %v124 = vsel %vm122, %v81, 0
    %126 = vmatpush.bf16.msra.mxu0 0
    %127 = vmatpush.bf16.msra.mxu0 0
    %128 = vmatpush.bf16.msra.mxu0 0
    %129 = vmatpush.bf16.msra.mxu0 0
    %130 = vmatpush.bf16.msra.mxu0 %v112
    %131 = vmatpush.bf16.msra.mxu0 %v110
    %132 = vmatpush.bf16.msra.mxu0 %v108
    %133 = vmatpush.bf16.msra.mxu0 %v106
    %134 = vmatmul.bf16.gmra.mxu0 %v124
    %v135 = vpop.f32.mrf.mxu0
    %v136 = vadd.f32 0.0, %v135
    %v137 = vpop.f32.mrf.mxu0
    %138 = vdwg.mxu0
    %139 = vmatpush.bf16.msra.mxu0 0
    %140 = vmatpush.bf16.msra.mxu0 0
    %141 = vmatpush.bf16.msra.mxu0 0
    %142 = vmatpush.bf16.msra.mxu0 0
    %143 = vmatpush.bf16.msra.mxu0 %v113
    %144 = vmatpush.bf16.msra.mxu0 %v111
    %145 = vmatpush.bf16.msra.mxu0 %v109
    %146 = vmatpush.bf16.msra.mxu0 %v107
    %147 = vmatmul.bf16.gmra.mxu0 %v124
    %v148 = vpop.f32.mrf.mxu0
    %v149 = vadd.f32 0.0, %v148
    %v150 = vpop.f32.mrf.mxu0
    %151 = vdwg.mxu0
    %v152 = vld [vmem:[%s0] sm:$0xf]
    %s153 = scalar_lea.vmem %s46, 28
    %v154 = vld [vmem:[%s153] sm:$0xf]
    %v156 = vunpack.c.l.b16 %v154
    %v157 = vpack.c.b16 %v156, %v156
    %158 = vrot.lane.b32.xlu0 %v157, 96
    %v159 = vpop.permute.xlu0 %158
    %vm161 = vcmask 785408
    %v164 = vsel %vm161, %v152, %v159
    %v166 = vunpack.c.l.bf16 %v164
    %v167 = vunpack.c.l.bf16 %v159
    %v168 = vadd.f32 %v136, %v166
    %v169 = vadd.f32 %v149, %v167
    %v171 = vunpack.c.l.b16 %v152
    %v172 = vpack.c.b16 %v171, %v171
    %173 = vrot.lane.b32.xlu0 %v172, 32
    %v174 = vpop.permute.xlu0 %173
    %175 = vrot.lane.b32.xlu0 %v157, 64
    %v176 = vpop.permute.xlu0 %175
    %vm177 = vcmask 261120
    %v180 = vsel %vm177, %v174, %v176
    %v182 = vunpack.c.l.bf16 %v180
    %184 = vrot.lane.b32.xlu0 %v182, 64
    %v185 = vpop.permute.xlu0 %184
    %v187 = vadd.f32 %v149, %v185
    %v188 = vxor.u32 %v168, 2147483648
    %v189 = vxor.u32 %v169, 2147483648
    %v190 = vmul.f32 %v188, 1.442695
    %v191 = vpow.pop %v190
    %v192 = vmul.f32 %v189, 1.442695
    %v193 = vpow.pop %v192
    %v194 = vadd.f32 %v191, 1.0
    %v195 = vadd.f32 %v193, 1.0
    %v196 = vrcp.pop %v194
    %v197 = vmul.f32 %v194, %v196
    %v198 = vsub.f32 1.0, %v197
    %v199 = vmul.f32 %v196, %v198
    %v200 = vadd.f32 %v196, %v199
    %vm201 = vweird.f32 %v194
    %vm202 = vweird.f32 %v196
    %vm203 = vmor %vm201, %vm202
    %v204 = vsel %vm203, %v196, %v200
    %v205 = vand.u32 2147483647, %v194
    %vm206 = vcmp.eq.f32.partialorder %v205, 8.507059e+37
    %v207 = vand.u32 %v194, 2147483648
    %v208 = vor.u32 1.1754944e-38, %v207
    %v209 = vsel %vm206, %v208, %v204
    %v210 = vmul.f32 1.0, %v209
    %v211 = vrcp.pop %v195
    %v212 = vmul.f32 %v195, %v211
    %v213 = vsub.f32 1.0, %v212
    %v214 = vmul.f32 %v211, %v213
    %v215 = vadd.f32 %v211, %v214
    %vm216 = vweird.f32 %v195
    %vm217 = vweird.f32 %v211
    %vm218 = vmor %vm216, %vm217
    %v219 = vsel %vm218, %v211, %v215
    %v220 = vand.u32 2147483647, %v195
    %vm221 = vcmp.eq.f32.partialorder %v220, 8.507059e+37
    %v222 = vand.u32 %v195, 2147483648
    %v223 = vor.u32 1.1754944e-38, %v222
    %v224 = vsel %vm221, %v223, %v219
    %v225 = vmul.f32 1.0, %v224
    %v226 = vtanh.pop %v187
    %228 = vrot.lane.b32.xlu0 %v210, 64
    %v229 = vpop.permute.xlu0 %228
    %v231 = vsel %vm177, %v210, %v229
    %232 = vrot.lane.b32.xlu0 %v210, 96
    %v233 = vpop.permute.xlu0 %232
    %236 = vrot.lane.b32.xlu0 %v225, 32
    %v237 = vpop.permute.xlu0 %236
    %v239 = vsel %vm177, %v233, %v237
    %v240 = vsel %vm177, %v229, %v225
    %v241 = vmul.f32 %v239, %v80
    %243 = vrot.lane.b32.xlu0 %v226, 64
    %v244 = vpop.permute.xlu0 %243
    %v246 = vmul.f32 %v231, %v244
    %v247 = vadd.f32 %v241, %v246
    %v248 = vtanh.pop %v247
    %v249 = vmul.f32 %v240, %v248
    %s250 = sadd.s32 %s78, 7
    %v251 = vstv %s76
    %v252 = vstv %s250
    %v253 = vsel %vm75, %v251, %v252
    %vm254 = vcmp.lt.s32.totalorder %v253, %v72
    %v255 = vsel %vm254, 1, 0
    %v256 = vcvt.s32.f32 %v255
    %v257 = vsub.f32 %v249, %v79
    %v258 = vmul.f32 %v256, %v257
    %v259 = vadd.f32 %v79, %v258
    %v260 = vsub.f32 %v247, %v80
    %v261 = vmul.f32 %v256, %v260
    %v262 = vadd.f32 %v80, %v261
    %v263 = vmul.f32 %v256, %v249
    %v264 = vpack.c.bf16 %v259, %v259
    %v266 = vsel %vm122, %v264, 0
    %268 = vmatpush.bf16.msra.mxu0 0
    %269 = vmatpush.bf16.msra.mxu0 0
    %270 = vmatpush.bf16.msra.mxu0 0
    %271 = vmatpush.bf16.msra.mxu0 0
    %272 = vmatpush.bf16.msra.mxu0 %v112
    %273 = vmatpush.bf16.msra.mxu0 %v110
    %274 = vmatpush.bf16.msra.mxu0 %v108
    %275 = vmatpush.bf16.msra.mxu0 %v106
    %276 = vmatmul.bf16.gmra.mxu0 %v266
    %v277 = vpop.f32.mrf.mxu0
    %v278 = vadd.f32 0.0, %v277
    %v279 = vpop.f32.mrf.mxu0
    %280 = vdwg.mxu0
    %281 = vmatpush.bf16.msra.mxu0 0
    %282 = vmatpush.bf16.msra.mxu0 0
    %283 = vmatpush.bf16.msra.mxu0 0
    %284 = vmatpush.bf16.msra.mxu0 0
    %285 = vmatpush.bf16.msra.mxu0 %v113
    %286 = vmatpush.bf16.msra.mxu0 %v111
    %287 = vmatpush.bf16.msra.mxu0 %v109
    %288 = vmatpush.bf16.msra.mxu0 %v107
    %289 = vmatmul.bf16.gmra.mxu0 %v266
    %v290 = vpop.f32.mrf.mxu0
    %v291 = vadd.f32 0.0, %v290
    %v292 = vpop.f32.mrf.mxu0
    %293 = vdwg.mxu0
    %s294 = scalar_lea.vmem %s0, 4
    %v295 = vld [vmem:[%s294] sm:$0xf]
    %s296 = scalar_lea.vmem %s46, 24
    %v297 = vld [vmem:[%s296] sm:$0xf]
    %v299 = vunpack.c.l.b16 %v297
    %v300 = vpack.c.b16 %v299, %v299
    %301 = vrot.lane.b32.xlu0 %v300, 96
    %v302 = vpop.permute.xlu0 %301
    %v306 = vsel %vm161, %v295, %v302
    %v308 = vunpack.c.l.bf16 %v306
    %v309 = vunpack.c.l.bf16 %v302
    %v310 = vadd.f32 %v278, %v308
    %v311 = vadd.f32 %v291, %v309
    %v313 = vunpack.c.l.b16 %v295
    %v314 = vpack.c.b16 %v313, %v313
    %315 = vrot.lane.b32.xlu0 %v314, 32
    %v316 = vpop.permute.xlu0 %315
    %317 = vrot.lane.b32.xlu0 %v300, 64
    %v318 = vpop.permute.xlu0 %317
    %v321 = vsel %vm177, %v316, %v318
    %v323 = vunpack.c.l.bf16 %v321
    %325 = vrot.lane.b32.xlu0 %v323, 64
    %v326 = vpop.permute.xlu0 %325
    %v328 = vadd.f32 %v291, %v326
    %v329 = vxor.u32 %v310, 2147483648
    %v330 = vxor.u32 %v311, 2147483648
    %v331 = vmul.f32 %v329, 1.442695
    %v332 = vpow.pop %v331
    %v333 = vmul.f32 %v330, 1.442695
    %v334 = vpow.pop %v333
    %v335 = vadd.f32 %v332, 1.0
    %v336 = vadd.f32 %v334, 1.0
    %v337 = vrcp.pop %v335
    %v338 = vmul.f32 %v335, %v337
    %v339 = vsub.f32 1.0, %v338
    %v340 = vmul.f32 %v337, %v339
    %v341 = vadd.f32 %v337, %v340
    %vm342 = vweird.f32 %v335
    %vm343 = vweird.f32 %v337
    %vm344 = vmor %vm342, %vm343
    %v345 = vsel %vm344, %v337, %v341
    %v346 = vand.u32 2147483647, %v335
    %vm347 = vcmp.eq.f32.partialorder %v346, 8.507059e+37
    %v348 = vand.u32 %v335, 2147483648
    %v349 = vor.u32 1.1754944e-38, %v348
    %v350 = vsel %vm347, %v349, %v345
    %v351 = vmul.f32 1.0, %v350
    %v352 = vrcp.pop %v336
    %v353 = vmul.f32 %v336, %v352
    %v354 = vsub.f32 1.0, %v353
    %v355 = vmul.f32 %v352, %v354
    %v356 = vadd.f32 %v352, %v355
    %vm357 = vweird.f32 %v336
    %vm358 = vweird.f32 %v352
    %vm359 = vmor %vm357, %vm358
    %v360 = vsel %vm359, %v352, %v356
    %v361 = vand.u32 2147483647, %v336
    %vm362 = vcmp.eq.f32.partialorder %v361, 8.507059e+37
    %v363 = vand.u32 %v336, 2147483648
    %v364 = vor.u32 1.1754944e-38, %v363
    %v365 = vsel %vm362, %v364, %v360
    %v366 = vmul.f32 1.0, %v365
    %v367 = vtanh.pop %v328
    %369 = vrot.lane.b32.xlu0 %v351, 64
    %v370 = vpop.permute.xlu0 %369
    %v372 = vsel %vm177, %v351, %v370
    %373 = vrot.lane.b32.xlu0 %v351, 96
    %v374 = vpop.permute.xlu0 %373
    %377 = vrot.lane.b32.xlu0 %v366, 32
    %v378 = vpop.permute.xlu0 %377
    %v380 = vsel %vm177, %v374, %v378
    %v381 = vsel %vm177, %v370, %v366
    %v382 = vmul.f32 %v380, %v262
    %384 = vrot.lane.b32.xlu0 %v367, 64
    %v385 = vpop.permute.xlu0 %384
    %v387 = vmul.f32 %v372, %v385
    %v388 = vadd.f32 %v382, %v387
    %v389 = vtanh.pop %v388
    %v390 = vmul.f32 %v381, %v389
    %s391 = sadd.s32 %s76, 1
    %s392 = sadd.s32 %s78, 6
    %v393 = vstv %s391
    %v394 = vstv %s392
    %v395 = vsel %vm75, %v393, %v394
    %vm396 = vcmp.lt.s32.totalorder %v395, %v72
    %v397 = vsel %vm396, 1, 0
    %v398 = vcvt.s32.f32 %v397
    %v399 = vsub.f32 %v390, %v259
    %v400 = vmul.f32 %v398, %v399
    %v401 = vadd.f32 %v259, %v400
    %v402 = vsub.f32 %v388, %v262
    %v403 = vmul.f32 %v398, %v402
    %v404 = vadd.f32 %v262, %v403
    %v405 = vmul.f32 %v398, %v390
    %v406 = vpack.c.bf16 %v401, %v401
    %v408 = vsel %vm122, %v406, 0
    %410 = vmatpush.bf16.msra.mxu0 0
    %411 = vmatpush.bf16.msra.mxu0 0
    %412 = vmatpush.bf16.msra.mxu0 0
    %413 = vmatpush.bf16.msra.mxu0 0
    %414 = vmatpush.bf16.msra.mxu0 %v112
    %415 = vmatpush.bf16.msra.mxu0 %v110
    %416 = vmatpush.bf16.msra.mxu0 %v108
    %417 = vmatpush.bf16.msra.mxu0 %v106
    %418 = vmatmul.bf16.gmra.mxu0 %v408
    %v419 = vpop.f32.mrf.mxu0
    %v420 = vadd.f32 0.0, %v419
    %v421 = vpop.f32.mrf.mxu0
    %422 = vdwg.mxu0
    %423 = vmatpush.bf16.msra.mxu0 0
    %424 = vmatpush.bf16.msra.mxu0 0
    %425 = vmatpush.bf16.msra.mxu0 0
    %426 = vmatpush.bf16.msra.mxu0 0
    %427 = vmatpush.bf16.msra.mxu0 %v113
    %428 = vmatpush.bf16.msra.mxu0 %v111
    %429 = vmatpush.bf16.msra.mxu0 %v109
    %430 = vmatpush.bf16.msra.mxu0 %v107
    %431 = vmatmul.bf16.gmra.mxu0 %v408
    %v432 = vpop.f32.mrf.mxu0
    %v433 = vadd.f32 0.0, %v432
    %v434 = vpop.f32.mrf.mxu0
    %435 = vdwg.mxu0
    %s436 = scalar_lea.vmem %s0, 8
    %v437 = vld [vmem:[%s436] sm:$0xf]
    %s438 = scalar_lea.vmem %s46, 20
    %v439 = vld [vmem:[%s438] sm:$0xf]
    %v441 = vunpack.c.l.b16 %v439
    %v442 = vpack.c.b16 %v441, %v441
    %443 = vrot.lane.b32.xlu0 %v442, 96
    %v444 = vpop.permute.xlu0 %443
    %v448 = vsel %vm161, %v437, %v444
    %v450 = vunpack.c.l.bf16 %v448
    %v451 = vunpack.c.l.bf16 %v444
    %v452 = vadd.f32 %v420, %v450
    %v453 = vadd.f32 %v433, %v451
    %v455 = vunpack.c.l.b16 %v437
    %v456 = vpack.c.b16 %v455, %v455
    %457 = vrot.lane.b32.xlu0 %v456, 32
    %v458 = vpop.permute.xlu0 %457
    %459 = vrot.lane.b32.xlu0 %v442, 64
    %v460 = vpop.permute.xlu0 %459
    %v463 = vsel %vm177, %v458, %v460
    %v465 = vunpack.c.l.bf16 %v463
    %467 = vrot.lane.b32.xlu0 %v465, 64
    %v468 = vpop.permute.xlu0 %467
    %v470 = vadd.f32 %v433, %v468
    %v471 = vxor.u32 %v452, 2147483648
    %v472 = vxor.u32 %v453, 2147483648
    %v473 = vmul.f32 %v471, 1.442695
    %v474 = vpow.pop %v473
    %v475 = vmul.f32 %v472, 1.442695
    %v476 = vpow.pop %v475
    %v477 = vadd.f32 %v474, 1.0
    %v478 = vadd.f32 %v476, 1.0
    %v479 = vrcp.pop %v477
    %v480 = vmul.f32 %v477, %v479
    %v481 = vsub.f32 1.0, %v480
    %v482 = vmul.f32 %v479, %v481
    %v483 = vadd.f32 %v479, %v482
    %vm484 = vweird.f32 %v477
    %vm485 = vweird.f32 %v479
    %vm486 = vmor %vm484, %vm485
    %v487 = vsel %vm486, %v479, %v483
    %v488 = vand.u32 2147483647, %v477
    %vm489 = vcmp.eq.f32.partialorder %v488, 8.507059e+37
    %v490 = vand.u32 %v477, 2147483648
    %v491 = vor.u32 1.1754944e-38, %v490
    %v492 = vsel %vm489, %v491, %v487
    %v493 = vmul.f32 1.0, %v492
    %v494 = vrcp.pop %v478
    %v495 = vmul.f32 %v478, %v494
    %v496 = vsub.f32 1.0, %v495
    %v497 = vmul.f32 %v494, %v496
    %v498 = vadd.f32 %v494, %v497
    %vm499 = vweird.f32 %v478
    %vm500 = vweird.f32 %v494
    %vm501 = vmor %vm499, %vm500
    %v502 = vsel %vm501, %v494, %v498
    %v503 = vand.u32 2147483647, %v478
    %vm504 = vcmp.eq.f32.partialorder %v503, 8.507059e+37
    %v505 = vand.u32 %v478, 2147483648
    %v506 = vor.u32 1.1754944e-38, %v505
    %v507 = vsel %vm504, %v506, %v502
    %v508 = vmul.f32 1.0, %v507
    %v509 = vtanh.pop %v470
    %511 = vrot.lane.b32.xlu0 %v493, 64
    %v512 = vpop.permute.xlu0 %511
    %v514 = vsel %vm177, %v493, %v512
    %515 = vrot.lane.b32.xlu0 %v493, 96
    %v516 = vpop.permute.xlu0 %515
    %519 = vrot.lane.b32.xlu0 %v508, 32
    %v520 = vpop.permute.xlu0 %519
    %v522 = vsel %vm177, %v516, %v520
    %v523 = vsel %vm177, %v512, %v508
    %v524 = vmul.f32 %v522, %v404
    %526 = vrot.lane.b32.xlu0 %v509, 64
    %v527 = vpop.permute.xlu0 %526
    %v529 = vmul.f32 %v514, %v527
    %v530 = vadd.f32 %v524, %v529
    %v531 = vtanh.pop %v530
    %v532 = vmul.f32 %v523, %v531
    %s533 = sadd.s32 %s76, 2
    %s534 = sadd.s32 %s78, 5
    %v535 = vstv %s533
    %v536 = vstv %s534
    %v537 = vsel %vm75, %v535, %v536
    %vm538 = vcmp.lt.s32.totalorder %v537, %v72
    %v539 = vsel %vm538, 1, 0
    %v540 = vcvt.s32.f32 %v539
    %v541 = vsub.f32 %v532, %v401
    %v542 = vmul.f32 %v540, %v541
    %v543 = vadd.f32 %v401, %v542
    %v544 = vsub.f32 %v530, %v404
    %v545 = vmul.f32 %v540, %v544
    %v546 = vadd.f32 %v404, %v545
    %v547 = vmul.f32 %v540, %v532
    %v548 = vpack.c.bf16 %v543, %v543
    %v550 = vsel %vm122, %v548, 0
    %552 = vmatpush.bf16.msra.mxu0 0
    %553 = vmatpush.bf16.msra.mxu0 0
    %554 = vmatpush.bf16.msra.mxu0 0
    %555 = vmatpush.bf16.msra.mxu0 0
    %556 = vmatpush.bf16.msra.mxu0 %v112
    %557 = vmatpush.bf16.msra.mxu0 %v110
    %558 = vmatpush.bf16.msra.mxu0 %v108
    %559 = vmatpush.bf16.msra.mxu0 %v106
    %560 = vmatmul.bf16.gmra.mxu0 %v550
    %v561 = vpop.f32.mrf.mxu0
    %v562 = vadd.f32 0.0, %v561
    %v563 = vpop.f32.mrf.mxu0
    %564 = vdwg.mxu0
    %565 = vmatpush.bf16.msra.mxu0 0
    %566 = vmatpush.bf16.msra.mxu0 0
    %567 = vmatpush.bf16.msra.mxu0 0
    %568 = vmatpush.bf16.msra.mxu0 0
    %569 = vmatpush.bf16.msra.mxu0 %v113
    %570 = vmatpush.bf16.msra.mxu0 %v111
    %571 = vmatpush.bf16.msra.mxu0 %v109
    %572 = vmatpush.bf16.msra.mxu0 %v107
    %573 = vmatmul.bf16.gmra.mxu0 %v550
    %v574 = vpop.f32.mrf.mxu0
    %v575 = vadd.f32 0.0, %v574
    %v576 = vpop.f32.mrf.mxu0
    %577 = vdwg.mxu0
    %s578 = scalar_lea.vmem %s0, 12
    %v579 = vld [vmem:[%s578] sm:$0xf]
    %s580 = scalar_lea.vmem %s46, 16
    %v581 = vld [vmem:[%s580] sm:$0xf]
    %v583 = vunpack.c.l.b16 %v581
    %v584 = vpack.c.b16 %v583, %v583
    %585 = vrot.lane.b32.xlu0 %v584, 96
    %v586 = vpop.permute.xlu0 %585
    %v590 = vsel %vm161, %v579, %v586
    %v592 = vunpack.c.l.bf16 %v590
    %v593 = vunpack.c.l.bf16 %v586
    %v594 = vadd.f32 %v562, %v592
    %v595 = vadd.f32 %v575, %v593
    %v597 = vunpack.c.l.b16 %v579
    %v598 = vpack.c.b16 %v597, %v597
    %599 = vrot.lane.b32.xlu0 %v598, 32
    %v600 = vpop.permute.xlu0 %599
    %601 = vrot.lane.b32.xlu0 %v584, 64
    %v602 = vpop.permute.xlu0 %601
    %v605 = vsel %vm177, %v600, %v602
    %v607 = vunpack.c.l.bf16 %v605
    %609 = vrot.lane.b32.xlu0 %v607, 64
    %v610 = vpop.permute.xlu0 %609
    %v612 = vadd.f32 %v575, %v610
    %v613 = vxor.u32 %v594, 2147483648
    %v614 = vxor.u32 %v595, 2147483648
    %v615 = vmul.f32 %v613, 1.442695
    %v616 = vpow.pop %v615
    %v617 = vmul.f32 %v614, 1.442695
    %v618 = vpow.pop %v617
    %v619 = vadd.f32 %v616, 1.0
    %v620 = vadd.f32 %v618, 1.0
    %v621 = vrcp.pop %v619
    %v622 = vmul.f32 %v619, %v621
    %v623 = vsub.f32 1.0, %v622
    %v624 = vmul.f32 %v621, %v623
    %v625 = vadd.f32 %v621, %v624
    %vm626 = vweird.f32 %v619
    %vm627 = vweird.f32 %v621
    %vm628 = vmor %vm626, %vm627
    %v629 = vsel %vm628, %v621, %v625
    %v630 = vand.u32 2147483647, %v619
    %vm631 = vcmp.eq.f32.partialorder %v630, 8.507059e+37
    %v632 = vand.u32 %v619, 2147483648
    %v633 = vor.u32 1.1754944e-38, %v632
    %v634 = vsel %vm631, %v633, %v629
    %v635 = vmul.f32 1.0, %v634
    %v636 = vrcp.pop %v620
    %v637 = vmul.f32 %v620, %v636
    %v638 = vsub.f32 1.0, %v637
    %v639 = vmul.f32 %v636, %v638
    %v640 = vadd.f32 %v636, %v639
    %vm641 = vweird.f32 %v620
    %vm642 = vweird.f32 %v636
    %vm643 = vmor %vm641, %vm642
    %v644 = vsel %vm643, %v636, %v640
    %v645 = vand.u32 2147483647, %v620
    %vm646 = vcmp.eq.f32.partialorder %v645, 8.507059e+37
    %v647 = vand.u32 %v620, 2147483648
    %v648 = vor.u32 1.1754944e-38, %v647
    %v649 = vsel %vm646, %v648, %v644
    %v650 = vmul.f32 1.0, %v649
    %v651 = vtanh.pop %v612
    %653 = vrot.lane.b32.xlu0 %v635, 64
    %v654 = vpop.permute.xlu0 %653
    %v656 = vsel %vm177, %v635, %v654
    %657 = vrot.lane.b32.xlu0 %v635, 96
    %v658 = vpop.permute.xlu0 %657
    %661 = vrot.lane.b32.xlu0 %v650, 32
    %v662 = vpop.permute.xlu0 %661
    %v664 = vsel %vm177, %v658, %v662
    %v665 = vsel %vm177, %v654, %v650
    %v666 = vmul.f32 %v664, %v546
    %668 = vrot.lane.b32.xlu0 %v651, 64
    %v669 = vpop.permute.xlu0 %668
    %v671 = vmul.f32 %v656, %v669
    %v672 = vadd.f32 %v666, %v671
    %v673 = vtanh.pop %v672
    %v674 = vmul.f32 %v665, %v673
    %s675 = sadd.s32 %s76, 3
    %s676 = sadd.s32 %s78, 4
    %v677 = vstv %s675
    %v678 = vstv %s676
    %v679 = vsel %vm75, %v677, %v678
    %vm680 = vcmp.lt.s32.totalorder %v679, %v72
    %v681 = vsel %vm680, 1, 0
    %v682 = vcvt.s32.f32 %v681
    %v683 = vsub.f32 %v674, %v543
    %v684 = vmul.f32 %v682, %v683
    %v685 = vadd.f32 %v543, %v684
    %v686 = vsub.f32 %v672, %v546
    %v687 = vmul.f32 %v682, %v686
    %v688 = vadd.f32 %v546, %v687
    %v689 = vmul.f32 %v682, %v674
    %v690 = vpack.c.bf16 %v685, %v685
    %v692 = vsel %vm122, %v690, 0
    %694 = vmatpush.bf16.msra.mxu0 0
    %695 = vmatpush.bf16.msra.mxu0 0
    %696 = vmatpush.bf16.msra.mxu0 0
    %697 = vmatpush.bf16.msra.mxu0 0
    %698 = vmatpush.bf16.msra.mxu0 %v112
    %699 = vmatpush.bf16.msra.mxu0 %v110
    %700 = vmatpush.bf16.msra.mxu0 %v108
    %701 = vmatpush.bf16.msra.mxu0 %v106
    %702 = vmatmul.bf16.gmra.mxu0 %v692
    %v703 = vpop.f32.mrf.mxu0
    %v704 = vadd.f32 0.0, %v703
    %v705 = vpop.f32.mrf.mxu0
    %706 = vdwg.mxu0
    %707 = vmatpush.bf16.msra.mxu0 0
    %708 = vmatpush.bf16.msra.mxu0 0
    %709 = vmatpush.bf16.msra.mxu0 0
    %710 = vmatpush.bf16.msra.mxu0 0
    %711 = vmatpush.bf16.msra.mxu0 %v113
    %712 = vmatpush.bf16.msra.mxu0 %v111
    %713 = vmatpush.bf16.msra.mxu0 %v109
    %714 = vmatpush.bf16.msra.mxu0 %v107
    %715 = vmatmul.bf16.gmra.mxu0 %v692
    %v716 = vpop.f32.mrf.mxu0
    %v717 = vadd.f32 0.0, %v716
    %v718 = vpop.f32.mrf.mxu0
    %719 = vdwg.mxu0
    %s720 = scalar_lea.vmem %s0, 16
    %v721 = vld [vmem:[%s720] sm:$0xf]
    %s722 = scalar_lea.vmem %s46, 12
    %v723 = vld [vmem:[%s722] sm:$0xf]
    %v725 = vunpack.c.l.b16 %v723
    %v726 = vpack.c.b16 %v725, %v725
    %727 = vrot.lane.b32.xlu0 %v726, 96
    %v728 = vpop.permute.xlu0 %727
    %v732 = vsel %vm161, %v721, %v728
    %v734 = vunpack.c.l.bf16 %v732
    %v735 = vunpack.c.l.bf16 %v728
    %v736 = vadd.f32 %v704, %v734
    %v737 = vadd.f32 %v717, %v735
    %v739 = vunpack.c.l.b16 %v721
    %v740 = vpack.c.b16 %v739, %v739
    %741 = vrot.lane.b32.xlu0 %v740, 32
    %v742 = vpop.permute.xlu0 %741
    %743 = vrot.lane.b32.xlu0 %v726, 64
    %v744 = vpop.permute.xlu0 %743
    %v747 = vsel %vm177, %v742, %v744
    %v749 = vunpack.c.l.bf16 %v747
    %751 = vrot.lane.b32.xlu0 %v749, 64
    %v752 = vpop.permute.xlu0 %751
    %v754 = vadd.f32 %v717, %v752
    %v755 = vxor.u32 %v736, 2147483648
    %v756 = vxor.u32 %v737, 2147483648
    %v757 = vmul.f32 %v755, 1.442695
    %v758 = vpow.pop %v757
    %v759 = vmul.f32 %v756, 1.442695
    %v760 = vpow.pop %v759
    %v761 = vadd.f32 %v758, 1.0
    %v762 = vadd.f32 %v760, 1.0
    %v763 = vrcp.pop %v761
    %v764 = vmul.f32 %v761, %v763
    %v765 = vsub.f32 1.0, %v764
    %v766 = vmul.f32 %v763, %v765
    %v767 = vadd.f32 %v763, %v766
    %vm768 = vweird.f32 %v761
    %vm769 = vweird.f32 %v763
    %vm770 = vmor %vm768, %vm769
    %v771 = vsel %vm770, %v763, %v767
    %v772 = vand.u32 2147483647, %v761
    %vm773 = vcmp.eq.f32.partialorder %v772, 8.507059e+37
    %v774 = vand.u32 %v761, 2147483648
    %v775 = vor.u32 1.1754944e-38, %v774
    %v776 = vsel %vm773, %v775, %v771
    %v777 = vmul.f32 1.0, %v776
    %v778 = vrcp.pop %v762
    %v779 = vmul.f32 %v762, %v778
    %v780 = vsub.f32 1.0, %v779
    %v781 = vmul.f32 %v778, %v780
    %v782 = vadd.f32 %v778, %v781
    %vm783 = vweird.f32 %v762
    %vm784 = vweird.f32 %v778
    %vm785 = vmor %vm783, %vm784
    %v786 = vsel %vm785, %v778, %v782
    %v787 = vand.u32 2147483647, %v762
    %vm788 = vcmp.eq.f32.partialorder %v787, 8.507059e+37
    %v789 = vand.u32 %v762, 2147483648
    %v790 = vor.u32 1.1754944e-38, %v789
    %v791 = vsel %vm788, %v790, %v786
    %v792 = vmul.f32 1.0, %v791
    %v793 = vtanh.pop %v754
    %795 = vrot.lane.b32.xlu0 %v777, 64
    %v796 = vpop.permute.xlu0 %795
    %v798 = vsel %vm177, %v777, %v796
    %799 = vrot.lane.b32.xlu0 %v777, 96
    %v800 = vpop.permute.xlu0 %799
    %803 = vrot.lane.b32.xlu0 %v792, 32
    %v804 = vpop.permute.xlu0 %803
    %v806 = vsel %vm177, %v800, %v804
    %v807 = vsel %vm177, %v796, %v792
    %v808 = vmul.f32 %v806, %v688
    %810 = vrot.lane.b32.xlu0 %v793, 64
    %v811 = vpop.permute.xlu0 %810
    %v813 = vmul.f32 %v798, %v811
    %v814 = vadd.f32 %v808, %v813
    %v815 = vtanh.pop %v814
    %v816 = vmul.f32 %v807, %v815
    %s817 = sadd.s32 %s76, 4
    %s818 = sadd.s32 %s78, 3
    %v819 = vstv %s817
    %v820 = vstv %s818
    %v821 = vsel %vm75, %v819, %v820
    %vm822 = vcmp.lt.s32.totalorder %v821, %v72
    %v823 = vsel %vm822, 1, 0
    %v824 = vcvt.s32.f32 %v823
    %v825 = vsub.f32 %v816, %v685
    %v826 = vmul.f32 %v824, %v825
    %v827 = vadd.f32 %v685, %v826
    %v828 = vsub.f32 %v814, %v688
    %v829 = vmul.f32 %v824, %v828
    %v830 = vadd.f32 %v688, %v829
    %v831 = vmul.f32 %v824, %v816
    %v832 = vpack.c.bf16 %v827, %v827
    %v834 = vsel %vm122, %v832, 0
    %836 = vmatpush.bf16.msra.mxu0 0
    %837 = vmatpush.bf16.msra.mxu0 0
    %838 = vmatpush.bf16.msra.mxu0 0
    %839 = vmatpush.bf16.msra.mxu0 0
    %840 = vmatpush.bf16.msra.mxu0 %v112
    %841 = vmatpush.bf16.msra.mxu0 %v110
    %842 = vmatpush.bf16.msra.mxu0 %v108
    %843 = vmatpush.bf16.msra.mxu0 %v106
    %844 = vmatmul.bf16.gmra.mxu0 %v834
    %v845 = vpop.f32.mrf.mxu0
    %v846 = vadd.f32 0.0, %v845
    %v847 = vpop.f32.mrf.mxu0
    %848 = vdwg.mxu0
    %849 = vmatpush.bf16.msra.mxu0 0
    %850 = vmatpush.bf16.msra.mxu0 0
    %851 = vmatpush.bf16.msra.mxu0 0
    %852 = vmatpush.bf16.msra.mxu0 0
    %853 = vmatpush.bf16.msra.mxu0 %v113
    %854 = vmatpush.bf16.msra.mxu0 %v111
    %855 = vmatpush.bf16.msra.mxu0 %v109
    %856 = vmatpush.bf16.msra.mxu0 %v107
    %857 = vmatmul.bf16.gmra.mxu0 %v834
    %v858 = vpop.f32.mrf.mxu0
    %v859 = vadd.f32 0.0, %v858
    %v860 = vpop.f32.mrf.mxu0
    %861 = vdwg.mxu0
    %s862 = scalar_lea.vmem %s0, 20
    %v863 = vld [vmem:[%s862] sm:$0xf]
    %s864 = scalar_lea.vmem %s46, 8
    %v865 = vld [vmem:[%s864] sm:$0xf]
    %v867 = vunpack.c.l.b16 %v865
    %v868 = vpack.c.b16 %v867, %v867
    %869 = vrot.lane.b32.xlu0 %v868, 96
    %v870 = vpop.permute.xlu0 %869
    %v874 = vsel %vm161, %v863, %v870
    %v876 = vunpack.c.l.bf16 %v874
    %v877 = vunpack.c.l.bf16 %v870
    %v878 = vadd.f32 %v846, %v876
    %v879 = vadd.f32 %v859, %v877
    %v881 = vunpack.c.l.b16 %v863
    %v882 = vpack.c.b16 %v881, %v881
    %883 = vrot.lane.b32.xlu0 %v882, 32
    %v884 = vpop.permute.xlu0 %883
    %885 = vrot.lane.b32.xlu0 %v868, 64
    %v886 = vpop.permute.xlu0 %885
    %v889 = vsel %vm177, %v884, %v886
    %v891 = vunpack.c.l.bf16 %v889
    %893 = vrot.lane.b32.xlu0 %v891, 64
    %v894 = vpop.permute.xlu0 %893
    %v896 = vadd.f32 %v859, %v894
    %v897 = vxor.u32 %v878, 2147483648
    %v898 = vxor.u32 %v879, 2147483648
    %v899 = vmul.f32 %v897, 1.442695
    %v900 = vpow.pop %v899
    %v901 = vmul.f32 %v898, 1.442695
    %v902 = vpow.pop %v901
    %v903 = vadd.f32 %v900, 1.0
    %v904 = vadd.f32 %v902, 1.0
    %v905 = vrcp.pop %v903
    %v906 = vmul.f32 %v903, %v905
    %v907 = vsub.f32 1.0, %v906
    %v908 = vmul.f32 %v905, %v907
    %v909 = vadd.f32 %v905, %v908
    %vm910 = vweird.f32 %v903
    %vm911 = vweird.f32 %v905
    %vm912 = vmor %vm910, %vm911
    %v913 = vsel %vm912, %v905, %v909
    %v914 = vand.u32 2147483647, %v903
    %vm915 = vcmp.eq.f32.partialorder %v914, 8.507059e+37
    %v916 = vand.u32 %v903, 2147483648
    %v917 = vor.u32 1.1754944e-38, %v916
    %v918 = vsel %vm915, %v917, %v913
    %v919 = vmul.f32 1.0, %v918
    %v920 = vrcp.pop %v904
    %v921 = vmul.f32 %v904, %v920
    %v922 = vsub.f32 1.0, %v921
    %v923 = vmul.f32 %v920, %v922
    %v924 = vadd.f32 %v920, %v923
    %vm925 = vweird.f32 %v904
    %vm926 = vweird.f32 %v920
    %vm927 = vmor %vm925, %vm926
    %v928 = vsel %vm927, %v920, %v924
    %v929 = vand.u32 2147483647, %v904
    %vm930 = vcmp.eq.f32.partialorder %v929, 8.507059e+37
    %v931 = vand.u32 %v904, 2147483648
    %v932 = vor.u32 1.1754944e-38, %v931
    %v933 = vsel %vm930, %v932, %v928
    %v934 = vmul.f32 1.0, %v933
    %v935 = vtanh.pop %v896
    %937 = vrot.lane.b32.xlu0 %v919, 64
    %v938 = vpop.permute.xlu0 %937
    %v940 = vsel %vm177, %v919, %v938
    %941 = vrot.lane.b32.xlu0 %v919, 96
    %v942 = vpop.permute.xlu0 %941
    %945 = vrot.lane.b32.xlu0 %v934, 32
    %v946 = vpop.permute.xlu0 %945
    %v948 = vsel %vm177, %v942, %v946
    %v949 = vsel %vm177, %v938, %v934
    %v950 = vmul.f32 %v948, %v830
    %952 = vrot.lane.b32.xlu0 %v935, 64
    %v953 = vpop.permute.xlu0 %952
    %v955 = vmul.f32 %v940, %v953
    %v956 = vadd.f32 %v950, %v955
    %v957 = vtanh.pop %v956
    %v958 = vmul.f32 %v949, %v957
    %s959 = sadd.s32 %s76, 5
    %s960 = sadd.s32 %s78, 2
    %v961 = vstv %s959
    %v962 = vstv %s960
    %v963 = vsel %vm75, %v961, %v962
    %vm964 = vcmp.lt.s32.totalorder %v963, %v72
    %v965 = vsel %vm964, 1, 0
    %v966 = vcvt.s32.f32 %v965
    %v967 = vsub.f32 %v958, %v827
    %v968 = vmul.f32 %v966, %v967
    %v969 = vadd.f32 %v827, %v968
    %v970 = vsub.f32 %v956, %v830
    %v971 = vmul.f32 %v966, %v970
    %v972 = vadd.f32 %v830, %v971
    %v973 = vmul.f32 %v966, %v958
    %v974 = vpack.c.bf16 %v969, %v969
    %v976 = vsel %vm122, %v974, 0
    %978 = vmatpush.bf16.msra.mxu0 0
    %979 = vmatpush.bf16.msra.mxu0 0
    %980 = vmatpush.bf16.msra.mxu0 0
    %981 = vmatpush.bf16.msra.mxu0 0
    %982 = vmatpush.bf16.msra.mxu0 %v112
    %983 = vmatpush.bf16.msra.mxu0 %v110
    %984 = vmatpush.bf16.msra.mxu0 %v108
    %985 = vmatpush.bf16.msra.mxu0 %v106
    %986 = vmatmul.bf16.gmra.mxu0 %v976
    %v987 = vpop.f32.mrf.mxu0
    %v988 = vadd.f32 0.0, %v987
    %v989 = vpop.f32.mrf.mxu0
    %990 = vdwg.mxu0
    %991 = vmatpush.bf16.msra.mxu0 0
    %992 = vmatpush.bf16.msra.mxu0 0
    %993 = vmatpush.bf16.msra.mxu0 0
    %994 = vmatpush.bf16.msra.mxu0 0
    %995 = vmatpush.bf16.msra.mxu0 %v113
    %996 = vmatpush.bf16.msra.mxu0 %v111
    %997 = vmatpush.bf16.msra.mxu0 %v109
    %998 = vmatpush.bf16.msra.mxu0 %v107
    %999 = vmatmul.bf16.gmra.mxu0 %v976
    %v1000 = vpop.f32.mrf.mxu0
    %v1001 = vadd.f32 0.0, %v1000
    %v1002 = vpop.f32.mrf.mxu0
    %1003 = vdwg.mxu0
    %s1004 = scalar_lea.vmem %s0, 24
    %v1005 = vld [vmem:[%s1004] sm:$0xf]
    %s1006 = scalar_lea.vmem %s46, 4
    %v1007 = vld [vmem:[%s1006] sm:$0xf]
    %v1009 = vunpack.c.l.b16 %v1007
    %v1010 = vpack.c.b16 %v1009, %v1009
    %1011 = vrot.lane.b32.xlu0 %v1010, 96
    %v1012 = vpop.permute.xlu0 %1011
    %v1016 = vsel %vm161, %v1005, %v1012
    %v1018 = vunpack.c.l.bf16 %v1016
    %v1019 = vunpack.c.l.bf16 %v1012
    %v1020 = vadd.f32 %v988, %v1018
    %v1021 = vadd.f32 %v1001, %v1019
    %v1023 = vunpack.c.l.b16 %v1005
    %v1024 = vpack.c.b16 %v1023, %v1023
    %1025 = vrot.lane.b32.xlu0 %v1024, 32
    %v1026 = vpop.permute.xlu0 %1025
    %1027 = vrot.lane.b32.xlu0 %v1010, 64
    %v1028 = vpop.permute.xlu0 %1027
    %v1031 = vsel %vm177, %v1026, %v1028
    %v1033 = vunpack.c.l.bf16 %v1031
    %1035 = vrot.lane.b32.xlu0 %v1033, 64
    %v1036 = vpop.permute.xlu0 %1035
    %v1038 = vadd.f32 %v1001, %v1036
    %v1039 = vxor.u32 %v1020, 2147483648
    %v1040 = vxor.u32 %v1021, 2147483648
    %v1041 = vmul.f32 %v1039, 1.442695
    %v1042 = vpow.pop %v1041
    %v1043 = vmul.f32 %v1040, 1.442695
    %v1044 = vpow.pop %v1043
    %v1045 = vadd.f32 %v1042, 1.0
    %v1046 = vadd.f32 %v1044, 1.0
    %v1047 = vrcp.pop %v1045
    %v1048 = vmul.f32 %v1045, %v1047
    %v1049 = vsub.f32 1.0, %v1048
    %v1050 = vmul.f32 %v1047, %v1049
    %v1051 = vadd.f32 %v1047, %v1050
    %vm1052 = vweird.f32 %v1045
    %vm1053 = vweird.f32 %v1047
    %vm1054 = vmor %vm1052, %vm1053
    %v1055 = vsel %vm1054, %v1047, %v1051
    %v1056 = vand.u32 2147483647, %v1045
    %vm1057 = vcmp.eq.f32.partialorder %v1056, 8.507059e+37
    %v1058 = vand.u32 %v1045, 2147483648
    %v1059 = vor.u32 1.1754944e-38, %v1058
    %v1060 = vsel %vm1057, %v1059, %v1055
    %v1061 = vmul.f32 1.0, %v1060
    %v1062 = vrcp.pop %v1046
    %v1063 = vmul.f32 %v1046, %v1062
    %v1064 = vsub.f32 1.0, %v1063
    %v1065 = vmul.f32 %v1062, %v1064
    %v1066 = vadd.f32 %v1062, %v1065
    %vm1067 = vweird.f32 %v1046
    %vm1068 = vweird.f32 %v1062
    %vm1069 = vmor %vm1067, %vm1068
    %v1070 = vsel %vm1069, %v1062, %v1066
    %v1071 = vand.u32 2147483647, %v1046
    %vm1072 = vcmp.eq.f32.partialorder %v1071, 8.507059e+37
    %v1073 = vand.u32 %v1046, 2147483648
    %v1074 = vor.u32 1.1754944e-38, %v1073
    %v1075 = vsel %vm1072, %v1074, %v1070
    %v1076 = vmul.f32 1.0, %v1075
    %v1077 = vtanh.pop %v1038
    %1079 = vrot.lane.b32.xlu0 %v1061, 64
    %v1080 = vpop.permute.xlu0 %1079
    %v1082 = vsel %vm177, %v1061, %v1080
    %1083 = vrot.lane.b32.xlu0 %v1061, 96
    %v1084 = vpop.permute.xlu0 %1083
    %1087 = vrot.lane.b32.xlu0 %v1076, 32
    %v1088 = vpop.permute.xlu0 %1087
    %v1090 = vsel %vm177, %v1084, %v1088
    %v1091 = vsel %vm177, %v1080, %v1076
    %v1092 = vmul.f32 %v1090, %v972
    %1094 = vrot.lane.b32.xlu0 %v1077, 64
    %v1095 = vpop.permute.xlu0 %1094
    %v1097 = vmul.f32 %v1082, %v1095
    %v1098 = vadd.f32 %v1092, %v1097
    %v1099 = vtanh.pop %v1098
    %v1100 = vmul.f32 %v1091, %v1099
    %s1101 = sadd.s32 %s76, 6
    %s1102 = sadd.s32 %s78, 1
    %v1103 = vstv %s1101
    %v1104 = vstv %s1102
    %v1105 = vsel %vm75, %v1103, %v1104
    %vm1106 = vcmp.lt.s32.totalorder %v1105, %v72
    %v1107 = vsel %vm1106, 1, 0
    %v1108 = vcvt.s32.f32 %v1107
    %v1109 = vsub.f32 %v1100, %v969
    %v1110 = vmul.f32 %v1108, %v1109
    %v1111 = vadd.f32 %v969, %v1110
    %v1112 = vsub.f32 %v1098, %v972
    %v1113 = vmul.f32 %v1108, %v1112
    %v1114 = vadd.f32 %v972, %v1113
    %v1115 = vmul.f32 %v1108, %v1100
    %v1116 = vpack.c.bf16 %v1111, %v1111
    %v1118 = vsel %vm122, %v1116, 0
    %1120 = vmatpush.bf16.msra.mxu0 0
    %1121 = vmatpush.bf16.msra.mxu0 0
    %1122 = vmatpush.bf16.msra.mxu0 0
    %1123 = vmatpush.bf16.msra.mxu0 0
    %1124 = vmatpush.bf16.msra.mxu0 %v112
    %1125 = vmatpush.bf16.msra.mxu0 %v110
    %1126 = vmatpush.bf16.msra.mxu0 %v108
    %1127 = vmatpush.bf16.msra.mxu0 %v106
    %1128 = vmatmul.bf16.gmra.mxu0 %v1118
    %v1129 = vpop.f32.mrf.mxu0
    %v1130 = vadd.f32 0.0, %v1129
    %v1131 = vpop.f32.mrf.mxu0
    %1132 = vdwg.mxu0
    %1133 = vmatpush.bf16.msra.mxu0 0
    %1134 = vmatpush.bf16.msra.mxu0 0
    %1135 = vmatpush.bf16.msra.mxu0 0
    %1136 = vmatpush.bf16.msra.mxu0 0
    %1137 = vmatpush.bf16.msra.mxu0 %v113
    %1138 = vmatpush.bf16.msra.mxu0 %v111
    %1139 = vmatpush.bf16.msra.mxu0 %v109
    %1140 = vmatpush.bf16.msra.mxu0 %v107
    %1141 = vmatmul.bf16.gmra.mxu0 %v1118
    %v1142 = vpop.f32.mrf.mxu0
    %v1143 = vadd.f32 0.0, %v1142
    %v1144 = vpop.f32.mrf.mxu0
    %1145 = vdwg.mxu0
    %s1146 = scalar_lea.vmem %s0, 28
    %v1147 = vld [vmem:[%s1146] sm:$0xf]
    %v1148 = vld [vmem:[%s46] sm:$0xf]
    %v1150 = vunpack.c.l.b16 %v1148
    %v1151 = vpack.c.b16 %v1150, %v1150
    %1152 = vrot.lane.b32.xlu0 %v1151, 96
    %v1153 = vpop.permute.xlu0 %1152
    %v1157 = vsel %vm161, %v1147, %v1153
    %v1159 = vunpack.c.l.bf16 %v1157
    %v1160 = vunpack.c.l.bf16 %v1153
    %v1161 = vadd.f32 %v1130, %v1159
    %v1162 = vadd.f32 %v1143, %v1160
    %v1164 = vunpack.c.l.b16 %v1147
    %v1165 = vpack.c.b16 %v1164, %v1164
    %1166 = vrot.lane.b32.xlu0 %v1165, 32
    %v1167 = vpop.permute.xlu0 %1166
    %1168 = vrot.lane.b32.xlu0 %v1151, 64
    %v1169 = vpop.permute.xlu0 %1168
    %v1172 = vsel %vm177, %v1167, %v1169
    %v1174 = vunpack.c.l.bf16 %v1172
    %1176 = vrot.lane.b32.xlu0 %v1174, 64
    %v1177 = vpop.permute.xlu0 %1176
    %v1179 = vadd.f32 %v1143, %v1177
    %v1180 = vxor.u32 %v1161, 2147483648
    %v1181 = vxor.u32 %v1162, 2147483648
    %v1182 = vmul.f32 %v1180, 1.442695
    %v1183 = vpow.pop %v1182
    %v1184 = vmul.f32 %v1181, 1.442695
    %v1185 = vpow.pop %v1184
    %v1186 = vadd.f32 %v1183, 1.0
    %v1187 = vadd.f32 %v1185, 1.0
    %v1188 = vrcp.pop %v1186
    %v1189 = vmul.f32 %v1186, %v1188
    %v1190 = vsub.f32 1.0, %v1189
    %v1191 = vmul.f32 %v1188, %v1190
    %v1192 = vadd.f32 %v1188, %v1191
    %vm1193 = vweird.f32 %v1186
    %vm1194 = vweird.f32 %v1188
    %vm1195 = vmor %vm1193, %vm1194
    %v1196 = vsel %vm1195, %v1188, %v1192
    %v1197 = vand.u32 2147483647, %v1186
    %vm1198 = vcmp.eq.f32.partialorder %v1197, 8.507059e+37
    %v1199 = vand.u32 %v1186, 2147483648
    %v1200 = vor.u32 1.1754944e-38, %v1199
    %v1201 = vsel %vm1198, %v1200, %v1196
    %v1202 = vmul.f32 1.0, %v1201
    %v1203 = vrcp.pop %v1187
    %v1204 = vmul.f32 %v1187, %v1203
    %v1205 = vsub.f32 1.0, %v1204
    %v1206 = vmul.f32 %v1203, %v1205
    %v1207 = vadd.f32 %v1203, %v1206
    %vm1208 = vweird.f32 %v1187
    %vm1209 = vweird.f32 %v1203
    %vm1210 = vmor %vm1208, %vm1209
    %v1211 = vsel %vm1210, %v1203, %v1207
    %v1212 = vand.u32 2147483647, %v1187
    %vm1213 = vcmp.eq.f32.partialorder %v1212, 8.507059e+37
    %v1214 = vand.u32 %v1187, 2147483648
    %v1215 = vor.u32 1.1754944e-38, %v1214
    %v1216 = vsel %vm1213, %v1215, %v1211
    %v1217 = vmul.f32 1.0, %v1216
    %v1218 = vtanh.pop %v1179
    %1220 = vrot.lane.b32.xlu0 %v1202, 64
    %v1221 = vpop.permute.xlu0 %1220
    %v1223 = vsel %vm177, %v1202, %v1221
    %1224 = vrot.lane.b32.xlu0 %v1202, 96
    %v1225 = vpop.permute.xlu0 %1224
    %1228 = vrot.lane.b32.xlu0 %v1217, 32
    %v1229 = vpop.permute.xlu0 %1228
    %v1231 = vsel %vm177, %v1225, %v1229
    %v1232 = vsel %vm177, %v1221, %v1217
    %v1233 = vmul.f32 %v1231, %v1114
    %1235 = vrot.lane.b32.xlu0 %v1218, 64
    %v1236 = vpop.permute.xlu0 %1235
    %v1238 = vmul.f32 %v1223, %v1236
    %v1239 = vadd.f32 %v1233, %v1238
    %v1240 = vtanh.pop %v1239
    %v1241 = vmul.f32 %v1232, %v1240
    %s1242 = sadd.s32 %s76, 7
    %v1243 = vstv %s1242
    %v1244 = vstv %s78
    %v1245 = vsel %vm75, %v1243, %v1244
    %vm1246 = vcmp.lt.s32.totalorder %v1245, %v72
    %v1247 = vsel %vm1246, 1, 0
    %v1248 = vcvt.s32.f32 %v1247
    %v1249 = vsub.f32 %v1241, %v1111
    %v1250 = vmul.f32 %v1248, %v1249
    %v1251 = vadd.f32 %v1111, %v1250
    %v1252 = vsub.f32 %v1239, %v1114
    %v1253 = vmul.f32 %v1248, %v1252
    %v1254 = vadd.f32 %v1114, %v1253
    %v1255 = vmul.f32 %v1248, %v1241
    %1256 = vst.msk [vmem:[#allocation2] sm:$0xff] %vm122, %v1251
    %1257 = vst.msk [vmem:[#allocation3] sm:$0xff] %vm122, %v1254
    %1259 = vrot.lane.b32.xlu0 %v405, 32
    %v1260 = vpop.permute.xlu0 %1259
    %1263 = vrot.lane.b32.xlu0 %v547, 64
    %v1264 = vpop.permute.xlu0 %1263
    %1267 = vrot.lane.b32.xlu0 %v689, 96
    %v1268 = vpop.permute.xlu0 %1267
    %1271 = vrot.lane.b32.xlu0 %v973, 32
    %v1272 = vpop.permute.xlu0 %1271
    %1275 = vrot.lane.b32.xlu0 %v1115, 64
    %v1276 = vpop.permute.xlu0 %1275
    %1279 = vrot.lane.b32.xlu0 %v1255, 96
    %v1280 = vpop.permute.xlu0 %1279
    %v1282 = vsel %vm177, %v263, %v1260
    %v1283 = vsel %vm122, %v1282, %v1264
    %v1284 = vsel %vm161, %v1283, %v1268
    %v1285 = vsel %vm177, %v831, %v1272
    %v1286 = vsel %vm122, %v1285, %v1276
    %v1287 = vsel %vm161, %v1286, %v1280
    %v1288 = vpack.c.bf16 %v1287, %v1284
    %1289 = vst [vmem:[%s4] sm:$0xff] %v1288
    %1291 = vrot.lane.b32.xlu0 %v831, 64
    %v1292 = vpop.permute.xlu0 %1291
    %1295 = vrot.lane.b32.xlu0 %v263, 64
    %v1296 = vpop.permute.xlu0 %1295
    %v1298 = vsel %vm177, %v1280, %v1115
    %v1299 = vsel %vm122, %v1298, %v1272
    %v1300 = vsel %vm161, %v1299, %v1292
    %v1301 = vsel %vm177, %v1268, %v547
    %v1302 = vsel %vm122, %v1301, %v1260
    %v1303 = vsel %vm161, %v1302, %v1296
    %v1304 = vpack.c.bf16 %v1303, %v1300
    %1305 = vst [vmem:[%s54] sm:$0xff] %v1304
    // Predicated region
    $region22: #{lstm_model_forward.2} parent=1 // pred_check
      %p1306 = pneg %p57
    $region23: #{lstm_model_forward.2} parent=1 // pred_check_branch
      %1308 = sbr.rel (%p1306) target = $region25
    $region24: #{lstm_model_forward.2} parent=1 // pred_region
      %1309 = vst.msk [vmem:[#allocation4] sm:$0xff] %vm122, %v1251
    $region25: #{lstm_model_forward.2} parent=1 // pred_fallthru
      _
    %s1310 = ssub.s32 0, 0
    %p1311 = scmp.lt.s32.totalorder %s1310, 0
    %s1312 = scalar_select %p1311, %s1310, 0
    %s1313 = smul.addr %s1312, 2
    %s1314 = smul.addr %s1313, 4
    %s1315 = scalar_lea.vmem %s5, %s1314
    // Predicated region
    $region26: #{lstm_model_forward.2} parent=1 // pred_check
      _
    $region27: #{lstm_model_forward.2} parent=1 // pred_check_branch
      %1317 = sbr.rel (0) target = $region29
    $region28: #{lstm_model_forward.2} parent=1 // pred_region
      _
    $region29: #{lstm_model_forward.2} parent=1 // pred_fallthru
      _
    // Predicated region
    $region30: #{lstm_model_forward.2} parent=1 // pred_check
      _
    $region31: #{lstm_model_forward.2} parent=1 // pred_check_branch
      %1319 = sbr.rel (0) target = $region33
    $region32: #{lstm_model_forward.2} parent=1 // pred_region
      %s1320 = ssub.s32 0, 0
    $region33: #{lstm_model_forward.2} parent=1 // pred_fallthru
      _
    // Predicated region
    $region34: #{lstm_model_forward.2} parent=1 // pred_check
      _
    $region35: #{lstm_model_forward.2} parent=1 // pred_check_branch
      %1322 = sbr.rel (0) target = $region37
    $region36: #{lstm_model_forward.2} parent=1 // pred_region
      %1324 = vsyncadd [#allocation5], 0
      %s1326 = sshll.u32 [#allocation4], 4
      %s1327 = int_to_ptr.vmem [resolvable:$true] %s1326
      %s1328 = sshll.u32 %s6, 4
      %s1329 = int_to_ptr.hbm [resolvable:$true] %s1328
      %1331 = dma.vmem_to_hbm [thread:$0]  %s1327, 128, %s1329, [#allocation5]
    $region37: #{lstm_model_forward.2} parent=1 // pred_fallthru
      _
    // Predicated region
    $region38: #{lstm_model_forward.2} parent=1 // pred_check
      _
    $region39: #{lstm_model_forward.2} parent=1 // pred_check_branch
      %1333 = sbr.rel (0) target = $region41
    $region40: #{lstm_model_forward.2} parent=1 // pred_region
      _
    $region41: #{lstm_model_forward.2} parent=1 // pred_fallthru
      _
    // Predicated region
    $region42: #{lstm_model_forward.2} parent=1 // pred_check
      _
    $region43: #{lstm_model_forward.2} parent=1 // pred_check_branch
      %1335 = sbr.rel (0) target = $region45
    $region44: #{lstm_model_forward.2} parent=1 // pred_region
      %s1336 = ssub.s32 0, 0
      %p1337 = scmp.lt.s32.totalorder %s1336, 0
      %s1338 = scalar_select %p1337, %s1336, 0
      %s1339 = smul.addr %s1338, 2
      %s1340 = smul.addr %s1339, 4
      %s1341 = scalar_lea.vmem %s5, %s1340
    $region45: #{lstm_model_forward.2} parent=1 // pred_fallthru
      _
    // Predicated region
    $region46: #{lstm_model_forward.2} parent=1 // pred_check
      _
    $region47: #{lstm_model_forward.2} parent=1 // pred_check_branch
      %1343 = sbr.rel (0) target = $region49
    $region48: #{lstm_model_forward.2} parent=1 // pred_region
      %1345 = dma.done [#allocation5], 128
    $region49: #{lstm_model_forward.2} parent=1 // pred_fallthru
      _
    %1346 = vsyncpa [#allocation5], 1

// kernel: lstm_model_forward.3
$region0: #{lstm_model_forward.3}
  #allocation0 [shape = 'u32[]', space=smem, size = 0x4, offset = 0x4, fixed_abs, tag = 'smem constant byte address 0x4 - core index']
  #allocation1 [shape = 'u32[72,128]{1,0:T(1,128)}', space=vmem, size = 0x9000, scoped, tag = 'internal scratch']
  #allocation2 [shape = 'f32[8,64]{1,0:T(8,128)}', space=vmem, size = 0x1000, scoped, tag = 'scratch operand']
  #allocation3 [shape = 'f32[8,64]{1,0:T(8,128)}', space=vmem, size = 0x1000, scoped, tag = 'scratch operand']
  %s0 = inlined_call_operand.vmem [shape: bf16[8,8,128], index: 0, kind: input, shape index: {}]
  %s1 = inlined_call_operand.vmem [shape: bf16[8,8,128], index: 1, kind: input, shape index: {}]
  %s2 = inlined_call_operand.vmem [shape: bf16[64,256], index: 2, kind: input, shape index: {}]
  %s3 = inlined_call_operand.vmem [shape: s32[8,64], index: 3, kind: input, shape index: {}]
  %s4 = inlined_call_operand.hbm [shape: bf16[1,8,256], index: 4, kind: output, shape index: {0}]
  %s5 = inlined_call_operand.hbm [shape: bf16[1,8,256], index: 5, kind: output, shape index: {1}]
  %s6 = inlined_call_operand.vmem [shape: f32[8,64], index: 6, kind: output, shape index: {2}]
  %7 = xla_tuple %s4, %s5, %s6
  %s8 = sld [smem:[#allocation0]]
  $region50: #{lstm_model_forward.3} parent=0
    _
  %s10 = ssub.s32 1, %s8
  %s11 = scalar_select 0, %s10, %s8
  $region1: #{lstm_model_forward.3} parent=0
    #allocation4 [shape = 'u8[4096]{0}', space=vmem, size = 0x1000, scoped, tag = 'output window, operand 0, single buffered']
    #allocation5 [shape = 's32[1]{0}', space=sflag, size = 0x4, scoped, tag = 'scoped memory for lstm_model_forward.3']
    #allocation6 [shape = 'u8[4096]{0}', space=vmem, size = 0x1000, scoped, tag = 'output window, operand 1, single buffered']
    #allocation7 [shape = 's32[1]{0}', space=sflag, size = 0x4, scoped, tag = 'scoped memory for lstm_model_forward.3']
    %12 = vsyncpa [#allocation5], 0
    %13 = vsyncpa [#allocation7], 0
    // Predicated region
    $region2: #{lstm_model_forward.3} parent=1 // pred_check
      _
    $region3: #{lstm_model_forward.3} parent=1 // pred_check_branch
      %15 = sbr.rel (0) target = $region5
    $region4: #{lstm_model_forward.3} parent=1 // pred_region
      _
    $region5: #{lstm_model_forward.3} parent=1 // pred_fallthru
      _
    // Predicated region
    $region6: #{lstm_model_forward.3} parent=1 // pred_check
      _
    $region7: #{lstm_model_forward.3} parent=1 // pred_check_branch
      %17 = sbr.rel (0) target = $region9
    $region8: #{lstm_model_forward.3} parent=1 // pred_region
      %s18 = ssub.s32 0, 0
      %s19 = smul.u32 8, %s18
      %p20 = scmp.lt.s32.totalorder %s19, 7
      %s21 = scalar_select %p20, %s19, 7
      %s22 = smul.addr %s21, 4
      %s23 = scalar_lea.vmem %s1, %s22
      %s24 = ssub.s32 0, 0
      %s25 = smul.u32 8, %s24
    $region9: #{lstm_model_forward.3} parent=1 // pred_fallthru
      _
    // Predicated region
    $region10: #{lstm_model_forward.3} parent=1 // pred_check
      _
    $region11: #{lstm_model_forward.3} parent=1 // pred_check_branch
      %27 = sbr.rel (0) target = $region13
    $region12: #{lstm_model_forward.3} parent=1 // pred_region
      _
    $region13: #{lstm_model_forward.3} parent=1 // pred_fallthru
      _
    // Predicated region
    $region14: #{lstm_model_forward.3} parent=1 // pred_check
      _
    $region15: #{lstm_model_forward.3} parent=1 // pred_check_branch
      %29 = sbr.rel (0) target = $region17
    $region16: #{lstm_model_forward.3} parent=1 // pred_region
      _
    $region17: #{lstm_model_forward.3} parent=1 // pred_fallthru
      _
    %s30 = ssub.s32 0, 0
    %s31 = smul.u32 8, %s30
    %p32 = scmp.lt.s32.totalorder %s31, 7
    %s33 = scalar_select %p32, %s31, 7
    %s34 = smul.addr %s33, 4
    %s35 = scalar_lea.vmem %s1, %s34
    %s36 = ssub.s32 0, 0
    %s37 = smul.u32 8, %s36
    %p38 = scmp.lt.s32.totalorder %s37, 7
    %s39 = scalar_select %p38, %s37, 7
    %s40 = smul.addr %s39, 4
    %s41 = scalar_lea.vmem %s1, %s40
    %s42 = ssub.s32 0, 0
    %s43 = smul.u32 8, %s42
    %s44 = ssub.s32 0, 0
    %p46 = scmp.eq.s32.totalorder 0, 0
    // Predicated region
    $region18: #{lstm_model_forward.3} parent=1 // pred_check
      %p47 = pneg %p46
    $region19: #{lstm_model_forward.3} parent=1 // pred_check_branch
      %49 = sbr.rel (%p47) target = $region21
    $region20: #{lstm_model_forward.3} parent=1 // pred_region
      %vm50 = vcmask 523264
      %51 = vst.msk [vmem:[#allocation2] sm:$0xff] %vm50, 0.0
      %52 = vst.msk [vmem:[#allocation3] sm:$0xff] %vm50, 0.0
    $region21: #{lstm_model_forward.3} parent=1 // pred_fallthru
      _
    %v53 = vld [vmem:[%s2] sm:$0xff]
    %v54 = vld [vmem:[%s2 + $0x8] sm:$0xff]
    %v55 = vld [vmem:[%s2 + $0x10] sm:$0xff]
    %v56 = vld [vmem:[%s2 + $0x18] sm:$0xff]
    %v57 = vld [vmem:[%s2 + $0x20] sm:$0xff]
    %v58 = vld [vmem:[%s2 + $0x28] sm:$0xff]
    %v59 = vld [vmem:[%s2 + $0x30] sm:$0xff]
    %v60 = vld [vmem:[%s2 + $0x38] sm:$0xff]
    %v61 = vld [vmem:[%s3] sm:$0xff]
    %v62 = vlaneseq
    %v63 = vand.u32 %v62, 127
    %vm64 = vcmp.lt.s32.totalorder %v63, 32
    %s65 = smul.u32 0, 8
    %s66 = ssub.s32 0, 0
    %s67 = smul.u32 %s66, 8
    %v68 = vld [vmem:[#allocation2] sm:$0xff]
    %v69 = vld [vmem:[#allocation3] sm:$0xff]
    %v70 = vpack.c.bf16 %v68, %v68
    %v79 = vunpack.c.l.b16 %v53
    %v80 = vunpack.c.h.b16 %v53
    %v81 = vunpack.c.l.b16 %v54
    %v82 = vunpack.c.h.b16 %v54
    %v83 = vunpack.c.l.b16 %v55
    %v84 = vunpack.c.h.b16 %v55
    %v85 = vunpack.c.l.b16 %v56
    %v86 = vunpack.c.h.b16 %v56
    %v87 = vunpack.c.l.b16 %v57
    %v88 = vunpack.c.h.b16 %v57
    %v89 = vunpack.c.l.b16 %v58
    %v90 = vunpack.c.h.b16 %v58
    %v91 = vunpack.c.l.b16 %v59
    %v92 = vunpack.c.h.b16 %v59
    %v93 = vunpack.c.l.b16 %v60
    %v94 = vunpack.c.h.b16 %v60
    %v95 = vpack.c.b16 %v81, %v79
    %v96 = vpack.c.b16 %v82, %v80
    %v97 = vpack.c.b16 %v85, %v83
    %v98 = vpack.c.b16 %v86, %v84
    %v99 = vpack.c.b16 %v89, %v87
    %v100 = vpack.c.b16 %v90, %v88
    %v101 = vpack.c.b16 %v93, %v91
    %v102 = vpack.c.b16 %v94, %v92
    %vm111 = vcmask 523264
    %v113 = vsel %vm111, %v70, 0
    %115 = vmatpush.bf16.msra.mxu0 0
    %116 = vmatpush.bf16.msra.mxu0 0
    %117 = vmatpush.bf16.msra.mxu0 0
    %118 = vmatpush.bf16.msra.mxu0 0
    %119 = vmatpush.bf16.msra.mxu0 %v101
    %120 = vmatpush.bf16.msra.mxu0 %v99
    %121 = vmatpush.bf16.msra.mxu0 %v97
    %122 = vmatpush.bf16.msra.mxu0 %v95
    %123 = vmatmul.bf16.gmra.mxu0 %v113
    %v124 = vpop.f32.mrf.mxu0
    %v125 = vadd.f32 0.0, %v124
    %v126 = vpop.f32.mrf.mxu0
    %127 = vdwg.mxu0
    %128 = vmatpush.bf16.msra.mxu0 0
    %129 = vmatpush.bf16.msra.mxu0 0
    %130 = vmatpush.bf16.msra.mxu0 0
    %131 = vmatpush.bf16.msra.mxu0 0
    %132 = vmatpush.bf16.msra.mxu0 %v102
    %133 = vmatpush.bf16.msra.mxu0 %v100
    %134 = vmatpush.bf16.msra.mxu0 %v98
    %135 = vmatpush.bf16.msra.mxu0 %v96
    %136 = vmatmul.bf16.gmra.mxu0 %v113
    %v137 = vpop.f32.mrf.mxu0
    %v138 = vadd.f32 0.0, %v137
    %v139 = vpop.f32.mrf.mxu0
    %140 = vdwg.mxu0
    %v141 = vld [vmem:[%s0] sm:$0xf]
    %s142 = scalar_lea.vmem %s41, 28
    %v143 = vld [vmem:[%s142] sm:$0xf]
    %v145 = vunpack.c.l.b16 %v143
    %v146 = vpack.c.b16 %v145, %v145
    %147 = vrot.lane.b32.xlu0 %v146, 96
    %v148 = vpop.permute.xlu0 %147
    %vm150 = vcmask 785408
    %v153 = vsel %vm150, %v141, %v148
    %v155 = vunpack.c.l.bf16 %v153
    %v156 = vunpack.c.l.bf16 %v148
    %v157 = vadd.f32 %v125, %v155
    %v158 = vadd.f32 %v138, %v156
    %v160 = vunpack.c.l.b16 %v141
    %v161 = vpack.c.b16 %v160, %v160
    %162 = vrot.lane.b32.xlu0 %v161, 32
    %v163 = vpop.permute.xlu0 %162
    %164 = vrot.lane.b32.xlu0 %v146, 64
    %v165 = vpop.permute.xlu0 %164
    %vm166 = vcmask 261120
    %v169 = vsel %vm166, %v163, %v165
    %v171 = vunpack.c.l.bf16 %v169
    %173 = vrot.lane.b32.xlu0 %v171, 64
    %v174 = vpop.permute.xlu0 %173
    %v176 = vadd.f32 %v138, %v174
    %v177 = vxor.u32 %v157, 2147483648
    %v178 = vxor.u32 %v158, 2147483648
    %v179 = vmul.f32 %v177, 1.442695
    %v180 = vpow.pop %v179
    %v181 = vmul.f32 %v178, 1.442695
    %v182 = vpow.pop %v181
    %v183 = vadd.f32 %v180, 1.0
    %v184 = vadd.f32 %v182, 1.0
    %v185 = vrcp.pop %v183
    %v186 = vmul.f32 %v183, %v185
    %v187 = vsub.f32 1.0, %v186
    %v188 = vmul.f32 %v185, %v187
    %v189 = vadd.f32 %v185, %v188
    %vm190 = vweird.f32 %v183
    %vm191 = vweird.f32 %v185
    %vm192 = vmor %vm190, %vm191
    %v193 = vsel %vm192, %v185, %v189
    %v194 = vand.u32 2147483647, %v183
    %vm195 = vcmp.eq.f32.partialorder %v194, 8.507059e+37
    %v196 = vand.u32 %v183, 2147483648
    %v197 = vor.u32 1.1754944e-38, %v196
    %v198 = vsel %vm195, %v197, %v193
    %v199 = vmul.f32 1.0, %v198
    %v200 = vrcp.pop %v184
    %v201 = vmul.f32 %v184, %v200
    %v202 = vsub.f32 1.0, %v201
    %v203 = vmul.f32 %v200, %v202
    %v204 = vadd.f32 %v200, %v203
    %vm205 = vweird.f32 %v184
    %vm206 = vweird.f32 %v200
    %vm207 = vmor %vm205, %vm206
    %v208 = vsel %vm207, %v200, %v204
    %v209 = vand.u32 2147483647, %v184
    %vm210 = vcmp.eq.f32.partialorder %v209, 8.507059e+37
    %v211 = vand.u32 %v184, 2147483648
    %v212 = vor.u32 1.1754944e-38, %v211
    %v213 = vsel %vm210, %v212, %v208
    %v214 = vmul.f32 1.0, %v213
    %v215 = vtanh.pop %v176
    %217 = vrot.lane.b32.xlu0 %v199, 64
    %v218 = vpop.permute.xlu0 %217
    %v220 = vsel %vm166, %v199, %v218
    %221 = vrot.lane.b32.xlu0 %v199, 96
    %v222 = vpop.permute.xlu0 %221
    %225 = vrot.lane.b32.xlu0 %v214, 32
    %v226 = vpop.permute.xlu0 %225
    %v228 = vsel %vm166, %v222, %v226
    %v229 = vsel %vm166, %v218, %v214
    %v230 = vmul.f32 %v228, %v69
    %232 = vrot.lane.b32.xlu0 %v215, 64
    %v233 = vpop.permute.xlu0 %232
    %v235 = vmul.f32 %v220, %v233
    %v236 = vadd.f32 %v230, %v235
    %v237 = vtanh.pop %v236
    %v238 = vmul.f32 %v229, %v237
    %s239 = sadd.s32 %s67, 7
    %v240 = vstv %s65
    %v241 = vstv %s239
    %v242 = vsel %vm64, %v240, %v241
    %vm243 = vcmp.lt.s32.totalorder %v242, %v61
    %v244 = vsel %vm243, 1, 0
    %v245 = vcvt.s32.f32 %v244
    %v246 = vsub.f32 %v238, %v68
    %v247 = vmul.f32 %v245, %v246
    %v248 = vadd.f32 %v68, %v247
    %v249 = vsub.f32 %v236, %v69
    %v250 = vmul.f32 %v245, %v249
    %v251 = vadd.f32 %v69, %v250
    %v252 = vmul.f32 %v245, %v238
    %v253 = vpack.c.bf16 %v248, %v248
    %v255 = vsel %vm111, %v253, 0
    %257 = vmatpush.bf16.msra.mxu0 0
    %258 = vmatpush.bf16.msra.mxu0 0
    %259 = vmatpush.bf16.msra.mxu0 0
    %260 = vmatpush.bf16.msra.mxu0 0
    %261 = vmatpush.bf16.msra.mxu0 %v101
    %262 = vmatpush.bf16.msra.mxu0 %v99
    %263 = vmatpush.bf16.msra.mxu0 %v97
    %264 = vmatpush.bf16.msra.mxu0 %v95
    %265 = vmatmul.bf16.gmra.mxu0 %v255
    %v266 = vpop.f32.mrf.mxu0
    %v267 = vadd.f32 0.0, %v266
    %v268 = vpop.f32.mrf.mxu0
    %269 = vdwg.mxu0
    %270 = vmatpush.bf16.msra.mxu0 0
    %271 = vmatpush.bf16.msra.mxu0 0
    %272 = vmatpush.bf16.msra.mxu0 0
    %273 = vmatpush.bf16.msra.mxu0 0
    %274 = vmatpush.bf16.msra.mxu0 %v102
    %275 = vmatpush.bf16.msra.mxu0 %v100
    %276 = vmatpush.bf16.msra.mxu0 %v98
    %277 = vmatpush.bf16.msra.mxu0 %v96
    %278 = vmatmul.bf16.gmra.mxu0 %v255
    %v279 = vpop.f32.mrf.mxu0
    %v280 = vadd.f32 0.0, %v279
    %v281 = vpop.f32.mrf.mxu0
    %282 = vdwg.mxu0
    %s283 = scalar_lea.vmem %s0, 4
    %v284 = vld [vmem:[%s283] sm:$0xf]
    %s285 = scalar_lea.vmem %s41, 24
    %v286 = vld [vmem:[%s285] sm:$0xf]
    %v288 = vunpack.c.l.b16 %v286
    %v289 = vpack.c.b16 %v288, %v288
    %290 = vrot.lane.b32.xlu0 %v289, 96
    %v291 = vpop.permute.xlu0 %290
    %v295 = vsel %vm150, %v284, %v291
    %v297 = vunpack.c.l.bf16 %v295
    %v298 = vunpack.c.l.bf16 %v291
    %v299 = vadd.f32 %v267, %v297
    %v300 = vadd.f32 %v280, %v298
    %v302 = vunpack.c.l.b16 %v284
    %v303 = vpack.c.b16 %v302, %v302
    %304 = vrot.lane.b32.xlu0 %v303, 32
    %v305 = vpop.permute.xlu0 %304
    %306 = vrot.lane.b32.xlu0 %v289, 64
    %v307 = vpop.permute.xlu0 %306
    %v310 = vsel %vm166, %v305, %v307
    %v312 = vunpack.c.l.bf16 %v310
    %314 = vrot.lane.b32.xlu0 %v312, 64
    %v315 = vpop.permute.xlu0 %314
    %v317 = vadd.f32 %v280, %v315
    %v318 = vxor.u32 %v299, 2147483648
    %v319 = vxor.u32 %v300, 2147483648
    %v320 = vmul.f32 %v318, 1.442695
    %v321 = vpow.pop %v320
    %v322 = vmul.f32 %v319, 1.442695
    %v323 = vpow.pop %v322
    %v324 = vadd.f32 %v321, 1.0
    %v325 = vadd.f32 %v323, 1.0
    %v326 = vrcp.pop %v324
    %v327 = vmul.f32 %v324, %v326
    %v328 = vsub.f32 1.0, %v327
    %v329 = vmul.f32 %v326, %v328
    %v330 = vadd.f32 %v326, %v329
    %vm331 = vweird.f32 %v324
    %vm332 = vweird.f32 %v326
    %vm333 = vmor %vm331, %vm332
    %v334 = vsel %vm333, %v326, %v330
    %v335 = vand.u32 2147483647, %v324
    %vm336 = vcmp.eq.f32.partialorder %v335, 8.507059e+37
    %v337 = vand.u32 %v324, 2147483648
    %v338 = vor.u32 1.1754944e-38, %v337
    %v339 = vsel %vm336, %v338, %v334
    %v340 = vmul.f32 1.0, %v339
    %v341 = vrcp.pop %v325
    %v342 = vmul.f32 %v325, %v341
    %v343 = vsub.f32 1.0, %v342
    %v344 = vmul.f32 %v341, %v343
    %v345 = vadd.f32 %v341, %v344
    %vm346 = vweird.f32 %v325
    %vm347 = vweird.f32 %v341
    %vm348 = vmor %vm346, %vm347
    %v349 = vsel %vm348, %v341, %v345
    %v350 = vand.u32 2147483647, %v325
    %vm351 = vcmp.eq.f32.partialorder %v350, 8.507059e+37
    %v352 = vand.u32 %v325, 2147483648
    %v353 = vor.u32 1.1754944e-38, %v352
    %v354 = vsel %vm351, %v353, %v349
    %v355 = vmul.f32 1.0, %v354
    %v356 = vtanh.pop %v317
    %358 = vrot.lane.b32.xlu0 %v340, 64
    %v359 = vpop.permute.xlu0 %358
    %v361 = vsel %vm166, %v340, %v359
    %362 = vrot.lane.b32.xlu0 %v340, 96
    %v363 = vpop.permute.xlu0 %362
    %366 = vrot.lane.b32.xlu0 %v355, 32
    %v367 = vpop.permute.xlu0 %366
    %v369 = vsel %vm166, %v363, %v367
    %v370 = vsel %vm166, %v359, %v355
    %v371 = vmul.f32 %v369, %v251
    %373 = vrot.lane.b32.xlu0 %v356, 64
    %v374 = vpop.permute.xlu0 %373
    %v376 = vmul.f32 %v361, %v374
    %v377 = vadd.f32 %v371, %v376
    %v378 = vtanh.pop %v377
    %v379 = vmul.f32 %v370, %v378
    %s380 = sadd.s32 %s65, 1
    %s381 = sadd.s32 %s67, 6
    %v382 = vstv %s380
    %v383 = vstv %s381
    %v384 = vsel %vm64, %v382, %v383
    %vm385 = vcmp.lt.s32.totalorder %v384, %v61
    %v386 = vsel %vm385, 1, 0
    %v387 = vcvt.s32.f32 %v386
    %v388 = vsub.f32 %v379, %v248
    %v389 = vmul.f32 %v387, %v388
    %v390 = vadd.f32 %v248, %v389
    %v391 = vsub.f32 %v377, %v251
    %v392 = vmul.f32 %v387, %v391
    %v393 = vadd.f32 %v251, %v392
    %v394 = vmul.f32 %v387, %v379
    %v395 = vpack.c.bf16 %v390, %v390
    %v397 = vsel %vm111, %v395, 0
    %399 = vmatpush.bf16.msra.mxu0 0
    %400 = vmatpush.bf16.msra.mxu0 0
    %401 = vmatpush.bf16.msra.mxu0 0
    %402 = vmatpush.bf16.msra.mxu0 0
    %403 = vmatpush.bf16.msra.mxu0 %v101
    %404 = vmatpush.bf16.msra.mxu0 %v99
    %405 = vmatpush.bf16.msra.mxu0 %v97
    %406 = vmatpush.bf16.msra.mxu0 %v95
    %407 = vmatmul.bf16.gmra.mxu0 %v397
    %v408 = vpop.f32.mrf.mxu0
    %v409 = vadd.f32 0.0, %v408
    %v410 = vpop.f32.mrf.mxu0
    %411 = vdwg.mxu0
    %412 = vmatpush.bf16.msra.mxu0 0
    %413 = vmatpush.bf16.msra.mxu0 0
    %414 = vmatpush.bf16.msra.mxu0 0
    %415 = vmatpush.bf16.msra.mxu0 0
    %416 = vmatpush.bf16.msra.mxu0 %v102
    %417 = vmatpush.bf16.msra.mxu0 %v100
    %418 = vmatpush.bf16.msra.mxu0 %v98
    %419 = vmatpush.bf16.msra.mxu0 %v96
    %420 = vmatmul.bf16.gmra.mxu0 %v397
    %v421 = vpop.f32.mrf.mxu0
    %v422 = vadd.f32 0.0, %v421
    %v423 = vpop.f32.mrf.mxu0
    %424 = vdwg.mxu0
    %s425 = scalar_lea.vmem %s0, 8
    %v426 = vld [vmem:[%s425] sm:$0xf]
    %s427 = scalar_lea.vmem %s41, 20
    %v428 = vld [vmem:[%s427] sm:$0xf]
    %v430 = vunpack.c.l.b16 %v428
    %v431 = vpack.c.b16 %v430, %v430
    %432 = vrot.lane.b32.xlu0 %v431, 96
    %v433 = vpop.permute.xlu0 %432
    %v437 = vsel %vm150, %v426, %v433
    %v439 = vunpack.c.l.bf16 %v437
    %v440 = vunpack.c.l.bf16 %v433
    %v441 = vadd.f32 %v409, %v439
    %v442 = vadd.f32 %v422, %v440
    %v444 = vunpack.c.l.b16 %v426
    %v445 = vpack.c.b16 %v444, %v444
    %446 = vrot.lane.b32.xlu0 %v445, 32
    %v447 = vpop.permute.xlu0 %446
    %448 = vrot.lane.b32.xlu0 %v431, 64
    %v449 = vpop.permute.xlu0 %448
    %v452 = vsel %vm166, %v447, %v449
    %v454 = vunpack.c.l.bf16 %v452
    %456 = vrot.lane.b32.xlu0 %v454, 64
    %v457 = vpop.permute.xlu0 %456
    %v459 = vadd.f32 %v422, %v457
    %v460 = vxor.u32 %v441, 2147483648
    %v461 = vxor.u32 %v442, 2147483648
    %v462 = vmul.f32 %v460, 1.442695
    %v463 = vpow.pop %v462
    %v464 = vmul.f32 %v461, 1.442695
    %v465 = vpow.pop %v464
    %v466 = vadd.f32 %v463, 1.0
    %v467 = vadd.f32 %v465, 1.0
    %v468 = vrcp.pop %v466
    %v469 = vmul.f32 %v466, %v468
    %v470 = vsub.f32 1.0, %v469
    %v471 = vmul.f32 %v468, %v470
    %v472 = vadd.f32 %v468, %v471
    %vm473 = vweird.f32 %v466
    %vm474 = vweird.f32 %v468
    %vm475 = vmor %vm473, %vm474
    %v476 = vsel %vm475, %v468, %v472
    %v477 = vand.u32 2147483647, %v466
    %vm478 = vcmp.eq.f32.partialorder %v477, 8.507059e+37
    %v479 = vand.u32 %v466, 2147483648
    %v480 = vor.u32 1.1754944e-38, %v479
    %v481 = vsel %vm478, %v480, %v476
    %v482 = vmul.f32 1.0, %v481
    %v483 = vrcp.pop %v467
    %v484 = vmul.f32 %v467, %v483
    %v485 = vsub.f32 1.0, %v484
    %v486 = vmul.f32 %v483, %v485
    %v487 = vadd.f32 %v483, %v486
    %vm488 = vweird.f32 %v467
    %vm489 = vweird.f32 %v483
    %vm490 = vmor %vm488, %vm489
    %v491 = vsel %vm490, %v483, %v487
    %v492 = vand.u32 2147483647, %v467
    %vm493 = vcmp.eq.f32.partialorder %v492, 8.507059e+37
    %v494 = vand.u32 %v467, 2147483648
    %v495 = vor.u32 1.1754944e-38, %v494
    %v496 = vsel %vm493, %v495, %v491
    %v497 = vmul.f32 1.0, %v496
    %v498 = vtanh.pop %v459
    %500 = vrot.lane.b32.xlu0 %v482, 64
    %v501 = vpop.permute.xlu0 %500
    %v503 = vsel %vm166, %v482, %v501
    %504 = vrot.lane.b32.xlu0 %v482, 96
    %v505 = vpop.permute.xlu0 %504
    %508 = vrot.lane.b32.xlu0 %v497, 32
    %v509 = vpop.permute.xlu0 %508
    %v511 = vsel %vm166, %v505, %v509
    %v512 = vsel %vm166, %v501, %v497
    %v513 = vmul.f32 %v511, %v393
    %515 = vrot.lane.b32.xlu0 %v498, 64
    %v516 = vpop.permute.xlu0 %515
    %v518 = vmul.f32 %v503, %v516
    %v519 = vadd.f32 %v513, %v518
    %v520 = vtanh.pop %v519
    %v521 = vmul.f32 %v512, %v520
    %s522 = sadd.s32 %s65, 2
    %s523 = sadd.s32 %s67, 5
    %v524 = vstv %s522
    %v525 = vstv %s523
    %v526 = vsel %vm64, %v524, %v525
    %vm527 = vcmp.lt.s32.totalorder %v526, %v61
    %v528 = vsel %vm527, 1, 0
    %v529 = vcvt.s32.f32 %v528
    %v530 = vsub.f32 %v521, %v390
    %v531 = vmul.f32 %v529, %v530
    %v532 = vadd.f32 %v390, %v531
    %v533 = vsub.f32 %v519, %v393
    %v534 = vmul.f32 %v529, %v533
    %v535 = vadd.f32 %v393, %v534
    %v536 = vmul.f32 %v529, %v521
    %v537 = vpack.c.bf16 %v532, %v532
    %v539 = vsel %vm111, %v537, 0
    %541 = vmatpush.bf16.msra.mxu0 0
    %542 = vmatpush.bf16.msra.mxu0 0
    %543 = vmatpush.bf16.msra.mxu0 0
    %544 = vmatpush.bf16.msra.mxu0 0
    %545 = vmatpush.bf16.msra.mxu0 %v101
    %546 = vmatpush.bf16.msra.mxu0 %v99
    %547 = vmatpush.bf16.msra.mxu0 %v97
    %548 = vmatpush.bf16.msra.mxu0 %v95
    %549 = vmatmul.bf16.gmra.mxu0 %v539
    %v550 = vpop.f32.mrf.mxu0
    %v551 = vadd.f32 0.0, %v550
    %v552 = vpop.f32.mrf.mxu0
    %553 = vdwg.mxu0
    %554 = vmatpush.bf16.msra.mxu0 0
    %555 = vmatpush.bf16.msra.mxu0 0
    %556 = vmatpush.bf16.msra.mxu0 0
    %557 = vmatpush.bf16.msra.mxu0 0
    %558 = vmatpush.bf16.msra.mxu0 %v102
    %559 = vmatpush.bf16.msra.mxu0 %v100
    %560 = vmatpush.bf16.msra.mxu0 %v98
    %561 = vmatpush.bf16.msra.mxu0 %v96
    %562 = vmatmul.bf16.gmra.mxu0 %v539
    %v563 = vpop.f32.mrf.mxu0
    %v564 = vadd.f32 0.0, %v563
    %v565 = vpop.f32.mrf.mxu0
    %566 = vdwg.mxu0
    %s567 = scalar_lea.vmem %s0, 12
    %v568 = vld [vmem:[%s567] sm:$0xf]
    %s569 = scalar_lea.vmem %s41, 16
    %v570 = vld [vmem:[%s569] sm:$0xf]
    %v572 = vunpack.c.l.b16 %v570
    %v573 = vpack.c.b16 %v572, %v572
    %574 = vrot.lane.b32.xlu0 %v573, 96
    %v575 = vpop.permute.xlu0 %574
    %v579 = vsel %vm150, %v568, %v575
    %v581 = vunpack.c.l.bf16 %v579
    %v582 = vunpack.c.l.bf16 %v575
    %v583 = vadd.f32 %v551, %v581
    %v584 = vadd.f32 %v564, %v582
    %v586 = vunpack.c.l.b16 %v568
    %v587 = vpack.c.b16 %v586, %v586
    %588 = vrot.lane.b32.xlu0 %v587, 32
    %v589 = vpop.permute.xlu0 %588
    %590 = vrot.lane.b32.xlu0 %v573, 64
    %v591 = vpop.permute.xlu0 %590
    %v594 = vsel %vm166, %v589, %v591
    %v596 = vunpack.c.l.bf16 %v594
    %598 = vrot.lane.b32.xlu0 %v596, 64
    %v599 = vpop.permute.xlu0 %598
    %v601 = vadd.f32 %v564, %v599
    %v602 = vxor.u32 %v583, 2147483648
    %v603 = vxor.u32 %v584, 2147483648
    %v604 = vmul.f32 %v602, 1.442695
    %v605 = vpow.pop %v604
    %v606 = vmul.f32 %v603, 1.442695
    %v607 = vpow.pop %v606
    %v608 = vadd.f32 %v605, 1.0
    %v609 = vadd.f32 %v607, 1.0
    %v610 = vrcp.pop %v608
    %v611 = vmul.f32 %v608, %v610
    %v612 = vsub.f32 1.0, %v611
    %v613 = vmul.f32 %v610, %v612
    %v614 = vadd.f32 %v610, %v613
    %vm615 = vweird.f32 %v608
    %vm616 = vweird.f32 %v610
    %vm617 = vmor %vm615, %vm616
    %v618 = vsel %vm617, %v610, %v614
    %v619 = vand.u32 2147483647, %v608
    %vm620 = vcmp.eq.f32.partialorder %v619, 8.507059e+37
    %v621 = vand.u32 %v608, 2147483648
    %v622 = vor.u32 1.1754944e-38, %v621
    %v623 = vsel %vm620, %v622, %v618
    %v624 = vmul.f32 1.0, %v623
    %v625 = vrcp.pop %v609
    %v626 = vmul.f32 %v609, %v625
    %v627 = vsub.f32 1.0, %v626
    %v628 = vmul.f32 %v625, %v627
    %v629 = vadd.f32 %v625, %v628
    %vm630 = vweird.f32 %v609
    %vm631 = vweird.f32 %v625
    %vm632 = vmor %vm630, %vm631
    %v633 = vsel %vm632, %v625, %v629
    %v634 = vand.u32 2147483647, %v609
    %vm635 = vcmp.eq.f32.partialorder %v634, 8.507059e+37
    %v636 = vand.u32 %v609, 2147483648
    %v637 = vor.u32 1.1754944e-38, %v636
    %v638 = vsel %vm635, %v637, %v633
    %v639 = vmul.f32 1.0, %v638
    %v640 = vtanh.pop %v601
    %642 = vrot.lane.b32.xlu0 %v624, 64
    %v643 = vpop.permute.xlu0 %642
    %v645 = vsel %vm166, %v624, %v643
    %646 = vrot.lane.b32.xlu0 %v624, 96
    %v647 = vpop.permute.xlu0 %646
    %650 = vrot.lane.b32.xlu0 %v639, 32
    %v651 = vpop.permute.xlu0 %650
    %v653 = vsel %vm166, %v647, %v651
    %v654 = vsel %vm166, %v643, %v639
    %v655 = vmul.f32 %v653, %v535
    %657 = vrot.lane.b32.xlu0 %v640, 64
    %v658 = vpop.permute.xlu0 %657
    %v660 = vmul.f32 %v645, %v658
    %v661 = vadd.f32 %v655, %v660
    %v662 = vtanh.pop %v661
    %v663 = vmul.f32 %v654, %v662
    %s664 = sadd.s32 %s65, 3
    %s665 = sadd.s32 %s67, 4
    %v666 = vstv %s664
    %v667 = vstv %s665
    %v668 = vsel %vm64, %v666, %v667
    %vm669 = vcmp.lt.s32.totalorder %v668, %v61
    %v670 = vsel %vm669, 1, 0
    %v671 = vcvt.s32.f32 %v670
    %v672 = vsub.f32 %v663, %v532
    %v673 = vmul.f32 %v671, %v672
    %v674 = vadd.f32 %v532, %v673
    %v675 = vsub.f32 %v661, %v535
    %v676 = vmul.f32 %v671, %v675
    %v677 = vadd.f32 %v535, %v676
    %v678 = vmul.f32 %v671, %v663
    %v679 = vpack.c.bf16 %v674, %v674
    %v681 = vsel %vm111, %v679, 0
    %683 = vmatpush.bf16.msra.mxu0 0
    %684 = vmatpush.bf16.msra.mxu0 0
    %685 = vmatpush.bf16.msra.mxu0 0
    %686 = vmatpush.bf16.msra.mxu0 0
    %687 = vmatpush.bf16.msra.mxu0 %v101
    %688 = vmatpush.bf16.msra.mxu0 %v99
    %689 = vmatpush.bf16.msra.mxu0 %v97
    %690 = vmatpush.bf16.msra.mxu0 %v95
    %691 = vmatmul.bf16.gmra.mxu0 %v681
    %v692 = vpop.f32.mrf.mxu0
    %v693 = vadd.f32 0.0, %v692
    %v694 = vpop.f32.mrf.mxu0
    %695 = vdwg.mxu0
    %696 = vmatpush.bf16.msra.mxu0 0
    %697 = vmatpush.bf16.msra.mxu0 0
    %698 = vmatpush.bf16.msra.mxu0 0
    %699 = vmatpush.bf16.msra.mxu0 0
    %700 = vmatpush.bf16.msra.mxu0 %v102
    %701 = vmatpush.bf16.msra.mxu0 %v100
    %702 = vmatpush.bf16.msra.mxu0 %v98
    %703 = vmatpush.bf16.msra.mxu0 %v96
    %704 = vmatmul.bf16.gmra.mxu0 %v681
    %v705 = vpop.f32.mrf.mxu0
    %v706 = vadd.f32 0.0, %v705
    %v707 = vpop.f32.mrf.mxu0
    %708 = vdwg.mxu0
    %s709 = scalar_lea.vmem %s0, 16
    %v710 = vld [vmem:[%s709] sm:$0xf]
    %s711 = scalar_lea.vmem %s41, 12
    %v712 = vld [vmem:[%s711] sm:$0xf]
    %v714 = vunpack.c.l.b16 %v712
    %v715 = vpack.c.b16 %v714, %v714
    %716 = vrot.lane.b32.xlu0 %v715, 96
    %v717 = vpop.permute.xlu0 %716
    %v721 = vsel %vm150, %v710, %v717
    %v723 = vunpack.c.l.bf16 %v721
    %v724 = vunpack.c.l.bf16 %v717
    %v725 = vadd.f32 %v693, %v723
    %v726 = vadd.f32 %v706, %v724
    %v728 = vunpack.c.l.b16 %v710
    %v729 = vpack.c.b16 %v728, %v728
    %730 = vrot.lane.b32.xlu0 %v729, 32
    %v731 = vpop.permute.xlu0 %730
    %732 = vrot.lane.b32.xlu0 %v715, 64
    %v733 = vpop.permute.xlu0 %732
    %v736 = vsel %vm166, %v731, %v733
    %v738 = vunpack.c.l.bf16 %v736
    %740 = vrot.lane.b32.xlu0 %v738, 64
    %v741 = vpop.permute.xlu0 %740
    %v743 = vadd.f32 %v706, %v741
    %v744 = vxor.u32 %v725, 2147483648
    %v745 = vxor.u32 %v726, 2147483648
    %v746 = vmul.f32 %v744, 1.442695
    %v747 = vpow.pop %v746
    %v748 = vmul.f32 %v745, 1.442695
    %v749 = vpow.pop %v748
    %v750 = vadd.f32 %v747, 1.0
    %v751 = vadd.f32 %v749, 1.0
    %v752 = vrcp.pop %v750
    %v753 = vmul.f32 %v750, %v752
    %v754 = vsub.f32 1.0, %v753
    %v755 = vmul.f32 %v752, %v754
    %v756 = vadd.f32 %v752, %v755
    %vm757 = vweird.f32 %v750
    %vm758 = vweird.f32 %v752
    %vm759 = vmor %vm757, %vm758
    %v760 = vsel %vm759, %v752, %v756
    %v761 = vand.u32 2147483647, %v750
    %vm762 = vcmp.eq.f32.partialorder %v761, 8.507059e+37
    %v763 = vand.u32 %v750, 2147483648
    %v764 = vor.u32 1.1754944e-38, %v763
    %v765 = vsel %vm762, %v764, %v760
    %v766 = vmul.f32 1.0, %v765
    %v767 = vrcp.pop %v751
    %v768 = vmul.f32 %v751, %v767
    %v769 = vsub.f32 1.0, %v768
    %v770 = vmul.f32 %v767, %v769
    %v771 = vadd.f32 %v767, %v770
    %vm772 = vweird.f32 %v751
    %vm773 = vweird.f32 %v767
    %vm774 = vmor %vm772, %vm773
    %v775 = vsel %vm774, %v767, %v771
    %v776 = vand.u32 2147483647, %v751
    %vm777 = vcmp.eq.f32.partialorder %v776, 8.507059e+37
    %v778 = vand.u32 %v751, 2147483648
    %v779 = vor.u32 1.1754944e-38, %v778
    %v780 = vsel %vm777, %v779, %v775
    %v781 = vmul.f32 1.0, %v780
    %v782 = vtanh.pop %v743
    %784 = vrot.lane.b32.xlu0 %v766, 64
    %v785 = vpop.permute.xlu0 %784
    %v787 = vsel %vm166, %v766, %v785
    %788 = vrot.lane.b32.xlu0 %v766, 96
    %v789 = vpop.permute.xlu0 %788
    %792 = vrot.lane.b32.xlu0 %v781, 32
    %v793 = vpop.permute.xlu0 %792
    %v795 = vsel %vm166, %v789, %v793
    %v796 = vsel %vm166, %v785, %v781
    %v797 = vmul.f32 %v795, %v677
    %799 = vrot.lane.b32.xlu0 %v782, 64
    %v800 = vpop.permute.xlu0 %799
    %v802 = vmul.f32 %v787, %v800
    %v803 = vadd.f32 %v797, %v802
    %v804 = vtanh.pop %v803
    %v805 = vmul.f32 %v796, %v804
    %s806 = sadd.s32 %s65, 4
    %s807 = sadd.s32 %s67, 3
    %v808 = vstv %s806
    %v809 = vstv %s807
    %v810 = vsel %vm64, %v808, %v809
    %vm811 = vcmp.lt.s32.totalorder %v810, %v61
    %v812 = vsel %vm811, 1, 0
    %v813 = vcvt.s32.f32 %v812
    %v814 = vsub.f32 %v805, %v674
    %v815 = vmul.f32 %v813, %v814
    %v816 = vadd.f32 %v674, %v815
    %v817 = vsub.f32 %v803, %v677
    %v818 = vmul.f32 %v813, %v817
    %v819 = vadd.f32 %v677, %v818
    %v820 = vmul.f32 %v813, %v805
    %v821 = vpack.c.bf16 %v816, %v816
    %v823 = vsel %vm111, %v821, 0
    %825 = vmatpush.bf16.msra.mxu0 0
    %826 = vmatpush.bf16.msra.mxu0 0
    %827 = vmatpush.bf16.msra.mxu0 0
    %828 = vmatpush.bf16.msra.mxu0 0
    %829 = vmatpush.bf16.msra.mxu0 %v101
    %830 = vmatpush.bf16.msra.mxu0 %v99
    %831 = vmatpush.bf16.msra.mxu0 %v97
    %832 = vmatpush.bf16.msra.mxu0 %v95
    %833 = vmatmul.bf16.gmra.mxu0 %v823
    %v834 = vpop.f32.mrf.mxu0
    %v835 = vadd.f32 0.0, %v834
    %v836 = vpop.f32.mrf.mxu0
    %837 = vdwg.mxu0
    %838 = vmatpush.bf16.msra.mxu0 0
    %839 = vmatpush.bf16.msra.mxu0 0
    %840 = vmatpush.bf16.msra.mxu0 0
    %841 = vmatpush.bf16.msra.mxu0 0
    %842 = vmatpush.bf16.msra.mxu0 %v102
    %843 = vmatpush.bf16.msra.mxu0 %v100
    %844 = vmatpush.bf16.msra.mxu0 %v98
    %845 = vmatpush.bf16.msra.mxu0 %v96
    %846 = vmatmul.bf16.gmra.mxu0 %v823
    %v847 = vpop.f32.mrf.mxu0
    %v848 = vadd.f32 0.0, %v847
    %v849 = vpop.f32.mrf.mxu0
    %850 = vdwg.mxu0
    %s851 = scalar_lea.vmem %s0, 20
    %v852 = vld [vmem:[%s851] sm:$0xf]
    %s853 = scalar_lea.vmem %s41, 8
    %v854 = vld [vmem:[%s853] sm:$0xf]
    %v856 = vunpack.c.l.b16 %v854
    %v857 = vpack.c.b16 %v856, %v856
    %858 = vrot.lane.b32.xlu0 %v857, 96
    %v859 = vpop.permute.xlu0 %858
    %v863 = vsel %vm150, %v852, %v859
    %v865 = vunpack.c.l.bf16 %v863
    %v866 = vunpack.c.l.bf16 %v859
    %v867 = vadd.f32 %v835, %v865
    %v868 = vadd.f32 %v848, %v866
    %v870 = vunpack.c.l.b16 %v852
    %v871 = vpack.c.b16 %v870, %v870
    %872 = vrot.lane.b32.xlu0 %v871, 32
    %v873 = vpop.permute.xlu0 %872
    %874 = vrot.lane.b32.xlu0 %v857, 64
    %v875 = vpop.permute.xlu0 %874
    %v878 = vsel %vm166, %v873, %v875
    %v880 = vunpack.c.l.bf16 %v878
    %882 = vrot.lane.b32.xlu0 %v880, 64
    %v883 = vpop.permute.xlu0 %882
    %v885 = vadd.f32 %v848, %v883
    %v886 = vxor.u32 %v867, 2147483648
    %v887 = vxor.u32 %v868, 2147483648
    %v888 = vmul.f32 %v886, 1.442695
    %v889 = vpow.pop %v888
    %v890 = vmul.f32 %v887, 1.442695
    %v891 = vpow.pop %v890
    %v892 = vadd.f32 %v889, 1.0
    %v893 = vadd.f32 %v891, 1.0
    %v894 = vrcp.pop %v892
    %v895 = vmul.f32 %v892, %v894
    %v896 = vsub.f32 1.0, %v895
    %v897 = vmul.f32 %v894, %v896
    %v898 = vadd.f32 %v894, %v897
    %vm899 = vweird.f32 %v892
    %vm900 = vweird.f32 %v894
    %vm901 = vmor %vm899, %vm900
    %v902 = vsel %vm901, %v894, %v898
    %v903 = vand.u32 2147483647, %v892
    %vm904 = vcmp.eq.f32.partialorder %v903, 8.507059e+37
    %v905 = vand.u32 %v892, 2147483648
    %v906 = vor.u32 1.1754944e-38, %v905
    %v907 = vsel %vm904, %v906, %v902
    %v908 = vmul.f32 1.0, %v907
    %v909 = vrcp.pop %v893
    %v910 = vmul.f32 %v893, %v909
    %v911 = vsub.f32 1.0, %v910
    %v912 = vmul.f32 %v909, %v911
    %v913 = vadd.f32 %v909, %v912
    %vm914 = vweird.f32 %v893
    %vm915 = vweird.f32 %v909
    %vm916 = vmor %vm914, %vm915
    %v917 = vsel %vm916, %v909, %v913
    %v918 = vand.u32 2147483647, %v893
    %vm919 = vcmp.eq.f32.partialorder %v918, 8.507059e+37
    %v920 = vand.u32 %v893, 2147483648
    %v921 = vor.u32 1.1754944e-38, %v920
    %v922 = vsel %vm919, %v921, %v917
    %v923 = vmul.f32 1.0, %v922
    %v924 = vtanh.pop %v885
    %926 = vrot.lane.b32.xlu0 %v908, 64
    %v927 = vpop.permute.xlu0 %926
    %v929 = vsel %vm166, %v908, %v927
    %930 = vrot.lane.b32.xlu0 %v908, 96
    %v931 = vpop.permute.xlu0 %930
    %934 = vrot.lane.b32.xlu0 %v923, 32
    %v935 = vpop.permute.xlu0 %934
    %v937 = vsel %vm166, %v931, %v935
    %v938 = vsel %vm166, %v927, %v923
    %v939 = vmul.f32 %v937, %v819
    %941 = vrot.lane.b32.xlu0 %v924, 64
    %v942 = vpop.permute.xlu0 %941
    %v944 = vmul.f32 %v929, %v942
    %v945 = vadd.f32 %v939, %v944
    %v946 = vtanh.pop %v945
    %v947 = vmul.f32 %v938, %v946
    %s948 = sadd.s32 %s65, 5
    %s949 = sadd.s32 %s67, 2
    %v950 = vstv %s948
    %v951 = vstv %s949
    %v952 = vsel %vm64, %v950, %v951
    %vm953 = vcmp.lt.s32.totalorder %v952, %v61
    %v954 = vsel %vm953, 1, 0
    %v955 = vcvt.s32.f32 %v954
    %v956 = vsub.f32 %v947, %v816
    %v957 = vmul.f32 %v955, %v956
    %v958 = vadd.f32 %v816, %v957
    %v959 = vsub.f32 %v945, %v819
    %v960 = vmul.f32 %v955, %v959
    %v961 = vadd.f32 %v819, %v960
    %v962 = vmul.f32 %v955, %v947
    %v963 = vpack.c.bf16 %v958, %v958
    %v965 = vsel %vm111, %v963, 0
    %967 = vmatpush.bf16.msra.mxu0 0
    %968 = vmatpush.bf16.msra.mxu0 0
    %969 = vmatpush.bf16.msra.mxu0 0
    %970 = vmatpush.bf16.msra.mxu0 0
    %971 = vmatpush.bf16.msra.mxu0 %v101
    %972 = vmatpush.bf16.msra.mxu0 %v99
    %973 = vmatpush.bf16.msra.mxu0 %v97
    %974 = vmatpush.bf16.msra.mxu0 %v95
    %975 = vmatmul.bf16.gmra.mxu0 %v965
    %v976 = vpop.f32.mrf.mxu0
    %v977 = vadd.f32 0.0, %v976
    %v978 = vpop.f32.mrf.mxu0
    %979 = vdwg.mxu0
    %980 = vmatpush.bf16.msra.mxu0 0
    %981 = vmatpush.bf16.msra.mxu0 0
    %982 = vmatpush.bf16.msra.mxu0 0
    %983 = vmatpush.bf16.msra.mxu0 0
    %984 = vmatpush.bf16.msra.mxu0 %v102
    %985 = vmatpush.bf16.msra.mxu0 %v100
    %986 = vmatpush.bf16.msra.mxu0 %v98
    %987 = vmatpush.bf16.msra.mxu0 %v96
    %988 = vmatmul.bf16.gmra.mxu0 %v965
    %v989 = vpop.f32.mrf.mxu0
    %v990 = vadd.f32 0.0, %v989
    %v991 = vpop.f32.mrf.mxu0
    %992 = vdwg.mxu0
    %s993 = scalar_lea.vmem %s0, 24
    %v994 = vld [vmem:[%s993] sm:$0xf]
    %s995 = scalar_lea.vmem %s41, 4
    %v996 = vld [vmem:[%s995] sm:$0xf]
    %v998 = vunpack.c.l.b16 %v996
    %v999 = vpack.c.b16 %v998, %v998
    %1000 = vrot.lane.b32.xlu0 %v999, 96
    %v1001 = vpop.permute.xlu0 %1000
    %v1005 = vsel %vm150, %v994, %v1001
    %v1007 = vunpack.c.l.bf16 %v1005
    %v1008 = vunpack.c.l.bf16 %v1001
    %v1009 = vadd.f32 %v977, %v1007
    %v1010 = vadd.f32 %v990, %v1008
    %v1012 = vunpack.c.l.b16 %v994
    %v1013 = vpack.c.b16 %v1012, %v1012
    %1014 = vrot.lane.b32.xlu0 %v1013, 32
    %v1015 = vpop.permute.xlu0 %1014
    %1016 = vrot.lane.b32.xlu0 %v999, 64
    %v1017 = vpop.permute.xlu0 %1016
    %v1020 = vsel %vm166, %v1015, %v1017
    %v1022 = vunpack.c.l.bf16 %v1020
    %1024 = vrot.lane.b32.xlu0 %v1022, 64
    %v1025 = vpop.permute.xlu0 %1024
    %v1027 = vadd.f32 %v990, %v1025
    %v1028 = vxor.u32 %v1009, 2147483648
    %v1029 = vxor.u32 %v1010, 2147483648
    %v1030 = vmul.f32 %v1028, 1.442695
    %v1031 = vpow.pop %v1030
    %v1032 = vmul.f32 %v1029, 1.442695
    %v1033 = vpow.pop %v1032
    %v1034 = vadd.f32 %v1031, 1.0
    %v1035 = vadd.f32 %v1033, 1.0
    %v1036 = vrcp.pop %v1034
    %v1037 = vmul.f32 %v1034, %v1036
    %v1038 = vsub.f32 1.0, %v1037
    %v1039 = vmul.f32 %v1036, %v1038
    %v1040 = vadd.f32 %v1036, %v1039
    %vm1041 = vweird.f32 %v1034
    %vm1042 = vweird.f32 %v1036
    %vm1043 = vmor %vm1041, %vm1042
    %v1044 = vsel %vm1043, %v1036, %v1040
    %v1045 = vand.u32 2147483647, %v1034
    %vm1046 = vcmp.eq.f32.partialorder %v1045, 8.507059e+37
    %v1047 = vand.u32 %v1034, 2147483648
    %v1048 = vor.u32 1.1754944e-38, %v1047
    %v1049 = vsel %vm1046, %v1048, %v1044
    %v1050 = vmul.f32 1.0, %v1049
    %v1051 = vrcp.pop %v1035
    %v1052 = vmul.f32 %v1035, %v1051
    %v1053 = vsub.f32 1.0, %v1052
    %v1054 = vmul.f32 %v1051, %v1053
    %v1055 = vadd.f32 %v1051, %v1054
    %vm1056 = vweird.f32 %v1035
    %vm1057 = vweird.f32 %v1051
    %vm1058 = vmor %vm1056, %vm1057
    %v1059 = vsel %vm1058, %v1051, %v1055
    %v1060 = vand.u32 2147483647, %v1035
    %vm1061 = vcmp.eq.f32.partialorder %v1060, 8.507059e+37
    %v1062 = vand.u32 %v1035, 2147483648
    %v1063 = vor.u32 1.1754944e-38, %v1062
    %v1064 = vsel %vm1061, %v1063, %v1059
    %v1065 = vmul.f32 1.0, %v1064
    %v1066 = vtanh.pop %v1027
    %1068 = vrot.lane.b32.xlu0 %v1050, 64
    %v1069 = vpop.permute.xlu0 %1068
    %v1071 = vsel %vm166, %v1050, %v1069
    %1072 = vrot.lane.b32.xlu0 %v1050, 96
    %v1073 = vpop.permute.xlu0 %1072
    %1076 = vrot.lane.b32.xlu0 %v1065, 32
    %v1077 = vpop.permute.xlu0 %1076
    %v1079 = vsel %vm166, %v1073, %v1077
    %v1080 = vsel %vm166, %v1069, %v1065
    %v1081 = vmul.f32 %v1079, %v961
    %1083 = vrot.lane.b32.xlu0 %v1066, 64
    %v1084 = vpop.permute.xlu0 %1083
    %v1086 = vmul.f32 %v1071, %v1084
    %v1087 = vadd.f32 %v1081, %v1086
    %v1088 = vtanh.pop %v1087
    %v1089 = vmul.f32 %v1080, %v1088
    %s1090 = sadd.s32 %s65, 6
    %s1091 = sadd.s32 %s67, 1
    %v1092 = vstv %s1090
    %v1093 = vstv %s1091
    %v1094 = vsel %vm64, %v1092, %v1093
    %vm1095 = vcmp.lt.s32.totalorder %v1094, %v61
    %v1096 = vsel %vm1095, 1, 0
    %v1097 = vcvt.s32.f32 %v1096
    %v1098 = vsub.f32 %v1089, %v958
    %v1099 = vmul.f32 %v1097, %v1098
    %v1100 = vadd.f32 %v958, %v1099
    %v1101 = vsub.f32 %v1087, %v961
    %v1102 = vmul.f32 %v1097, %v1101
    %v1103 = vadd.f32 %v961, %v1102
    %v1104 = vmul.f32 %v1097, %v1089
    %v1105 = vpack.c.bf16 %v1100, %v1100
    %v1107 = vsel %vm111, %v1105, 0
    %1109 = vmatpush.bf16.msra.mxu0 0
    %1110 = vmatpush.bf16.msra.mxu0 0
    %1111 = vmatpush.bf16.msra.mxu0 0
    %1112 = vmatpush.bf16.msra.mxu0 0
    %1113 = vmatpush.bf16.msra.mxu0 %v101
    %1114 = vmatpush.bf16.msra.mxu0 %v99
    %1115 = vmatpush.bf16.msra.mxu0 %v97
    %1116 = vmatpush.bf16.msra.mxu0 %v95
    %1117 = vmatmul.bf16.gmra.mxu0 %v1107
    %v1118 = vpop.f32.mrf.mxu0
    %v1119 = vadd.f32 0.0, %v1118
    %v1120 = vpop.f32.mrf.mxu0
    %1121 = vdwg.mxu0
    %1122 = vmatpush.bf16.msra.mxu0 0
    %1123 = vmatpush.bf16.msra.mxu0 0
    %1124 = vmatpush.bf16.msra.mxu0 0
    %1125 = vmatpush.bf16.msra.mxu0 0
    %1126 = vmatpush.bf16.msra.mxu0 %v102
    %1127 = vmatpush.bf16.msra.mxu0 %v100
    %1128 = vmatpush.bf16.msra.mxu0 %v98
    %1129 = vmatpush.bf16.msra.mxu0 %v96
    %1130 = vmatmul.bf16.gmra.mxu0 %v1107
    %v1131 = vpop.f32.mrf.mxu0
    %v1132 = vadd.f32 0.0, %v1131
    %v1133 = vpop.f32.mrf.mxu0
    %1134 = vdwg.mxu0
    %s1135 = scalar_lea.vmem %s0, 28
    %v1136 = vld [vmem:[%s1135] sm:$0xf]
    %v1137 = vld [vmem:[%s41] sm:$0xf]
    %v1139 = vunpack.c.l.b16 %v1137
    %v1140 = vpack.c.b16 %v1139, %v1139
    %1141 = vrot.lane.b32.xlu0 %v1140, 96
    %v1142 = vpop.permute.xlu0 %1141
    %v1146 = vsel %vm150, %v1136, %v1142
    %v1148 = vunpack.c.l.bf16 %v1146
    %v1149 = vunpack.c.l.bf16 %v1142
    %v1150 = vadd.f32 %v1119, %v1148
    %v1151 = vadd.f32 %v1132, %v1149
    %v1153 = vunpack.c.l.b16 %v1136
    %v1154 = vpack.c.b16 %v1153, %v1153
    %1155 = vrot.lane.b32.xlu0 %v1154, 32
    %v1156 = vpop.permute.xlu0 %1155
    %1157 = vrot.lane.b32.xlu0 %v1140, 64
    %v1158 = vpop.permute.xlu0 %1157
    %v1161 = vsel %vm166, %v1156, %v1158
    %v1163 = vunpack.c.l.bf16 %v1161
    %1165 = vrot.lane.b32.xlu0 %v1163, 64
    %v1166 = vpop.permute.xlu0 %1165
    %v1168 = vadd.f32 %v1132, %v1166
    %v1169 = vxor.u32 %v1150, 2147483648
    %v1170 = vxor.u32 %v1151, 2147483648
    %v1171 = vmul.f32 %v1169, 1.442695
    %v1172 = vpow.pop %v1171
    %v1173 = vmul.f32 %v1170, 1.442695
    %v1174 = vpow.pop %v1173
    %v1175 = vadd.f32 %v1172, 1.0
    %v1176 = vadd.f32 %v1174, 1.0
    %v1177 = vrcp.pop %v1175
    %v1178 = vmul.f32 %v1175, %v1177
    %v1179 = vsub.f32 1.0, %v1178
    %v1180 = vmul.f32 %v1177, %v1179
    %v1181 = vadd.f32 %v1177, %v1180
    %vm1182 = vweird.f32 %v1175
    %vm1183 = vweird.f32 %v1177
    %vm1184 = vmor %vm1182, %vm1183
    %v1185 = vsel %vm1184, %v1177, %v1181
    %v1186 = vand.u32 2147483647, %v1175
    %vm1187 = vcmp.eq.f32.partialorder %v1186, 8.507059e+37
    %v1188 = vand.u32 %v1175, 2147483648
    %v1189 = vor.u32 1.1754944e-38, %v1188
    %v1190 = vsel %vm1187, %v1189, %v1185
    %v1191 = vmul.f32 1.0, %v1190
    %v1192 = vrcp.pop %v1176
    %v1193 = vmul.f32 %v1176, %v1192
    %v1194 = vsub.f32 1.0, %v1193
    %v1195 = vmul.f32 %v1192, %v1194
    %v1196 = vadd.f32 %v1192, %v1195
    %vm1197 = vweird.f32 %v1176
    %vm1198 = vweird.f32 %v1192
    %vm1199 = vmor %vm1197, %vm1198
    %v1200 = vsel %vm1199, %v1192, %v1196
    %v1201 = vand.u32 2147483647, %v1176
    %vm1202 = vcmp.eq.f32.partialorder %v1201, 8.507059e+37
    %v1203 = vand.u32 %v1176, 2147483648
    %v1204 = vor.u32 1.1754944e-38, %v1203
    %v1205 = vsel %vm1202, %v1204, %v1200
    %v1206 = vmul.f32 1.0, %v1205
    %v1207 = vtanh.pop %v1168
    %1209 = vrot.lane.b32.xlu0 %v1191, 64
    %v1210 = vpop.permute.xlu0 %1209
    %v1212 = vsel %vm166, %v1191, %v1210
    %1213 = vrot.lane.b32.xlu0 %v1191, 96
    %v1214 = vpop.permute.xlu0 %1213
    %1217 = vrot.lane.b32.xlu0 %v1206, 32
    %v1218 = vpop.permute.xlu0 %1217
    %v1220 = vsel %vm166, %v1214, %v1218
    %v1221 = vsel %vm166, %v1210, %v1206
    %v1222 = vmul.f32 %v1220, %v1103
    %1224 = vrot.lane.b32.xlu0 %v1207, 64
    %v1225 = vpop.permute.xlu0 %1224
    %v1227 = vmul.f32 %v1212, %v1225
    %v1228 = vadd.f32 %v1222, %v1227
    %v1229 = vtanh.pop %v1228
    %v1230 = vmul.f32 %v1221, %v1229
    %s1231 = sadd.s32 %s65, 7
    %v1232 = vstv %s1231
    %v1233 = vstv %s67
    %v1234 = vsel %vm64, %v1232, %v1233
    %vm1235 = vcmp.lt.s32.totalorder %v1234, %v61
    %v1236 = vsel %vm1235, 1, 0
    %v1237 = vcvt.s32.f32 %v1236
    %v1238 = vsub.f32 %v1230, %v1100
    %v1239 = vmul.f32 %v1237, %v1238
    %v1240 = vadd.f32 %v1100, %v1239
    %v1241 = vsub.f32 %v1228, %v1103
    %v1242 = vmul.f32 %v1237, %v1241
    %v1243 = vadd.f32 %v1103, %v1242
    %v1244 = vmul.f32 %v1237, %v1230
    %1245 = vst.msk [vmem:[#allocation2] sm:$0xff] %vm111, %v1240
    %1246 = vst.msk [vmem:[#allocation3] sm:$0xff] %vm111, %v1243
    %1248 = vrot.lane.b32.xlu0 %v394, 32
    %v1249 = vpop.permute.xlu0 %1248
    %1252 = vrot.lane.b32.xlu0 %v536, 64
    %v1253 = vpop.permute.xlu0 %1252
    %1256 = vrot.lane.b32.xlu0 %v678, 96
    %v1257 = vpop.permute.xlu0 %1256
    %1260 = vrot.lane.b32.xlu0 %v962, 32
    %v1261 = vpop.permute.xlu0 %1260
    %1264 = vrot.lane.b32.xlu0 %v1104, 64
    %v1265 = vpop.permute.xlu0 %1264
    %1268 = vrot.lane.b32.xlu0 %v1244, 96
    %v1269 = vpop.permute.xlu0 %1268
    %v1271 = vsel %vm166, %v252, %v1249
    %v1272 = vsel %vm111, %v1271, %v1253
    %v1273 = vsel %vm150, %v1272, %v1257
    %v1274 = vsel %vm166, %v820, %v1261
    %v1275 = vsel %vm111, %v1274, %v1265
    %v1276 = vsel %vm150, %v1275, %v1269
    %v1277 = vpack.c.bf16 %v1276, %v1273
    %1278 = vst [vmem:[#allocation4] sm:$0xff] %v1277
    %1280 = vrot.lane.b32.xlu0 %v820, 64
    %v1281 = vpop.permute.xlu0 %1280
    %1284 = vrot.lane.b32.xlu0 %v252, 64
    %v1285 = vpop.permute.xlu0 %1284
    %v1287 = vsel %vm166, %v1269, %v1104
    %v1288 = vsel %vm111, %v1287, %v1261
    %v1289 = vsel %vm150, %v1288, %v1281
    %v1290 = vsel %vm166, %v1257, %v536
    %v1291 = vsel %vm111, %v1290, %v1249
    %v1292 = vsel %vm150, %v1291, %v1285
    %v1293 = vpack.c.bf16 %v1292, %v1289
    %1294 = vst [vmem:[#allocation6] sm:$0xff] %v1293
    // Predicated region
    $region22: #{lstm_model_forward.3} parent=1 // pred_check
      %p1295 = pneg %p46
    $region23: #{lstm_model_forward.3} parent=1 // pred_check_branch
      %1297 = sbr.rel (%p1295) target = $region25
    $region24: #{lstm_model_forward.3} parent=1 // pred_region
      %1298 = vst.msk [vmem:[%s6] sm:$0xff] %vm111, %v1240
    $region25: #{lstm_model_forward.3} parent=1 // pred_fallthru
      _
    // Predicated region
    $region26: #{lstm_model_forward.3} parent=1 // pred_check
      _
    $region27: #{lstm_model_forward.3} parent=1 // pred_check_branch
      %1300 = sbr.rel (0) target = $region29
    $region28: #{lstm_model_forward.3} parent=1 // pred_region
      %1302 = vsyncadd [#allocation5], 0
      %s1304 = sshll.u32 [#allocation4], 4
      %s1305 = int_to_ptr.vmem [resolvable:$true] %s1304
      %s1306 = sshll.u32 %s4, 4
      %s1307 = int_to_ptr.hbm [resolvable:$true] %s1306
      %1309 = dma.vmem_to_hbm [thread:$0]  %s1305, 128, %s1307, [#allocation5]
    $region29: #{lstm_model_forward.3} parent=1 // pred_fallthru
      _
    // Predicated region
    $region30: #{lstm_model_forward.3} parent=1 // pred_check
      _
    $region31: #{lstm_model_forward.3} parent=1 // pred_check_branch
      %1311 = sbr.rel (0) target = $region33
    $region32: #{lstm_model_forward.3} parent=1 // pred_region
      %s1312 = ssub.s32 0, 0
      %1314 = vsyncadd [#allocation7], 0
      %s1315 = smul.addr %s1312, 2
      %s1316 = smul.addr %s1315, 4
      %s1317 = scalar_lea.hbm %s5, %s1316
      %s1319 = sshll.u32 [#allocation6], 4
      %s1320 = int_to_ptr.vmem [resolvable:$true] %s1319
      %s1321 = sshll.u32 %s1317, 4
      %s1322 = int_to_ptr.hbm [resolvable:$true] %s1321
      %1324 = dma.vmem_to_hbm [thread:$0]  %s1320, 128, %s1322, [#allocation7]
    $region33: #{lstm_model_forward.3} parent=1 // pred_fallthru
      _
    // Predicated region
    $region34: #{lstm_model_forward.3} parent=1 // pred_check
      _
    $region35: #{lstm_model_forward.3} parent=1 // pred_check_branch
      %1326 = sbr.rel (0) target = $region37
    $region36: #{lstm_model_forward.3} parent=1 // pred_region
      _
    $region37: #{lstm_model_forward.3} parent=1 // pred_fallthru
      _
    // Predicated region
    $region38: #{lstm_model_forward.3} parent=1 // pred_check
      _
    $region39: #{lstm_model_forward.3} parent=1 // pred_check_branch
      %1328 = sbr.rel (0) target = $region41
    $region40: #{lstm_model_forward.3} parent=1 // pred_region
      %1330 = dma.done [#allocation5], 128
    $region41: #{lstm_model_forward.3} parent=1 // pred_fallthru
      _
    // Predicated region
    $region42: #{lstm_model_forward.3} parent=1 // pred_check
      _
    $region43: #{lstm_model_forward.3} parent=1 // pred_check_branch
      %1332 = sbr.rel (0) target = $region45
    $region44: #{lstm_model_forward.3} parent=1 // pred_region
      %1334 = dma.done [#allocation7], 128
    $region45: #{lstm_model_forward.3} parent=1 // pred_fallthru
      _
    // Predicated region
    $region46: #{lstm_model_forward.3} parent=1 // pred_check
      _
    $region47: #{lstm_model_forward.3} parent=1 // pred_check_branch
      %1336 = sbr.rel (0) target = $region49
    $region48: #{lstm_model_forward.3} parent=1 // pred_region
      _
    $region49: #{lstm_model_forward.3} parent=1 // pred_fallthru
      _
    %1337 = vsyncpa [#allocation5], 1
    %1338 = vsyncpa [#allocation7], 1

</llo_original>
